<compile_context>
chip_gen: v7x
topology: tpu7x:2x2x1
jax: 0.10.0
libtpu: 0.0.40
codegen_flags: <defaults>
</compile_context>

<pallas_src>
import jax
import jax.numpy as jnp
from jax.experimental import pallas as pl
from jax.experimental.pallas import tpu as pltpu

IN_FEATURES = 342
HIDDEN = 1024
OUT_FEATURES = 311
OUT_PAD = 384                     # next multiple of 128 above 311 (lane-dense stores)


def _cdiv(a, b):
    return (a + b - 1) // b


def _round_up(a, b):
    return _cdiv(a, b) * b


def basic_relu_kernel(p_ref,                       # (TB, 1)        f32
                      x_ref,                       # (TB, 342)      f32
                      w1p_ref,                     # (1, H)         f32   (phase row of W1)
                      w1x_ref,                     # (342, H)       bf16
                      b1_ref,                      # (1, H)         f32
                      w2_ref,                      # (H, H)         bf16
                      b2_ref,                      # (1, H)         f32
                      w3_ref,                      # (H, OUT_PAD)   bf16
                      b3_ref,                      # (1, OUT_PAD)   f32
                      o_ref):                      # (TB, OUT_PAD)  f32
    # Layer 1: x @ W1[1:] on the MXU (bf16 in, f32 accumulate), then fold the
    # concatenated phase column in as a rank-1 VPU term p * W1[0,:] plus bias.
    x_bf = x_ref[...].astype(jnp.bfloat16)
    h = jnp.dot(x_bf, w1x_ref[...], preferred_element_type=jnp.float32)
    h = h + p_ref[...] * w1p_ref[...] + b1_ref[...]
    h = jnp.maximum(h, 0.0)                        # ReLU

    # Layer 2
    h = jnp.dot(h.astype(jnp.bfloat16), w2_ref[...],
                preferred_element_type=jnp.float32) + b2_ref[...]
    h = jnp.maximum(h, 0.0)                        # ReLU

    # Layer 3
    y = jnp.dot(h.astype(jnp.bfloat16), w3_ref[...],
                preferred_element_type=jnp.float32) + b3_ref[...]
    o_ref[...] = y.astype(o_ref.dtype)


def prepare_params(W1, b1, W2, b2, W3, b3):
    """One-time weight preparation.  Do this at model load, NOT per forward call.
    W1: (1+IN_FEATURES, H), W2: (H, H), W3: (H, OUT_FEATURES)  (torch Linear weight
    transposed), biases 1-D."""
    W1 = jnp.asarray(W1, jnp.float32)
    w1p = W1[0:1, :]                                           # (1, H) f32 phase row
    w1x = W1[1:, :].astype(jnp.bfloat16)                       # (342, H) bf16
    b1r = jnp.asarray(b1, jnp.float32).reshape(1, HIDDEN)
    w2b = jnp.asarray(W2, jnp.float32).astype(jnp.bfloat16)    # (H, H) bf16
    b2r = jnp.asarray(b2, jnp.float32).reshape(1, HIDDEN)
    w3b = jnp.pad(jnp.asarray(W3, jnp.float32),
                  ((0, 0), (0, OUT_PAD - OUT_FEATURES))).astype(jnp.bfloat16)
    b3r = jnp.pad(jnp.asarray(b3, jnp.float32),
                  (0, OUT_PAD - OUT_FEATURES)).reshape(1, OUT_PAD)
    return (w1p, w1x, b1r, w2b, b2r, w3b, b3r)


def _tiling(batch):
    """Balanced batch tiles: TB multiple of 8, <= 512, minimal final-tile padding,
    and >= 2 grid steps for batch > 128 so both v7x TensorCores get work."""
    TB_MAX = 512
    num_tiles = _cdiv(batch, TB_MAX)
    if batch > 128:
        num_tiles = max(num_tiles, 2)
    tb = _round_up(_cdiv(batch, num_tiles), 8)
    return tb, tb * num_tiles, num_tiles


@jax.jit
def basic_relu_forward(p, x, params):
    """p: (B,) phases; x: (B, IN_FEATURES); params from prepare_params()."""
    w1p, w1x, b1r, w2b, b2r, w3b, b3r = params
    batch = x.shape[0]
    tb, b_pad, num_tiles = _tiling(batch)

    p2 = p.astype(jnp.float32).reshape(batch, 1)
    x2 = x.astype(jnp.float32)
    if b_pad != batch:                      # pad only the (small) batch remainder
        p2 = jnp.pad(p2, ((0, b_pad - batch), (0, 0)))
        x2 = jnp.pad(x2, ((0, b_pad - batch), (0, 0)))

    def resident(shape):
        # Constant index map -> DMA'd once, stays in VMEM; single-buffered.
        return pl.BlockSpec(shape, lambda i: (0,) * len(shape),
                            pipeline_mode=pl.Buffered(1))

    out_pad = pl.pallas_call(
        basic_relu_kernel,
        out_shape=jax.ShapeDtypeStruct((b_pad, OUT_PAD), jnp.float32),
        grid=(num_tiles,),
        in_specs=[
            pl.BlockSpec((tb, 1), lambda i: (i, 0)),            # p
            pl.BlockSpec((tb, IN_FEATURES), lambda i: (i, 0)),  # x (full-extent last dim)
            resident((1, HIDDEN)),                              # W1 phase row
            resident((IN_FEATURES, HIDDEN)),                    # W1 rest (bf16)
            resident((1, HIDDEN)),                              # b1
            resident((HIDDEN, HIDDEN)),                         # W2 (bf16)
            resident((1, HIDDEN)),                              # b2
            resident((HIDDEN, OUT_PAD)),                        # W3 (bf16, padded cols)
            resident((1, OUT_PAD)),                             # b3 (padded)
        ],
        out_specs=pl.BlockSpec((tb, OUT_PAD), lambda i: (i, 0)),
        compiler_params=pltpu.CompilerParams(
            dimension_semantics=("parallel",),
            vmem_limit_bytes=48 * 1024 * 1024,   # explicit: v5e default (16 MiB) too small
        ),
    )(p2, x2, w1p, w1x, b1r, w2b, b2r, w3b, b3r)

    # Strip batch / lane padding outside the kernel.
    return out_pad[:batch, :OUT_FEATURES]


def basic_relu_reference(p, x, W1, b1, W2, b2, W3, b3):
    """Pure-JAX f32 replica of BasicReluNet.forward (for verification)."""
    xp = jnp.concatenate([p[:, None], x], axis=1)
    h = jax.nn.relu(xp @ W1 + b1)
    h = jax.nn.relu(h @ W2 + b2)
    return h @ W3 + b3


# TODO(synk): save/load/inference I/O and the PFNN_XMEAN/XSTD/YMEAN/YSTD
# normalization of the parent class are host-side utilities, not part of
# forward(); not ported.

if __name__ == "__main__":
    key = jax.random.PRNGKey(0)
    ks = jax.random.split(key, 8)

    batch = 2
    scale = 0.05
    IN_CAT = IN_FEATURES + 1
    W1 = scale * jax.random.normal(ks[0], (IN_CAT, HIDDEN), jnp.float32)
    b1 = scale * jax.random.normal(ks[1], (HIDDEN,), jnp.float32)
    W2 = scale * jax.random.normal(ks[2], (HIDDEN, HIDDEN), jnp.float32)
    b2 = scale * jax.random.normal(ks[3], (HIDDEN,), jnp.float32)
    W3 = scale * jax.random.normal(ks[4], (HIDDEN, OUT_FEATURES), jnp.float32)
    b3 = scale * jax.random.normal(ks[5], (OUT_FEATURES,), jnp.float32)

    p = jax.random.uniform(ks[6], (batch,), jnp.float32)      # phases in [0, 1)
    x = jax.random.normal(ks[7], (batch, IN_FEATURES), jnp.float32)

    params = prepare_params(W1, b1, W2, b2, W3, b3)           # one-time prep
    out = basic_relu_forward(p, x, params)
    out = jax.block_until_ready(out)

    ref = basic_relu_reference(p, x, W1, b1, W2, b2, W3, b3)
    assert out.shape == (batch, OUT_FEATURES), out.shape
    max_diff = jnp.max(jnp.abs(out - ref))
    # bf16 weights/activations with f32 accumulation vs. pure-f32 reference.
    assert jnp.allclose(out, ref, atol=5e-2, rtol=5e-2), \
        f"max abs diff {max_diff}"

    print("KERNEL_OK")
</pallas_src>

<mosaic_0001>
module attributes {stable_mosaic.version = 11 : i64} {
  func.func @basic_relu_kernel(%arg0: i32, %arg1: memref<8x1xf32, #tpu.memory_space<vmem>>, %arg2: memref<8x342xf32, #tpu.memory_space<vmem>>, %arg3: memref<1x1024xf32, #tpu.memory_space<vmem>>, %arg4: memref<342x1024xbf16, #tpu.memory_space<vmem>>, %arg5: memref<1x1024xf32, #tpu.memory_space<vmem>>, %arg6: memref<1024x1024xbf16, #tpu.memory_space<vmem>>, %arg7: memref<1x1024xf32, #tpu.memory_space<vmem>>, %arg8: memref<1024x384xbf16, #tpu.memory_space<vmem>>, %arg9: memref<1x384xf32, #tpu.memory_space<vmem>>, %arg10: memref<8x384xf32, #tpu.memory_space<vmem>>) attributes {dimension_semantics = [#tpu.dimension_semantics<parallel>], iteration_bounds = array<i64: 1>, scalar_prefetch = 0 : i64, scratch_operands = 0 : i64, tpu.core_type = #tpu.core_type<tc>, window_params = [{transform_indices = @transform_0, window_bounds = array<i64: 8, 1>}, {transform_indices = @transform_1, window_bounds = array<i64: 8, 342>}, {pipeline_mode = #tpu.pipeline_mode<synchronous>, transform_indices = @transform_2, window_bounds = array<i64: 1, 1024>}, {pipeline_mode = #tpu.pipeline_mode<synchronous>, transform_indices = @transform_3, window_bounds = array<i64: 342, 1024>}, {pipeline_mode = #tpu.pipeline_mode<synchronous>, transform_indices = @transform_4, window_bounds = array<i64: 1, 1024>}, {pipeline_mode = #tpu.pipeline_mode<synchronous>, transform_indices = @transform_5, window_bounds = array<i64: 1024, 1024>}, {pipeline_mode = #tpu.pipeline_mode<synchronous>, transform_indices = @transform_6, window_bounds = array<i64: 1, 1024>}, {pipeline_mode = #tpu.pipeline_mode<synchronous>, transform_indices = @transform_7, window_bounds = array<i64: 1024, 384>}, {pipeline_mode = #tpu.pipeline_mode<synchronous>, transform_indices = @transform_8, window_bounds = array<i64: 1, 384>}, {transform_indices = @transform_9, window_bounds = array<i64: 8, 384>}]} {
    %c0 = arith.constant 0 : index
    %c0_0 = arith.constant 0 : index
    %0 = vector.load %arg2[%c0, %c0_0] : memref<8x342xf32, #tpu.memory_space<vmem>>, vector<8x342xf32>
    %1 = arith.truncf %0 : vector<8x342xf32> to vector<8x342xbf16>
    %c0_1 = arith.constant 0 : index
    %c0_2 = arith.constant 0 : index
    %2 = vector.load %arg4[%c0_1, %c0_2] : memref<342x1024xbf16, #tpu.memory_space<vmem>>, vector<342x1024xbf16>
    %cst = arith.constant dense<0.000000e+00> : vector<8x1024xf32>
    %3 = tpu.matmul %1, %2, %cst {dimension_numbers = #tpu.dot_dimension_numbers<[1], [0], [0], [1], [0, 0, 1, 1], [], []>} : vector<8x342xbf16>, vector<342x1024xbf16>, vector<8x1024xf32> -> vector<8x1024xf32>
    %c0_3 = arith.constant 0 : index
    %c0_4 = arith.constant 0 : index
    %4 = vector.load %arg1[%c0_3, %c0_4] : memref<8x1xf32, #tpu.memory_space<vmem>>, vector<8x1xf32>
    %c0_5 = arith.constant 0 : index
    %c0_6 = arith.constant 0 : index
    %5 = vector.load %arg3[%c0_5, %c0_6] : memref<1x1024xf32, #tpu.memory_space<vmem>>, vector<1x1024xf32>
    %6 = vector.broadcast %4 : vector<8x1xf32> to vector<8x1024xf32>
    %7 = vector.broadcast %5 : vector<1x1024xf32> to vector<8x1024xf32>
    %8 = arith.mulf %6, %7 : vector<8x1024xf32>
    %9 = arith.addf %3, %8 : vector<8x1024xf32>
    %c0_7 = arith.constant 0 : index
    %c0_8 = arith.constant 0 : index
    %10 = vector.load %arg5[%c0_7, %c0_8] : memref<1x1024xf32, #tpu.memory_space<vmem>>, vector<1x1024xf32>
    %11 = vector.broadcast %10 : vector<1x1024xf32> to vector<8x1024xf32>
    %12 = arith.addf %9, %11 : vector<8x1024xf32>
    %cst_9 = arith.constant 0.000000e+00 : f32
    %13 = vector.broadcast %cst_9 : f32 to vector<8x1024xf32>
    %14 = arith.maximumf %12, %13 : vector<8x1024xf32>
    %15 = arith.truncf %14 : vector<8x1024xf32> to vector<8x1024xbf16>
    %c0_10 = arith.constant 0 : index
    %c0_11 = arith.constant 0 : index
    %16 = vector.load %arg6[%c0_10, %c0_11] : memref<1024x1024xbf16, #tpu.memory_space<vmem>>, vector<1024x1024xbf16>
    %cst_12 = arith.constant dense<0.000000e+00> : vector<8x1024xf32>
    %17 = tpu.matmul %15, %16, %cst_12 {dimension_numbers = #tpu.dot_dimension_numbers<[1], [0], [0], [1], [0, 0, 1, 1], [], []>} : vector<8x1024xbf16>, vector<1024x1024xbf16>, vector<8x1024xf32> -> vector<8x1024xf32>
    %c0_13 = arith.constant 0 : index
    %c0_14 = arith.constant 0 : index
    %18 = vector.load %arg7[%c0_13, %c0_14] : memref<1x1024xf32, #tpu.memory_space<vmem>>, vector<1x1024xf32>
    %19 = vector.broadcast %18 : vector<1x1024xf32> to vector<8x1024xf32>
    %20 = arith.addf %17, %19 : vector<8x1024xf32>
    %cst_15 = arith.constant 0.000000e+00 : f32
    %21 = vector.broadcast %cst_15 : f32 to vector<8x1024xf32>
    %22 = arith.maximumf %20, %21 : vector<8x1024xf32>
    %23 = arith.truncf %22 : vector<8x1024xf32> to vector<8x1024xbf16>
    %c0_16 = arith.constant 0 : index
    %c0_17 = arith.constant 0 : index
    %24 = vector.load %arg8[%c0_16, %c0_17] : memref<1024x384xbf16, #tpu.memory_space<vmem>>, vector<1024x384xbf16>
    %cst_18 = arith.constant dense<0.000000e+00> : vector<8x384xf32>
    %25 = tpu.matmul %23, %24, %cst_18 {dimension_numbers = #tpu.dot_dimension_numbers<[1], [0], [0], [1], [0, 0, 1, 1], [], []>} : vector<8x1024xbf16>, vector<1024x384xbf16>, vector<8x384xf32> -> vector<8x384xf32>
    %c0_19 = arith.constant 0 : index
    %c0_20 = arith.constant 0 : index
    %26 = vector.load %arg9[%c0_19, %c0_20] : memref<1x384xf32, #tpu.memory_space<vmem>>, vector<1x384xf32>
    %27 = vector.broadcast %26 : vector<1x384xf32> to vector<8x384xf32>
    %28 = arith.addf %25, %27 : vector<8x384xf32>
    %c0_21 = arith.constant 0 : index
    %c0_22 = arith.constant 0 : index
    %29 = vector.load %arg10[%c0_21, %c0_22] : memref<8x384xf32, #tpu.memory_space<vmem>>, vector<8x384xf32>
    tpu.vector_store %arg10[%c0_21, %c0_22], %28 {strides = array<i32>} : memref<8x384xf32, #tpu.memory_space<vmem>>, vector<8x384xf32>,
    return
  }
  func.func @transform_0(%arg0: i32) -> (i32, i32) {
    %c0_i32 = arith.constant 0 : i32
    %c0_i32_0 = arith.constant 0 : i32
    return %arg0, %c0_i32 : i32, i32
  }
  func.func @transform_1(%arg0: i32) -> (i32, i32) {
    %c0_i32 = arith.constant 0 : i32
    %c0_i32_0 = arith.constant 0 : i32
    return %arg0, %c0_i32 : i32, i32
  }
  func.func @transform_2(%arg0: i32) -> (i32, i32) {
    %c0_i32 = arith.constant 0 : i32
    %c0_i32_0 = arith.constant 0 : i32
    %c0_i32_1 = arith.constant 0 : i32
    return %c0_i32, %c0_i32_0 : i32, i32
  }
  func.func @transform_3(%arg0: i32) -> (i32, i32) {
    %c0_i32 = arith.constant 0 : i32
    %c0_i32_0 = arith.constant 0 : i32
    %c0_i32_1 = arith.constant 0 : i32
    return %c0_i32, %c0_i32_0 : i32, i32
  }
  func.func @transform_4(%arg0: i32) -> (i32, i32) {
    %c0_i32 = arith.constant 0 : i32
    %c0_i32_0 = arith.constant 0 : i32
    %c0_i32_1 = arith.constant 0 : i32
    return %c0_i32, %c0_i32_0 : i32, i32
  }
  func.func @transform_5(%arg0: i32) -> (i32, i32) {
    %c0_i32 = arith.constant 0 : i32
    %c0_i32_0 = arith.constant 0 : i32
    %c0_i32_1 = arith.constant 0 : i32
    return %c0_i32, %c0_i32_0 : i32, i32
  }
  func.func @transform_6(%arg0: i32) -> (i32, i32) {
    %c0_i32 = arith.constant 0 : i32
    %c0_i32_0 = arith.constant 0 : i32
    %c0_i32_1 = arith.constant 0 : i32
    return %c0_i32, %c0_i32_0 : i32, i32
  }
  func.func @transform_7(%arg0: i32) -> (i32, i32) {
    %c0_i32 = arith.constant 0 : i32
    %c0_i32_0 = arith.constant 0 : i32
    %c0_i32_1 = arith.constant 0 : i32
    return %c0_i32, %c0_i32_0 : i32, i32
  }
  func.func @transform_8(%arg0: i32) -> (i32, i32) {
    %c0_i32 = arith.constant 0 : i32
    %c0_i32_0 = arith.constant 0 : i32
    %c0_i32_1 = arith.constant 0 : i32
    return %c0_i32, %c0_i32_0 : i32, i32
  }
  func.func @transform_9(%arg0: i32) -> (i32, i32) {
    %c0_i32 = arith.constant 0 : i32
    %c0_i32_0 = arith.constant 0 : i32
    return %arg0, %c0_i32 : i32, i32
  }
}

</mosaic_0001>

<llo_original>
// kernel: basic_relu_forward.1
$region0: #{basic_relu_forward.1}
  #allocation0 [shape = 'u32[]', space=smem, size = 0x4, offset = 0x4, fixed_abs, tag = 'smem constant byte address 0x4 - core index']
  #allocation1 [shape = 'u32[144,128]{1,0:T(1,128)}', space=vmem, size = 0x12000, scoped, tag = 'internal scratch']
  %s0 = inlined_call_operand.vmem [shape: f32[8,1], index: 0, kind: input, shape index: {}]
  %s1 = inlined_call_operand.vmem [shape: f32[8,342], index: 1, kind: input, shape index: {}]
  %s2 = inlined_call_operand.hbm [shape: f32[1,1024], index: 2, kind: input, shape index: {}]
  %s3 = inlined_call_operand.hbm [shape: bf16[342,1024], index: 3, kind: input, shape index: {}]
  %s4 = inlined_call_operand.hbm [shape: f32[1,1024], index: 4, kind: input, shape index: {}]
  %s5 = inlined_call_operand.hbm [shape: bf16[1024,1024], index: 5, kind: input, shape index: {}]
  %s6 = inlined_call_operand.hbm [shape: f32[1,1024], index: 6, kind: input, shape index: {}]
  %s7 = inlined_call_operand.hbm [shape: bf16[1024,384], index: 7, kind: input, shape index: {}]
  %s8 = inlined_call_operand.hbm [shape: f32[1,384], index: 8, kind: input, shape index: {}]
  %s9 = inlined_call_operand.vmem [shape: f32[8,384], index: 9, kind: output, shape index: {}]
  %s10 = sld [smem:[#allocation0]]
  $region74: #{basic_relu_forward.1} parent=0
    _
  %s12 = ssub.s32 1, %s10
  %s13 = scalar_select 0, %s12, %s10
  $region1: #{basic_relu_forward.1} parent=0
    #allocation2 [shape = 'u8[4096]{0}', space=vmem, size = 0x1000, scoped, tag = 'input window, operand 2, single buffered']
    #allocation3 [shape = 's32[1]{0}', space=sflag, size = 0x4, scoped, tag = 'scoped memory for basic_relu_forward.1']
    #allocation4 [shape = 'u8[704512]{0}', space=vmem, size = 0xac000, scoped, tag = 'input window, operand 3, single buffered']
    #allocation5 [shape = 's32[1]{0}', space=sflag, size = 0x4, scoped, tag = 'scoped memory for basic_relu_forward.1']
    #allocation6 [shape = 'u8[4096]{0}', space=vmem, size = 0x1000, scoped, tag = 'input window, operand 4, single buffered']
    #allocation7 [shape = 'u8[2097152]{0}', space=vmem, size = 0x200000, scoped, tag = 'input window, operand 5, single buffered']
    #allocation8 [shape = 's32[1]{0}', space=sflag, size = 0x4, scoped, tag = 'scoped memory for basic_relu_forward.1']
    #allocation9 [shape = 'u8[4096]{0}', space=vmem, size = 0x1000, scoped, tag = 'input window, operand 6, single buffered']
    #allocation10 [shape = 'u8[786432]{0}', space=vmem, size = 0xc0000, scoped, tag = 'input window, operand 7, single buffered']
    #allocation11 [shape = 's32[1]{0}', space=sflag, size = 0x4, scoped, tag = 'scoped memory for basic_relu_forward.1']
    #allocation12 [shape = 'u8[1536]{0}', space=vmem, size = 0x800, scoped, tag = 'input window, operand 8, single buffered']
    %14 = vsyncpa [#allocation3], 0
    %15 = vsyncpa [#allocation5], 0
    %16 = vsyncpa [#allocation8], 0
    %17 = vsyncpa [#allocation11], 0
    // Predicated region
    $region2: #{basic_relu_forward.1} parent=1 // pred_check
      _
    $region3: #{basic_relu_forward.1} parent=1 // pred_check_branch
      %19 = sbr.rel (0) target = $region5
    $region4: #{basic_relu_forward.1} parent=1 // pred_region
      _
    $region5: #{basic_relu_forward.1} parent=1 // pred_fallthru
      _
    // Predicated region
    $region6: #{basic_relu_forward.1} parent=1 // pred_check
      _
    $region7: #{basic_relu_forward.1} parent=1 // pred_check_branch
      %21 = sbr.rel (0) target = $region9
    $region8: #{basic_relu_forward.1} parent=1 // pred_region
      _
    $region9: #{basic_relu_forward.1} parent=1 // pred_fallthru
      _
    // Predicated region
    $region10: #{basic_relu_forward.1} parent=1 // pred_check
      _
    $region11: #{basic_relu_forward.1} parent=1 // pred_check_branch
      %23 = sbr.rel (0) target = $region13
    $region12: #{basic_relu_forward.1} parent=1 // pred_region
      %s25 = ssub.s32 128, 128
      %26 = vsyncadd [#allocation3], %s25
      %s28 = sshll.u32 [#allocation2], 4
      %s29 = int_to_ptr.vmem [resolvable:$true] %s28
      %31 = dma.hbm_to_vmem [thread:$0]  %s2, 128, %s29, [#allocation3]
    $region13: #{basic_relu_forward.1} parent=1 // pred_fallthru
      _
    // Predicated region
    $region14: #{basic_relu_forward.1} parent=1 // pred_check
      _
    $region15: #{basic_relu_forward.1} parent=1 // pred_check_branch
      %33 = sbr.rel (0) target = $region17
    $region16: #{basic_relu_forward.1} parent=1 // pred_region
      %s35 = ssub.s32 22016, 22016
      %36 = vsyncadd [#allocation5], %s35
      %s37 = sshll.u32 [#allocation4], 4
      %s38 = int_to_ptr.vmem [resolvable:$true] %s37
      %43 = dma.hbm_to_vmem [thread:$0]  %s3, 22016, %s38, [#allocation5], 512, 512, 32
    $region17: #{basic_relu_forward.1} parent=1 // pred_fallthru
      _
    // Predicated region
    $region18: #{basic_relu_forward.1} parent=1 // pred_check
      _
    $region19: #{basic_relu_forward.1} parent=1 // pred_check_branch
      %45 = sbr.rel (0) target = $region21
    $region20: #{basic_relu_forward.1} parent=1 // pred_region
      %s47 = ssub.s32 128, 128
      %48 = vsyncadd [#allocation5], %s47
      %s50 = sshll.u32 [#allocation6], 4
      %s51 = int_to_ptr.vmem [resolvable:$true] %s50
      %53 = dma.hbm_to_vmem [thread:$0]  %s4, 128, %s51, [#allocation5]
    $region21: #{basic_relu_forward.1} parent=1 // pred_fallthru
      _
    // Predicated region
    $region22: #{basic_relu_forward.1} parent=1 // pred_check
      _
    $region23: #{basic_relu_forward.1} parent=1 // pred_check_branch
      %55 = sbr.rel (0) target = $region25
    $region24: #{basic_relu_forward.1} parent=1 // pred_region
      %s57 = ssub.s32 65536, 65536
      %58 = vsyncadd [#allocation8], %s57
      %s59 = sshll.u32 [#allocation7], 4
      %s60 = int_to_ptr.vmem [resolvable:$true] %s59
      %65 = dma.hbm_to_vmem [thread:$0]  %s5, 65536, %s60, [#allocation8], 512, 512, 32
    $region25: #{basic_relu_forward.1} parent=1 // pred_fallthru
      _
    // Predicated region
    $region26: #{basic_relu_forward.1} parent=1 // pred_check
      _
    $region27: #{basic_relu_forward.1} parent=1 // pred_check_branch
      %67 = sbr.rel (0) target = $region29
    $region28: #{basic_relu_forward.1} parent=1 // pred_region
      %s69 = ssub.s32 128, 128
      %70 = vsyncadd [#allocation8], %s69
      %s72 = sshll.u32 [#allocation9], 4
      %s73 = int_to_ptr.vmem [resolvable:$true] %s72
      %75 = dma.hbm_to_vmem [thread:$0]  %s6, 128, %s73, [#allocation8]
    $region29: #{basic_relu_forward.1} parent=1 // pred_fallthru
      _
    // Predicated region
    $region30: #{basic_relu_forward.1} parent=1 // pred_check
      _
    $region31: #{basic_relu_forward.1} parent=1 // pred_check_branch
      %77 = sbr.rel (0) target = $region33
    $region32: #{basic_relu_forward.1} parent=1 // pred_region
      %s79 = ssub.s32 24576, 24576
      %80 = vsyncadd [#allocation11], %s79
      %s81 = sshll.u32 [#allocation10], 4
      %s82 = int_to_ptr.vmem [resolvable:$true] %s81
      %87 = dma.hbm_to_vmem [thread:$0]  %s7, 24576, %s82, [#allocation11], 192, 192, 12
    $region33: #{basic_relu_forward.1} parent=1 // pred_fallthru
      _
    // Predicated region
    $region34: #{basic_relu_forward.1} parent=1 // pred_check
      _
    $region35: #{basic_relu_forward.1} parent=1 // pred_check_branch
      %89 = sbr.rel (0) target = $region37
    $region36: #{basic_relu_forward.1} parent=1 // pred_region
      %s91 = ssub.s32 48, 48
      %92 = vsyncadd [#allocation11], %s91
      %s94 = sshll.u32 [#allocation12], 4
      %s95 = int_to_ptr.vmem [resolvable:$true] %s94
      %97 = dma.hbm_to_vmem [thread:$0]  %s8, 48, %s95, [#allocation11]
    $region37: #{basic_relu_forward.1} parent=1 // pred_fallthru
      _
    // Predicated region
    $region38: #{basic_relu_forward.1} parent=1 // pred_check
      _
    $region39: #{basic_relu_forward.1} parent=1 // pred_check_branch
      %99 = sbr.rel (0) target = $region41
    $region40: #{basic_relu_forward.1} parent=1 // pred_region
      %100 = dma.done [#allocation3], 128
    $region41: #{basic_relu_forward.1} parent=1 // pred_fallthru
      _
    // Predicated region
    $region42: #{basic_relu_forward.1} parent=1 // pred_check
      _
    $region43: #{basic_relu_forward.1} parent=1 // pred_check_branch
      %102 = sbr.rel (0) target = $region45
    $region44: #{basic_relu_forward.1} parent=1 // pred_region
      %103 = dma.done [#allocation5], 22016
    $region45: #{basic_relu_forward.1} parent=1 // pred_fallthru
      _
    // Predicated region
    $region46: #{basic_relu_forward.1} parent=1 // pred_check
      _
    $region47: #{basic_relu_forward.1} parent=1 // pred_check_branch
      %105 = sbr.rel (0) target = $region49
    $region48: #{basic_relu_forward.1} parent=1 // pred_region
      %106 = dma.done [#allocation5], 128
    $region49: #{basic_relu_forward.1} parent=1 // pred_fallthru
      _
    // Predicated region
    $region50: #{basic_relu_forward.1} parent=1 // pred_check
      _
    $region51: #{basic_relu_forward.1} parent=1 // pred_check_branch
      %108 = sbr.rel (0) target = $region53
    $region52: #{basic_relu_forward.1} parent=1 // pred_region
      %109 = dma.done [#allocation8], 65536
    $region53: #{basic_relu_forward.1} parent=1 // pred_fallthru
      _
    // Predicated region
    $region54: #{basic_relu_forward.1} parent=1 // pred_check
      _
    $region55: #{basic_relu_forward.1} parent=1 // pred_check_branch
      %111 = sbr.rel (0) target = $region57
    $region56: #{basic_relu_forward.1} parent=1 // pred_region
      %112 = dma.done [#allocation8], 128
    $region57: #{basic_relu_forward.1} parent=1 // pred_fallthru
      _
    // Predicated region
    $region58: #{basic_relu_forward.1} parent=1 // pred_check
      _
    $region59: #{basic_relu_forward.1} parent=1 // pred_check_branch
      %114 = sbr.rel (0) target = $region61
    $region60: #{basic_relu_forward.1} parent=1 // pred_region
      %115 = dma.done [#allocation11], 24576
    $region61: #{basic_relu_forward.1} parent=1 // pred_fallthru
      _
    // Predicated region
    $region62: #{basic_relu_forward.1} parent=1 // pred_check
      _
    $region63: #{basic_relu_forward.1} parent=1 // pred_check_branch
      %117 = sbr.rel (0) target = $region65
    $region64: #{basic_relu_forward.1} parent=1 // pred_region
      %118 = dma.done [#allocation11], 48
    $region65: #{basic_relu_forward.1} parent=1 // pred_fallthru
      _
    %v120 = vld [vmem:[%s1] sm:$0xff]
    %v121 = vld [vmem:[%s1 + $0x8] sm:$0xff]
    %v122 = vld [vmem:[%s1 + $0x10] sm:$0xff]
    %v123 = vpack.c.bf16 %v120, %v120
    %v124 = vpack.c.bf16 %v121, %v121
    %v125 = vpack.c.bf16 %v122, %v122
    %v126 = vld [vmem:[#allocation4] sm:$0xff]
    %v127 = vld [vmem:[#allocation4 + $0x8] sm:$0xff]
    %v128 = vld [vmem:[#allocation4 + $0x10] sm:$0xff]
    %v129 = vld [vmem:[#allocation4 + $0x18] sm:$0xff]
    %v130 = vld [vmem:[#allocation4 + $0x20] sm:$0xff]
    %v131 = vld [vmem:[#allocation4 + $0x28] sm:$0xff]
    %v132 = vld [vmem:[#allocation4 + $0x30] sm:$0xff]
    %v133 = vld [vmem:[#allocation4 + $0x38] sm:$0xff]
    %v134 = vld [vmem:[#allocation4 + $0x40] sm:$0xff]
    %v135 = vld [vmem:[#allocation4 + $0x48] sm:$0xff]
    %v136 = vld [vmem:[#allocation4 + $0x50] sm:$0xff]
    %v137 = vld [vmem:[#allocation4 + $0x58] sm:$0xff]
    %v138 = vld [vmem:[#allocation4 + $0x60] sm:$0xff]
    %v139 = vld [vmem:[#allocation4 + $0x68] sm:$0xff]
    %v140 = vld [vmem:[#allocation4 + $0x70] sm:$0xff]
    %v141 = vld [vmem:[#allocation4 + $0x78] sm:$0xff]
    %v142 = vld [vmem:[#allocation4 + $0x80] sm:$0xff]
    %v143 = vld [vmem:[#allocation4 + $0x88] sm:$0xff]
    %v144 = vld [vmem:[#allocation4 + $0x90] sm:$0xff]
    %v145 = vld [vmem:[#allocation4 + $0x98] sm:$0xff]
    %v146 = vld [vmem:[#allocation4 + $0xa0] sm:$0xff]
    %v147 = vld [vmem:[#allocation4 + $0xa8] sm:$0xff]
    %v148 = vld [vmem:[#allocation4 + $0xb0] sm:$0xff]
    %v149 = vld [vmem:[#allocation4 + $0xb8] sm:$0xff]
    %v150 = vld [vmem:[#allocation4 + $0xc0] sm:$0xff]
    %v151 = vld [vmem:[#allocation4 + $0xc8] sm:$0xff]
    %v152 = vld [vmem:[#allocation4 + $0xd0] sm:$0xff]
    %v153 = vld [vmem:[#allocation4 + $0xd8] sm:$0xff]
    %v154 = vld [vmem:[#allocation4 + $0xe0] sm:$0xff]
    %v155 = vld [vmem:[#allocation4 + $0xe8] sm:$0xff]
    %v156 = vld [vmem:[#allocation4 + $0xf0] sm:$0xff]
    %v157 = vld [vmem:[#allocation4 + $0xf8] sm:$0xff]
    %v158 = vld [vmem:[#allocation4 + $0x100] sm:$0xff]
    %v159 = vld [vmem:[#allocation4 + $0x108] sm:$0xff]
    %v160 = vld [vmem:[#allocation4 + $0x110] sm:$0xff]
    %v161 = vld [vmem:[#allocation4 + $0x118] sm:$0xff]
    %v162 = vld [vmem:[#allocation4 + $0x120] sm:$0xff]
    %v163 = vld [vmem:[#allocation4 + $0x128] sm:$0xff]
    %v164 = vld [vmem:[#allocation4 + $0x130] sm:$0xff]
    %v165 = vld [vmem:[#allocation4 + $0x138] sm:$0xff]
    %v166 = vld [vmem:[#allocation4 + $0x140] sm:$0xff]
    %v167 = vld [vmem:[#allocation4 + $0x148] sm:$0xff]
    %v168 = vld [vmem:[#allocation4 + $0x150] sm:$0xff]
    %v169 = vld [vmem:[#allocation4 + $0x158] sm:$0xff]
    %v170 = vld [vmem:[#allocation4 + $0x160] sm:$0xff]
    %v171 = vld [vmem:[#allocation4 + $0x168] sm:$0xff]
    %v172 = vld [vmem:[#allocation4 + $0x170] sm:$0xff]
    %v173 = vld [vmem:[#allocation4 + $0x178] sm:$0xff]
    %v174 = vld [vmem:[#allocation4 + $0x180] sm:$0xff]
    %v175 = vld [vmem:[#allocation4 + $0x188] sm:$0xff]
    %v176 = vld [vmem:[#allocation4 + $0x190] sm:$0xff]
    %v177 = vld [vmem:[#allocation4 + $0x198] sm:$0xff]
    %v178 = vld [vmem:[#allocation4 + $0x1a0] sm:$0xff]
    %v179 = vld [vmem:[#allocation4 + $0x1a8] sm:$0xff]
    %v180 = vld [vmem:[#allocation4 + $0x1b0] sm:$0xff]
    %v181 = vld [vmem:[#allocation4 + $0x1b8] sm:$0xff]
    %v182 = vld [vmem:[#allocation4 + $0x1c0] sm:$0xff]
    %v183 = vld [vmem:[#allocation4 + $0x1c8] sm:$0xff]
    %v184 = vld [vmem:[#allocation4 + $0x1d0] sm:$0xff]
    %v185 = vld [vmem:[#allocation4 + $0x1d8] sm:$0xff]
    %v186 = vld [vmem:[#allocation4 + $0x1e0] sm:$0xff]
    %v187 = vld [vmem:[#allocation4 + $0x1e8] sm:$0xff]
    %v188 = vld [vmem:[#allocation4 + $0x1f0] sm:$0xff]
    %v189 = vld [vmem:[#allocation4 + $0x1f8] sm:$0xff]
    %v190 = vld [vmem:[#allocation4 + $0x200] sm:$0xff]
    %v191 = vld [vmem:[#allocation4 + $0x208] sm:$0xff]
    %v192 = vld [vmem:[#allocation4 + $0x210] sm:$0xff]
    %v193 = vld [vmem:[#allocation4 + $0x218] sm:$0xff]
    %v194 = vld [vmem:[#allocation4 + $0x220] sm:$0xff]
    %v195 = vld [vmem:[#allocation4 + $0x228] sm:$0xff]
    %v196 = vld [vmem:[#allocation4 + $0x230] sm:$0xff]
    %v197 = vld [vmem:[#allocation4 + $0x238] sm:$0xff]
    %v198 = vld [vmem:[#allocation4 + $0x240] sm:$0xff]
    %v199 = vld [vmem:[#allocation4 + $0x248] sm:$0xff]
    %v200 = vld [vmem:[#allocation4 + $0x250] sm:$0xff]
    %v201 = vld [vmem:[#allocation4 + $0x258] sm:$0xff]
    %v202 = vld [vmem:[#allocation4 + $0x260] sm:$0xff]
    %v203 = vld [vmem:[#allocation4 + $0x268] sm:$0xff]
    %v204 = vld [vmem:[#allocation4 + $0x270] sm:$0xff]
    %v205 = vld [vmem:[#allocation4 + $0x278] sm:$0xff]
    %v206 = vld [vmem:[#allocation4 + $0x280] sm:$0xff]
    %v207 = vld [vmem:[#allocation4 + $0x288] sm:$0xff]
    %v208 = vld [vmem:[#allocation4 + $0x290] sm:$0xff]
    %v209 = vld [vmem:[#allocation4 + $0x298] sm:$0xff]
    %v210 = vld [vmem:[#allocation4 + $0x2a0] sm:$0xff]
    %v211 = vld [vmem:[#allocation4 + $0x2a8] sm:$0xff]
    %v212 = vld [vmem:[#allocation4 + $0x2b0] sm:$0xff]
    %v213 = vld [vmem:[#allocation4 + $0x2b8] sm:$0xff]
    %v214 = vld [vmem:[#allocation4 + $0x2c0] sm:$0xff]
    %v215 = vld [vmem:[#allocation4 + $0x2c8] sm:$0xff]
    %v216 = vld [vmem:[#allocation4 + $0x2d0] sm:$0xff]
    %v217 = vld [vmem:[#allocation4 + $0x2d8] sm:$0xff]
    %v218 = vld [vmem:[#allocation4 + $0x2e0] sm:$0xff]
    %v219 = vld [vmem:[#allocation4 + $0x2e8] sm:$0xff]
    %v220 = vld [vmem:[#allocation4 + $0x2f0] sm:$0xff]
    %v221 = vld [vmem:[#allocation4 + $0x2f8] sm:$0xff]
    %v222 = vld [vmem:[#allocation4 + $0x300] sm:$0xff]
    %v223 = vld [vmem:[#allocation4 + $0x308] sm:$0xff]
    %v224 = vld [vmem:[#allocation4 + $0x310] sm:$0xff]
    %v225 = vld [vmem:[#allocation4 + $0x318] sm:$0xff]
    %v226 = vld [vmem:[#allocation4 + $0x320] sm:$0xff]
    %v227 = vld [vmem:[#allocation4 + $0x328] sm:$0xff]
    %v228 = vld [vmem:[#allocation4 + $0x330] sm:$0xff]
    %v229 = vld [vmem:[#allocation4 + $0x338] sm:$0xff]
    %v230 = vld [vmem:[#allocation4 + $0x340] sm:$0xff]
    %v231 = vld [vmem:[#allocation4 + $0x348] sm:$0xff]
    %v232 = vld [vmem:[#allocation4 + $0x350] sm:$0xff]
    %v233 = vld [vmem:[#allocation4 + $0x358] sm:$0xff]
    %v234 = vld [vmem:[#allocation4 + $0x360] sm:$0xff]
    %v235 = vld [vmem:[#allocation4 + $0x368] sm:$0xff]
    %v236 = vld [vmem:[#allocation4 + $0x370] sm:$0xff]
    %v237 = vld [vmem:[#allocation4 + $0x378] sm:$0xff]
    %v238 = vld [vmem:[#allocation4 + $0x380] sm:$0xff]
    %v239 = vld [vmem:[#allocation4 + $0x388] sm:$0xff]
    %v240 = vld [vmem:[#allocation4 + $0x390] sm:$0xff]
    %v241 = vld [vmem:[#allocation4 + $0x398] sm:$0xff]
    %v242 = vld [vmem:[#allocation4 + $0x3a0] sm:$0xff]
    %v243 = vld [vmem:[#allocation4 + $0x3a8] sm:$0xff]
    %v244 = vld [vmem:[#allocation4 + $0x3b0] sm:$0xff]
    %v245 = vld [vmem:[#allocation4 + $0x3b8] sm:$0xff]
    %v246 = vld [vmem:[#allocation4 + $0x3c0] sm:$0xff]
    %v247 = vld [vmem:[#allocation4 + $0x3c8] sm:$0xff]
    %v248 = vld [vmem:[#allocation4 + $0x3d0] sm:$0xff]
    %v249 = vld [vmem:[#allocation4 + $0x3d8] sm:$0xff]
    %v250 = vld [vmem:[#allocation4 + $0x3e0] sm:$0xff]
    %v251 = vld [vmem:[#allocation4 + $0x3e8] sm:$0xff]
    %v252 = vld [vmem:[#allocation4 + $0x3f0] sm:$0xff]
    %v253 = vld [vmem:[#allocation4 + $0x3f8] sm:$0xff]
    %v254 = vld [vmem:[#allocation4 + $0x400] sm:$0xff]
    %v255 = vld [vmem:[#allocation4 + $0x408] sm:$0xff]
    %v256 = vld [vmem:[#allocation4 + $0x410] sm:$0xff]
    %v257 = vld [vmem:[#allocation4 + $0x418] sm:$0xff]
    %v258 = vld [vmem:[#allocation4 + $0x420] sm:$0xff]
    %v259 = vld [vmem:[#allocation4 + $0x428] sm:$0xff]
    %v260 = vld [vmem:[#allocation4 + $0x430] sm:$0xff]
    %v261 = vld [vmem:[#allocation4 + $0x438] sm:$0xff]
    %v262 = vld [vmem:[#allocation4 + $0x440] sm:$0xff]
    %v263 = vld [vmem:[#allocation4 + $0x448] sm:$0xff]
    %v264 = vld [vmem:[#allocation4 + $0x450] sm:$0xff]
    %v265 = vld [vmem:[#allocation4 + $0x458] sm:$0xff]
    %v266 = vld [vmem:[#allocation4 + $0x460] sm:$0xff]
    %v267 = vld [vmem:[#allocation4 + $0x468] sm:$0xff]
    %v268 = vld [vmem:[#allocation4 + $0x470] sm:$0xff]
    %v269 = vld [vmem:[#allocation4 + $0x478] sm:$0xff]
    %v270 = vld [vmem:[#allocation4 + $0x480] sm:$0xff]
    %v271 = vld [vmem:[#allocation4 + $0x488] sm:$0xff]
    %v272 = vld [vmem:[#allocation4 + $0x490] sm:$0xff]
    %v273 = vld [vmem:[#allocation4 + $0x498] sm:$0xff]
    %v274 = vld [vmem:[#allocation4 + $0x4a0] sm:$0xff]
    %v275 = vld [vmem:[#allocation4 + $0x4a8] sm:$0xff]
    %v276 = vld [vmem:[#allocation4 + $0x4b0] sm:$0xff]
    %v277 = vld [vmem:[#allocation4 + $0x4b8] sm:$0xff]
    %v278 = vld [vmem:[#allocation4 + $0x4c0] sm:$0xff]
    %v279 = vld [vmem:[#allocation4 + $0x4c8] sm:$0xff]
    %v280 = vld [vmem:[#allocation4 + $0x4d0] sm:$0xff]
    %v281 = vld [vmem:[#allocation4 + $0x4d8] sm:$0xff]
    %v282 = vld [vmem:[#allocation4 + $0x4e0] sm:$0xff]
    %v283 = vld [vmem:[#allocation4 + $0x4e8] sm:$0xff]
    %v284 = vld [vmem:[#allocation4 + $0x4f0] sm:$0xff]
    %v285 = vld [vmem:[#allocation4 + $0x4f8] sm:$0xff]
    %v286 = vld [vmem:[#allocation4 + $0x500] sm:$0xff]
    %v287 = vld [vmem:[#allocation4 + $0x508] sm:$0xff]
    %v288 = vld [vmem:[#allocation4 + $0x510] sm:$0xff]
    %v289 = vld [vmem:[#allocation4 + $0x518] sm:$0xff]
    %v290 = vld [vmem:[#allocation4 + $0x520] sm:$0xff]
    %v291 = vld [vmem:[#allocation4 + $0x528] sm:$0xff]
    %v292 = vld [vmem:[#allocation4 + $0x530] sm:$0xff]
    %v293 = vld [vmem:[#allocation4 + $0x538] sm:$0xff]
    %v294 = vld [vmem:[#allocation4 + $0x540] sm:$0x77]
    %v295 = vld [vmem:[#allocation4 + $0x548] sm:$0x77]
    %v296 = vld [vmem:[#allocation4 + $0x550] sm:$0x77]
    %v297 = vld [vmem:[#allocation4 + $0x558] sm:$0x77]
    %v298 = vld [vmem:[%s0] sm:$0xff]
    %v299 = vld [vmem:[#allocation2] sm:$0xff]
    %301 = vset.pattern.permute.xlu0 0
    %302 = vperm.xlu0 %301, %v298
    %v303 = vpop.permute.xlu0 %302
    %v306 = vlaneseq
    %v307 = vshrl.u32 %v306, 7
    %v308 = vsub.s32 0, %v307
    %v309 = vrot.slane %v299, %v308
    %v310 = vlaneseq
    %v311 = vshrl.u32 %v310, 7
    %v312 = vsub.s32 1, %v311
    %v313 = vrot.slane %v299, %v312
    %v314 = vlaneseq
    %v315 = vshrl.u32 %v314, 7
    %v316 = vsub.s32 2, %v315
    %v317 = vrot.slane %v299, %v316
    %v318 = vlaneseq
    %v319 = vshrl.u32 %v318, 7
    %v320 = vsub.s32 3, %v319
    %v321 = vrot.slane %v299, %v320
    %v322 = vlaneseq
    %v323 = vshrl.u32 %v322, 7
    %v324 = vsub.s32 4, %v323
    %v325 = vrot.slane %v299, %v324
    %v326 = vlaneseq
    %v327 = vshrl.u32 %v326, 7
    %v328 = vsub.s32 5, %v327
    %v329 = vrot.slane %v299, %v328
    %v330 = vlaneseq
    %v331 = vshrl.u32 %v330, 7
    %v332 = vsub.s32 6, %v331
    %v333 = vrot.slane %v299, %v332
    %v334 = vlaneseq
    %v335 = vshrl.u32 %v334, 7
    %v336 = vsub.s32 7, %v335
    %v337 = vrot.slane %v299, %v336
    %v346 = vmul.f32 %v303, %v309
    %v347 = vmul.f32 %v303, %v313
    %v348 = vmul.f32 %v303, %v317
    %v349 = vmul.f32 %v303, %v321
    %v350 = vmul.f32 %v303, %v325
    %v351 = vmul.f32 %v303, %v329
    %v352 = vmul.f32 %v303, %v333
    %v353 = vmul.f32 %v303, %v337
    %v526 = vunpack.c.l.b16 %v126
    %v527 = vunpack.c.h.b16 %v126
    %v528 = vunpack.c.l.b16 %v127
    %v529 = vunpack.c.h.b16 %v127
    %v530 = vunpack.c.l.b16 %v128
    %v531 = vunpack.c.h.b16 %v128
    %v532 = vunpack.c.l.b16 %v129
    %v533 = vunpack.c.h.b16 %v129
    %v534 = vunpack.c.l.b16 %v130
    %v535 = vunpack.c.h.b16 %v130
    %v536 = vunpack.c.l.b16 %v131
    %v537 = vunpack.c.h.b16 %v131
    %v538 = vunpack.c.l.b16 %v132
    %v539 = vunpack.c.h.b16 %v132
    %v540 = vunpack.c.l.b16 %v133
    %v541 = vunpack.c.h.b16 %v133
    %v542 = vunpack.c.l.b16 %v134
    %v543 = vunpack.c.h.b16 %v134
    %v544 = vunpack.c.l.b16 %v135
    %v545 = vunpack.c.h.b16 %v135
    %v546 = vunpack.c.l.b16 %v136
    %v547 = vunpack.c.h.b16 %v136
    %v548 = vunpack.c.l.b16 %v137
    %v549 = vunpack.c.h.b16 %v137
    %v550 = vunpack.c.l.b16 %v138
    %v551 = vunpack.c.h.b16 %v138
    %v552 = vunpack.c.l.b16 %v139
    %v553 = vunpack.c.h.b16 %v139
    %v554 = vunpack.c.l.b16 %v140
    %v555 = vunpack.c.h.b16 %v140
    %v556 = vunpack.c.l.b16 %v141
    %v557 = vunpack.c.h.b16 %v141
    %v558 = vunpack.c.l.b16 %v142
    %v559 = vunpack.c.h.b16 %v142
    %v560 = vunpack.c.l.b16 %v143
    %v561 = vunpack.c.h.b16 %v143
    %v562 = vunpack.c.l.b16 %v144
    %v563 = vunpack.c.h.b16 %v144
    %v564 = vunpack.c.l.b16 %v145
    %v565 = vunpack.c.h.b16 %v145
    %v566 = vunpack.c.l.b16 %v146
    %v567 = vunpack.c.h.b16 %v146
    %v568 = vunpack.c.l.b16 %v147
    %v569 = vunpack.c.h.b16 %v147
    %v570 = vunpack.c.l.b16 %v148
    %v571 = vunpack.c.h.b16 %v148
    %v572 = vunpack.c.l.b16 %v149
    %v573 = vunpack.c.h.b16 %v149
    %v574 = vunpack.c.l.b16 %v150
    %v575 = vunpack.c.h.b16 %v150
    %v576 = vunpack.c.l.b16 %v151
    %v577 = vunpack.c.h.b16 %v151
    %v578 = vunpack.c.l.b16 %v152
    %v579 = vunpack.c.h.b16 %v152
    %v580 = vunpack.c.l.b16 %v153
    %v581 = vunpack.c.h.b16 %v153
    %v582 = vunpack.c.l.b16 %v154
    %v583 = vunpack.c.h.b16 %v154
    %v584 = vunpack.c.l.b16 %v155
    %v585 = vunpack.c.h.b16 %v155
    %v586 = vunpack.c.l.b16 %v156
    %v587 = vunpack.c.h.b16 %v156
    %v588 = vunpack.c.l.b16 %v157
    %v589 = vunpack.c.h.b16 %v157
    %v590 = vunpack.c.l.b16 %v158
    %v591 = vunpack.c.h.b16 %v158
    %v592 = vunpack.c.l.b16 %v159
    %v593 = vunpack.c.h.b16 %v159
    %v594 = vunpack.c.l.b16 %v160
    %v595 = vunpack.c.h.b16 %v160
    %v596 = vunpack.c.l.b16 %v161
    %v597 = vunpack.c.h.b16 %v161
    %v598 = vunpack.c.l.b16 %v162
    %v599 = vunpack.c.h.b16 %v162
    %v600 = vunpack.c.l.b16 %v163
    %v601 = vunpack.c.h.b16 %v163
    %v602 = vunpack.c.l.b16 %v164
    %v603 = vunpack.c.h.b16 %v164
    %v604 = vunpack.c.l.b16 %v165
    %v605 = vunpack.c.h.b16 %v165
    %v606 = vunpack.c.l.b16 %v166
    %v607 = vunpack.c.h.b16 %v166
    %v608 = vunpack.c.l.b16 %v167
    %v609 = vunpack.c.h.b16 %v167
    %v610 = vunpack.c.l.b16 %v168
    %v611 = vunpack.c.h.b16 %v168
    %v612 = vunpack.c.l.b16 %v169
    %v613 = vunpack.c.h.b16 %v169
    %v614 = vunpack.c.l.b16 %v170
    %v615 = vunpack.c.h.b16 %v170
    %v616 = vunpack.c.l.b16 %v171
    %v617 = vunpack.c.h.b16 %v171
    %v618 = vunpack.c.l.b16 %v172
    %v619 = vunpack.c.h.b16 %v172
    %v620 = vunpack.c.l.b16 %v173
    %v621 = vunpack.c.h.b16 %v173
    %v622 = vunpack.c.l.b16 %v174
    %v623 = vunpack.c.h.b16 %v174
    %v624 = vunpack.c.l.b16 %v175
    %v625 = vunpack.c.h.b16 %v175
    %v626 = vunpack.c.l.b16 %v176
    %v627 = vunpack.c.h.b16 %v176
    %v628 = vunpack.c.l.b16 %v177
    %v629 = vunpack.c.h.b16 %v177
    %v630 = vunpack.c.l.b16 %v178
    %v631 = vunpack.c.h.b16 %v178
    %v632 = vunpack.c.l.b16 %v179
    %v633 = vunpack.c.h.b16 %v179
    %v634 = vunpack.c.l.b16 %v180
    %v635 = vunpack.c.h.b16 %v180
    %v636 = vunpack.c.l.b16 %v181
    %v637 = vunpack.c.h.b16 %v181
    %v638 = vunpack.c.l.b16 %v182
    %v639 = vunpack.c.h.b16 %v182
    %v640 = vunpack.c.l.b16 %v183
    %v641 = vunpack.c.h.b16 %v183
    %v642 = vunpack.c.l.b16 %v184
    %v643 = vunpack.c.h.b16 %v184
    %v644 = vunpack.c.l.b16 %v185
    %v645 = vunpack.c.h.b16 %v185
    %v646 = vunpack.c.l.b16 %v186
    %v647 = vunpack.c.h.b16 %v186
    %v648 = vunpack.c.l.b16 %v187
    %v649 = vunpack.c.h.b16 %v187
    %v650 = vunpack.c.l.b16 %v188
    %v651 = vunpack.c.h.b16 %v188
    %v652 = vunpack.c.l.b16 %v189
    %v653 = vunpack.c.h.b16 %v189
    %v654 = vunpack.c.l.b16 %v190
    %v655 = vunpack.c.h.b16 %v190
    %v656 = vunpack.c.l.b16 %v191
    %v657 = vunpack.c.h.b16 %v191
    %v658 = vunpack.c.l.b16 %v192
    %v659 = vunpack.c.h.b16 %v192
    %v660 = vunpack.c.l.b16 %v193
    %v661 = vunpack.c.h.b16 %v193
    %v662 = vunpack.c.l.b16 %v194
    %v663 = vunpack.c.h.b16 %v194
    %v664 = vunpack.c.l.b16 %v195
    %v665 = vunpack.c.h.b16 %v195
    %v666 = vunpack.c.l.b16 %v196
    %v667 = vunpack.c.h.b16 %v196
    %v668 = vunpack.c.l.b16 %v197
    %v669 = vunpack.c.h.b16 %v197
    %v670 = vunpack.c.l.b16 %v198
    %v671 = vunpack.c.h.b16 %v198
    %v672 = vunpack.c.l.b16 %v199
    %v673 = vunpack.c.h.b16 %v199
    %v674 = vunpack.c.l.b16 %v200
    %v675 = vunpack.c.h.b16 %v200
    %v676 = vunpack.c.l.b16 %v201
    %v677 = vunpack.c.h.b16 %v201
    %v678 = vunpack.c.l.b16 %v202
    %v679 = vunpack.c.h.b16 %v202
    %v680 = vunpack.c.l.b16 %v203
    %v681 = vunpack.c.h.b16 %v203
    %v682 = vunpack.c.l.b16 %v204
    %v683 = vunpack.c.h.b16 %v204
    %v684 = vunpack.c.l.b16 %v205
    %v685 = vunpack.c.h.b16 %v205
    %v686 = vunpack.c.l.b16 %v206
    %v687 = vunpack.c.h.b16 %v206
    %v688 = vunpack.c.l.b16 %v207
    %v689 = vunpack.c.h.b16 %v207
    %v690 = vunpack.c.l.b16 %v208
    %v691 = vunpack.c.h.b16 %v208
    %v692 = vunpack.c.l.b16 %v209
    %v693 = vunpack.c.h.b16 %v209
    %v694 = vunpack.c.l.b16 %v210
    %v695 = vunpack.c.h.b16 %v210
    %v696 = vunpack.c.l.b16 %v211
    %v697 = vunpack.c.h.b16 %v211
    %v698 = vunpack.c.l.b16 %v212
    %v699 = vunpack.c.h.b16 %v212
    %v700 = vunpack.c.l.b16 %v213
    %v701 = vunpack.c.h.b16 %v213
    %v702 = vunpack.c.l.b16 %v214
    %v703 = vunpack.c.h.b16 %v214
    %v704 = vunpack.c.l.b16 %v215
    %v705 = vunpack.c.h.b16 %v215
    %v706 = vunpack.c.l.b16 %v216
    %v707 = vunpack.c.h.b16 %v216
    %v708 = vunpack.c.l.b16 %v217
    %v709 = vunpack.c.h.b16 %v217
    %v710 = vunpack.c.l.b16 %v218
    %v711 = vunpack.c.h.b16 %v218
    %v712 = vunpack.c.l.b16 %v219
    %v713 = vunpack.c.h.b16 %v219
    %v714 = vunpack.c.l.b16 %v220
    %v715 = vunpack.c.h.b16 %v220
    %v716 = vunpack.c.l.b16 %v221
    %v717 = vunpack.c.h.b16 %v221
    %v718 = vunpack.c.l.b16 %v222
    %v719 = vunpack.c.h.b16 %v222
    %v720 = vunpack.c.l.b16 %v223
    %v721 = vunpack.c.h.b16 %v223
    %v722 = vunpack.c.l.b16 %v224
    %v723 = vunpack.c.h.b16 %v224
    %v724 = vunpack.c.l.b16 %v225
    %v725 = vunpack.c.h.b16 %v225
    %v726 = vunpack.c.l.b16 %v226
    %v727 = vunpack.c.h.b16 %v226
    %v728 = vunpack.c.l.b16 %v227
    %v729 = vunpack.c.h.b16 %v227
    %v730 = vunpack.c.l.b16 %v228
    %v731 = vunpack.c.h.b16 %v228
    %v732 = vunpack.c.l.b16 %v229
    %v733 = vunpack.c.h.b16 %v229
    %v734 = vunpack.c.l.b16 %v230
    %v735 = vunpack.c.h.b16 %v230
    %v736 = vunpack.c.l.b16 %v231
    %v737 = vunpack.c.h.b16 %v231
    %v738 = vunpack.c.l.b16 %v232
    %v739 = vunpack.c.h.b16 %v232
    %v740 = vunpack.c.l.b16 %v233
    %v741 = vunpack.c.h.b16 %v233
    %v742 = vunpack.c.l.b16 %v234
    %v743 = vunpack.c.h.b16 %v234
    %v744 = vunpack.c.l.b16 %v235
    %v745 = vunpack.c.h.b16 %v235
    %v746 = vunpack.c.l.b16 %v236
    %v747 = vunpack.c.h.b16 %v236
    %v748 = vunpack.c.l.b16 %v237
    %v749 = vunpack.c.h.b16 %v237
    %v750 = vunpack.c.l.b16 %v238
    %v751 = vunpack.c.h.b16 %v238
    %v752 = vunpack.c.l.b16 %v239
    %v753 = vunpack.c.h.b16 %v239
    %v754 = vunpack.c.l.b16 %v240
    %v755 = vunpack.c.h.b16 %v240
    %v756 = vunpack.c.l.b16 %v241
    %v757 = vunpack.c.h.b16 %v241
    %v758 = vunpack.c.l.b16 %v242
    %v759 = vunpack.c.h.b16 %v242
    %v760 = vunpack.c.l.b16 %v243
    %v761 = vunpack.c.h.b16 %v243
    %v762 = vunpack.c.l.b16 %v244
    %v763 = vunpack.c.h.b16 %v244
    %v764 = vunpack.c.l.b16 %v245
    %v765 = vunpack.c.h.b16 %v245
    %v766 = vunpack.c.l.b16 %v246
    %v767 = vunpack.c.h.b16 %v246
    %v768 = vunpack.c.l.b16 %v247
    %v769 = vunpack.c.h.b16 %v247
    %v770 = vunpack.c.l.b16 %v248
    %v771 = vunpack.c.h.b16 %v248
    %v772 = vunpack.c.l.b16 %v249
    %v773 = vunpack.c.h.b16 %v249
    %v774 = vunpack.c.l.b16 %v250
    %v775 = vunpack.c.h.b16 %v250
    %v776 = vunpack.c.l.b16 %v251
    %v777 = vunpack.c.h.b16 %v251
    %v778 = vunpack.c.l.b16 %v252
    %v779 = vunpack.c.h.b16 %v252
    %v780 = vunpack.c.l.b16 %v253
    %v781 = vunpack.c.h.b16 %v253
    %v782 = vunpack.c.l.b16 %v254
    %v783 = vunpack.c.h.b16 %v254
    %v784 = vunpack.c.l.b16 %v255
    %v785 = vunpack.c.h.b16 %v255
    %v786 = vunpack.c.l.b16 %v256
    %v787 = vunpack.c.h.b16 %v256
    %v788 = vunpack.c.l.b16 %v257
    %v789 = vunpack.c.h.b16 %v257
    %v790 = vunpack.c.l.b16 %v258
    %v791 = vunpack.c.h.b16 %v258
    %v792 = vunpack.c.l.b16 %v259
    %v793 = vunpack.c.h.b16 %v259
    %v794 = vunpack.c.l.b16 %v260
    %v795 = vunpack.c.h.b16 %v260
    %v796 = vunpack.c.l.b16 %v261
    %v797 = vunpack.c.h.b16 %v261
    %v798 = vunpack.c.l.b16 %v262
    %v799 = vunpack.c.h.b16 %v262
    %v800 = vunpack.c.l.b16 %v263
    %v801 = vunpack.c.h.b16 %v263
    %v802 = vunpack.c.l.b16 %v264
    %v803 = vunpack.c.h.b16 %v264
    %v804 = vunpack.c.l.b16 %v265
    %v805 = vunpack.c.h.b16 %v265
    %v806 = vunpack.c.l.b16 %v266
    %v807 = vunpack.c.h.b16 %v266
    %v808 = vunpack.c.l.b16 %v267
    %v809 = vunpack.c.h.b16 %v267
    %v810 = vunpack.c.l.b16 %v268
    %v811 = vunpack.c.h.b16 %v268
    %v812 = vunpack.c.l.b16 %v269
    %v813 = vunpack.c.h.b16 %v269
    %v814 = vunpack.c.l.b16 %v270
    %v815 = vunpack.c.h.b16 %v270
    %v816 = vunpack.c.l.b16 %v271
    %v817 = vunpack.c.h.b16 %v271
    %v818 = vunpack.c.l.b16 %v272
    %v819 = vunpack.c.h.b16 %v272
    %v820 = vunpack.c.l.b16 %v273
    %v821 = vunpack.c.h.b16 %v273
    %v822 = vunpack.c.l.b16 %v274
    %v823 = vunpack.c.h.b16 %v274
    %v824 = vunpack.c.l.b16 %v275
    %v825 = vunpack.c.h.b16 %v275
    %v826 = vunpack.c.l.b16 %v276
    %v827 = vunpack.c.h.b16 %v276
    %v828 = vunpack.c.l.b16 %v277
    %v829 = vunpack.c.h.b16 %v277
    %v830 = vunpack.c.l.b16 %v278
    %v831 = vunpack.c.h.b16 %v278
    %v832 = vunpack.c.l.b16 %v279
    %v833 = vunpack.c.h.b16 %v279
    %v834 = vunpack.c.l.b16 %v280
    %v835 = vunpack.c.h.b16 %v280
    %v836 = vunpack.c.l.b16 %v281
    %v837 = vunpack.c.h.b16 %v281
    %v838 = vunpack.c.l.b16 %v282
    %v839 = vunpack.c.h.b16 %v282
    %v840 = vunpack.c.l.b16 %v283
    %v841 = vunpack.c.h.b16 %v283
    %v842 = vunpack.c.l.b16 %v284
    %v843 = vunpack.c.h.b16 %v284
    %v844 = vunpack.c.l.b16 %v285
    %v845 = vunpack.c.h.b16 %v285
    %v846 = vunpack.c.l.b16 %v286
    %v847 = vunpack.c.h.b16 %v286
    %v848 = vunpack.c.l.b16 %v287
    %v849 = vunpack.c.h.b16 %v287
    %v850 = vunpack.c.l.b16 %v288
    %v851 = vunpack.c.h.b16 %v288
    %v852 = vunpack.c.l.b16 %v289
    %v853 = vunpack.c.h.b16 %v289
    %v854 = vunpack.c.l.b16 %v290
    %v855 = vunpack.c.h.b16 %v290
    %v856 = vunpack.c.l.b16 %v291
    %v857 = vunpack.c.h.b16 %v291
    %v858 = vunpack.c.l.b16 %v292
    %v859 = vunpack.c.h.b16 %v292
    %v860 = vunpack.c.l.b16 %v293
    %v861 = vunpack.c.h.b16 %v293
    %v862 = vunpack.c.l.b16 %v294
    %v863 = vunpack.c.h.b16 %v294
    %v864 = vunpack.c.l.b16 %v295
    %v865 = vunpack.c.h.b16 %v295
    %v866 = vunpack.c.l.b16 %v296
    %v867 = vunpack.c.h.b16 %v296
    %v868 = vunpack.c.l.b16 %v297
    %v869 = vunpack.c.h.b16 %v297
    %v870 = vpack.c.b16 %v534, %v526
    %v871 = vpack.c.b16 %v535, %v527
    %v872 = vpack.c.b16 %v536, %v528
    %v873 = vpack.c.b16 %v537, %v529
    %v874 = vpack.c.b16 %v538, %v530
    %v875 = vpack.c.b16 %v539, %v531
    %v876 = vpack.c.b16 %v540, %v532
    %v877 = vpack.c.b16 %v541, %v533
    %v878 = vpack.c.b16 %v550, %v542
    %v879 = vpack.c.b16 %v551, %v543
    %v880 = vpack.c.b16 %v552, %v544
    %v881 = vpack.c.b16 %v553, %v545
    %v882 = vpack.c.b16 %v554, %v546
    %v883 = vpack.c.b16 %v555, %v547
    %v884 = vpack.c.b16 %v556, %v548
    %v885 = vpack.c.b16 %v557, %v549
    %v886 = vpack.c.b16 %v566, %v558
    %v887 = vpack.c.b16 %v567, %v559
    %v888 = vpack.c.b16 %v568, %v560
    %v889 = vpack.c.b16 %v569, %v561
    %v890 = vpack.c.b16 %v570, %v562
    %v891 = vpack.c.b16 %v571, %v563
    %v892 = vpack.c.b16 %v572, %v564
    %v893 = vpack.c.b16 %v573, %v565
    %v894 = vpack.c.b16 %v582, %v574
    %v895 = vpack.c.b16 %v583, %v575
    %v896 = vpack.c.b16 %v584, %v576
    %v897 = vpack.c.b16 %v585, %v577
    %v898 = vpack.c.b16 %v586, %v578
    %v899 = vpack.c.b16 %v587, %v579
    %v900 = vpack.c.b16 %v588, %v580
    %v901 = vpack.c.b16 %v589, %v581
    %v902 = vpack.c.b16 %v598, %v590
    %v903 = vpack.c.b16 %v599, %v591
    %v904 = vpack.c.b16 %v600, %v592
    %v905 = vpack.c.b16 %v601, %v593
    %v906 = vpack.c.b16 %v602, %v594
    %v907 = vpack.c.b16 %v603, %v595
    %v908 = vpack.c.b16 %v604, %v596
    %v909 = vpack.c.b16 %v605, %v597
    %v910 = vpack.c.b16 %v614, %v606
    %v911 = vpack.c.b16 %v615, %v607
    %v912 = vpack.c.b16 %v616, %v608
    %v913 = vpack.c.b16 %v617, %v609
    %v914 = vpack.c.b16 %v618, %v610
    %v915 = vpack.c.b16 %v619, %v611
    %v916 = vpack.c.b16 %v620, %v612
    %v917 = vpack.c.b16 %v621, %v613
    %v918 = vpack.c.b16 %v630, %v622
    %v919 = vpack.c.b16 %v631, %v623
    %v920 = vpack.c.b16 %v632, %v624
    %v921 = vpack.c.b16 %v633, %v625
    %v922 = vpack.c.b16 %v634, %v626
    %v923 = vpack.c.b16 %v635, %v627
    %v924 = vpack.c.b16 %v636, %v628
    %v925 = vpack.c.b16 %v637, %v629
    %v926 = vpack.c.b16 %v646, %v638
    %v927 = vpack.c.b16 %v647, %v639
    %v928 = vpack.c.b16 %v648, %v640
    %v929 = vpack.c.b16 %v649, %v641
    %v930 = vpack.c.b16 %v650, %v642
    %v931 = vpack.c.b16 %v651, %v643
    %v932 = vpack.c.b16 %v652, %v644
    %v933 = vpack.c.b16 %v653, %v645
    %v934 = vpack.c.b16 %v662, %v654
    %v935 = vpack.c.b16 %v663, %v655
    %v936 = vpack.c.b16 %v664, %v656
    %v937 = vpack.c.b16 %v665, %v657
    %v938 = vpack.c.b16 %v666, %v658
    %v939 = vpack.c.b16 %v667, %v659
    %v940 = vpack.c.b16 %v668, %v660
    %v941 = vpack.c.b16 %v669, %v661
    %v942 = vpack.c.b16 %v678, %v670
    %v943 = vpack.c.b16 %v679, %v671
    %v944 = vpack.c.b16 %v680, %v672
    %v945 = vpack.c.b16 %v681, %v673
    %v946 = vpack.c.b16 %v682, %v674
    %v947 = vpack.c.b16 %v683, %v675
    %v948 = vpack.c.b16 %v684, %v676
    %v949 = vpack.c.b16 %v685, %v677
    %v950 = vpack.c.b16 %v694, %v686
    %v951 = vpack.c.b16 %v695, %v687
    %v952 = vpack.c.b16 %v696, %v688
    %v953 = vpack.c.b16 %v697, %v689
    %v954 = vpack.c.b16 %v698, %v690
    %v955 = vpack.c.b16 %v699, %v691
    %v956 = vpack.c.b16 %v700, %v692
    %v957 = vpack.c.b16 %v701, %v693
    %v958 = vpack.c.b16 %v710, %v702
    %v959 = vpack.c.b16 %v711, %v703
    %v960 = vpack.c.b16 %v712, %v704
    %v961 = vpack.c.b16 %v713, %v705
    %v962 = vpack.c.b16 %v714, %v706
    %v963 = vpack.c.b16 %v715, %v707
    %v964 = vpack.c.b16 %v716, %v708
    %v965 = vpack.c.b16 %v717, %v709
    %v966 = vpack.c.b16 %v726, %v718
    %v967 = vpack.c.b16 %v727, %v719
    %v968 = vpack.c.b16 %v728, %v720
    %v969 = vpack.c.b16 %v729, %v721
    %v970 = vpack.c.b16 %v730, %v722
    %v971 = vpack.c.b16 %v731, %v723
    %v972 = vpack.c.b16 %v732, %v724
    %v973 = vpack.c.b16 %v733, %v725
    %v974 = vpack.c.b16 %v742, %v734
    %v975 = vpack.c.b16 %v743, %v735
    %v976 = vpack.c.b16 %v744, %v736
    %v977 = vpack.c.b16 %v745, %v737
    %v978 = vpack.c.b16 %v746, %v738
    %v979 = vpack.c.b16 %v747, %v739
    %v980 = vpack.c.b16 %v748, %v740
    %v981 = vpack.c.b16 %v749, %v741
    %v982 = vpack.c.b16 %v758, %v750
    %v983 = vpack.c.b16 %v759, %v751
    %v984 = vpack.c.b16 %v760, %v752
    %v985 = vpack.c.b16 %v761, %v753
    %v986 = vpack.c.b16 %v762, %v754
    %v987 = vpack.c.b16 %v763, %v755
    %v988 = vpack.c.b16 %v764, %v756
    %v989 = vpack.c.b16 %v765, %v757
    %v990 = vpack.c.b16 %v774, %v766
    %v991 = vpack.c.b16 %v775, %v767
    %v992 = vpack.c.b16 %v776, %v768
    %v993 = vpack.c.b16 %v777, %v769
    %v994 = vpack.c.b16 %v778, %v770
    %v995 = vpack.c.b16 %v779, %v771
    %v996 = vpack.c.b16 %v780, %v772
    %v997 = vpack.c.b16 %v781, %v773
    %v998 = vpack.c.b16 %v790, %v782
    %v999 = vpack.c.b16 %v791, %v783
    %v1000 = vpack.c.b16 %v792, %v784
    %v1001 = vpack.c.b16 %v793, %v785
    %v1002 = vpack.c.b16 %v794, %v786
    %v1003 = vpack.c.b16 %v795, %v787
    %v1004 = vpack.c.b16 %v796, %v788
    %v1005 = vpack.c.b16 %v797, %v789
    %v1006 = vpack.c.b16 %v806, %v798
    %v1007 = vpack.c.b16 %v807, %v799
    %v1008 = vpack.c.b16 %v808, %v800
    %v1009 = vpack.c.b16 %v809, %v801
    %v1010 = vpack.c.b16 %v810, %v802
    %v1011 = vpack.c.b16 %v811, %v803
    %v1012 = vpack.c.b16 %v812, %v804
    %v1013 = vpack.c.b16 %v813, %v805
    %v1014 = vpack.c.b16 %v822, %v814
    %v1015 = vpack.c.b16 %v823, %v815
    %v1016 = vpack.c.b16 %v824, %v816
    %v1017 = vpack.c.b16 %v825, %v817
    %v1018 = vpack.c.b16 %v826, %v818
    %v1019 = vpack.c.b16 %v827, %v819
    %v1020 = vpack.c.b16 %v828, %v820
    %v1021 = vpack.c.b16 %v829, %v821
    %v1022 = vpack.c.b16 %v838, %v830
    %v1023 = vpack.c.b16 %v839, %v831
    %v1024 = vpack.c.b16 %v840, %v832
    %v1025 = vpack.c.b16 %v841, %v833
    %v1026 = vpack.c.b16 %v842, %v834
    %v1027 = vpack.c.b16 %v843, %v835
    %v1028 = vpack.c.b16 %v844, %v836
    %v1029 = vpack.c.b16 %v845, %v837
    %v1030 = vpack.c.b16 %v854, %v846
    %v1031 = vpack.c.b16 %v855, %v847
    %v1032 = vpack.c.b16 %v856, %v848
    %v1033 = vpack.c.b16 %v857, %v849
    %v1034 = vpack.c.b16 %v858, %v850
    %v1035 = vpack.c.b16 %v859, %v851
    %v1036 = vpack.c.b16 %v860, %v852
    %v1037 = vpack.c.b16 %v861, %v853
    %v1038 = vpack.c.b16 %v862, %v862
    %v1039 = vpack.c.b16 %v863, %v863
    %v1040 = vpack.c.b16 %v864, %v864
    %v1041 = vpack.c.b16 %v865, %v865
    %v1042 = vpack.c.b16 %v866, %v866
    %v1043 = vpack.c.b16 %v867, %v867
    %v1044 = vpack.c.b16 %v868, %v868
    %v1045 = vpack.c.b16 %v869, %v869
    %vm1214 = vcmask 703488
    %v1216 = vsel %vm1214, %v125, 0
    %vm1218 = vcmask 1042432
    %v1220 = vsel %vm1218, %v1038, 0
    %v1223 = vsel %vm1218, %v1039, 0
    %v1226 = vsel %vm1218, %v1040, 0
    %v1229 = vsel %vm1218, %v1041, 0
    %v1232 = vsel %vm1218, %v1042, 0
    %v1235 = vsel %vm1218, %v1043, 0
    %v1238 = vsel %vm1218, %v1044, 0
    %v1241 = vsel %vm1218, %v1045, 0
    %1243 = vmatprep.subr.bf16.mxu0 %v871
    %1244 = vmatpush1.bf16.msra.mxu0 %v870
    %1245 = vmatprep.subr.bf16.mxu0 %v879
    %1246 = vmatpush1.bf16.msra.mxu0 %v878
    %1247 = vmatprep.subr.bf16.mxu0 %v887
    %1248 = vmatpush1.bf16.msra.mxu0 %v886
    %1249 = vmatprep.subr.bf16.mxu0 %v895
    %1250 = vmatpush1.bf16.msra.mxu0 %v894
    %1251 = vmatprep.subr.bf16.mxu0 %v903
    %1252 = vmatpush1.bf16.msra.mxu0 %v902
    %1253 = vmatprep.subr.bf16.mxu0 %v911
    %1254 = vmatpush1.bf16.msra.mxu0 %v910
    %1255 = vmatprep.subr.bf16.mxu0 %v919
    %1256 = vmatpush1.bf16.msra.mxu0 %v918
    %1257 = vmatprep.subr.bf16.mxu0 %v927
    %1258 = vmatpush1.bf16.msra.mxu0 %v926
    %1259 = vmatprep.subr.bf16.mxu0 %v935
    %1260 = vmatpush1.bf16.msra.mxu0 %v934
    %1261 = vmatprep.subr.bf16.mxu0 %v943
    %1262 = vmatpush1.bf16.msra.mxu0 %v942
    %1263 = vmatprep.subr.bf16.mxu0 %v951
    %1264 = vmatpush1.bf16.msra.mxu0 %v950
    %1265 = vmatprep.subr.bf16.mxu0 %v959
    %1266 = vmatpush1.bf16.msra.mxu0 %v958
    %1267 = vmatprep.subr.bf16.mxu0 %v967
    %1268 = vmatpush1.bf16.msra.mxu0 %v966
    %1269 = vmatprep.subr.bf16.mxu0 %v975
    %1270 = vmatpush1.bf16.msra.mxu0 %v974
    %1271 = vmatprep.subr.bf16.mxu0 %v983
    %1272 = vmatpush1.bf16.msra.mxu0 %v982
    %1273 = vmatprep.subr.bf16.mxu0 %v991
    %1274 = vmatpush1.bf16.msra.mxu0 %v990
    %1275 = vmatprep.mubr.bf16.mxu0 %v124
    %1276 = vmatmul.mubr.bf16.gmra.mrb[0].mxu0 %v123
    %v1277 = vpop.f32.mrb[0].mxu0
    %v1278 = vadd.f32 %v346, %v1277
    %v1279 = vpop.f32.mrb[0].mxu0
    %v1280 = vadd.f32 %v347, %v1279
    %v1281 = vpop.f32.mrb[0].mxu0
    %v1282 = vpop.f32.mrb[0].mxu0
    %1283 = vdwg.mxu0
    %1284 = vmatprep.subr.bf16.mxu0 %v999
    %1285 = vmatpush1.bf16.msra.mxu0 %v998
    %1286 = vmatprep.subr.bf16.mxu0 %v1007
    %1287 = vmatpush1.bf16.msra.mxu0 %v1006
    %1288 = vmatprep.subr.bf16.mxu0 %v1015
    %1289 = vmatpush1.bf16.msra.mxu0 %v1014
    %1290 = vmatprep.subr.bf16.mxu0 %v1023
    %1291 = vmatpush1.bf16.msra.mxu0 %v1022
    %1292 = vmatprep.subr.bf16.mxu0 %v1031
    %1293 = vmatpush1.bf16.msra.mxu0 %v1030
    %1294 = vmatprep.subr.bf16.mxu0 %v1223
    %1295 = vmatpush1.bf16.msra.mxu0 %v1220
    %1296 = vmatprep.subr.bf16.mxu0 0
    %1297 = vmatpush1.bf16.msra.mxu0 0
    %1298 = vmatprep.subr.bf16.mxu0 0
    %1299 = vmatpush1.bf16.msra.mxu0 0
    %1300 = vmatprep.subr.bf16.mxu0 0
    %1301 = vmatpush1.bf16.msra.mxu0 0
    %1302 = vmatprep.subr.bf16.mxu0 0
    %1303 = vmatpush1.bf16.msra.mxu0 0
    %1304 = vmatprep.subr.bf16.mxu0 0
    %1305 = vmatpush1.bf16.msra.mxu0 0
    %1306 = vmatprep.subr.bf16.mxu0 0
    %1307 = vmatpush1.bf16.msra.mxu0 0
    %1308 = vmatprep.subr.bf16.mxu0 0
    %1309 = vmatpush1.bf16.msra.mxu0 0
    %1310 = vmatprep.subr.bf16.mxu0 0
    %1311 = vmatpush1.bf16.msra.mxu0 0
    %1312 = vmatprep.subr.bf16.mxu0 0
    %1313 = vmatpush1.bf16.msra.mxu0 0
    %1314 = vmatprep.subr.bf16.mxu0 0
    %1315 = vmatpush1.bf16.msra.mxu0 0
    %1316 = vmatprep.mubr.bf16.mxu0 0
    %1317 = vmatmul.mubr.bf16.gmra.mrb[0].mxu0 %v1216
    %v1318 = vpop.f32.mrb[0].mxu0
    %v1319 = vadd.f32 %v1278, %v1318
    %v1320 = vpop.f32.mrb[0].mxu0
    %v1321 = vadd.f32 %v1280, %v1320
    %v1322 = vpop.f32.mrb[0].mxu0
    %v1323 = vpop.f32.mrb[0].mxu0
    %1324 = vdwg.mxu0
    %1325 = vmatprep.subr.bf16.mxu0 %v873
    %1326 = vmatpush1.bf16.msra.mxu0 %v872
    %1327 = vmatprep.subr.bf16.mxu0 %v881
    %1328 = vmatpush1.bf16.msra.mxu0 %v880
    %1329 = vmatprep.subr.bf16.mxu0 %v889
    %1330 = vmatpush1.bf16.msra.mxu0 %v888
    %1331 = vmatprep.subr.bf16.mxu0 %v897
    %1332 = vmatpush1.bf16.msra.mxu0 %v896
    %1333 = vmatprep.subr.bf16.mxu0 %v905
    %1334 = vmatpush1.bf16.msra.mxu0 %v904
    %1335 = vmatprep.subr.bf16.mxu0 %v913
    %1336 = vmatpush1.bf16.msra.mxu0 %v912
    %1337 = vmatprep.subr.bf16.mxu0 %v921
    %1338 = vmatpush1.bf16.msra.mxu0 %v920
    %1339 = vmatprep.subr.bf16.mxu0 %v929
    %1340 = vmatpush1.bf16.msra.mxu0 %v928
    %1341 = vmatprep.subr.bf16.mxu0 %v937
    %1342 = vmatpush1.bf16.msra.mxu0 %v936
    %1343 = vmatprep.subr.bf16.mxu0 %v945
    %1344 = vmatpush1.bf16.msra.mxu0 %v944
    %1345 = vmatprep.subr.bf16.mxu0 %v953
    %1346 = vmatpush1.bf16.msra.mxu0 %v952
    %1347 = vmatprep.subr.bf16.mxu0 %v961
    %1348 = vmatpush1.bf16.msra.mxu0 %v960
    %1349 = vmatprep.subr.bf16.mxu0 %v969
    %1350 = vmatpush1.bf16.msra.mxu0 %v968
    %1351 = vmatprep.subr.bf16.mxu0 %v977
    %1352 = vmatpush1.bf16.msra.mxu0 %v976
    %1353 = vmatprep.subr.bf16.mxu0 %v985
    %1354 = vmatpush1.bf16.msra.mxu0 %v984
    %1355 = vmatprep.subr.bf16.mxu0 %v993
    %1356 = vmatpush1.bf16.msra.mxu0 %v992
    %1357 = vmatprep.mubr.bf16.mxu0 %v124
    %1358 = vmatmul.mubr.bf16.gmra.mrb[0].mxu0 %v123
    %v1359 = vpop.f32.mrb[0].mxu0
    %v1360 = vadd.f32 %v348, %v1359
    %v1361 = vpop.f32.mrb[0].mxu0
    %v1362 = vadd.f32 %v349, %v1361
    %v1363 = vpop.f32.mrb[0].mxu0
    %v1364 = vpop.f32.mrb[0].mxu0
    %1365 = vdwg.mxu0
    %1366 = vmatprep.subr.bf16.mxu0 %v1001
    %1367 = vmatpush1.bf16.msra.mxu0 %v1000
    %1368 = vmatprep.subr.bf16.mxu0 %v1009
    %1369 = vmatpush1.bf16.msra.mxu0 %v1008
    %1370 = vmatprep.subr.bf16.mxu0 %v1017
    %1371 = vmatpush1.bf16.msra.mxu0 %v1016
    %1372 = vmatprep.subr.bf16.mxu0 %v1025
    %1373 = vmatpush1.bf16.msra.mxu0 %v1024
    %1374 = vmatprep.subr.bf16.mxu0 %v1033
    %1375 = vmatpush1.bf16.msra.mxu0 %v1032
    %1376 = vmatprep.subr.bf16.mxu0 %v1229
    %1377 = vmatpush1.bf16.msra.mxu0 %v1226
    %1378 = vmatprep.subr.bf16.mxu0 0
    %1379 = vmatpush1.bf16.msra.mxu0 0
    %1380 = vmatprep.subr.bf16.mxu0 0
    %1381 = vmatpush1.bf16.msra.mxu0 0
    %1382 = vmatprep.subr.bf16.mxu0 0
    %1383 = vmatpush1.bf16.msra.mxu0 0
    %1384 = vmatprep.subr.bf16.mxu0 0
    %1385 = vmatpush1.bf16.msra.mxu0 0
    %1386 = vmatprep.subr.bf16.mxu0 0
    %1387 = vmatpush1.bf16.msra.mxu0 0
    %1388 = vmatprep.subr.bf16.mxu0 0
    %1389 = vmatpush1.bf16.msra.mxu0 0
    %1390 = vmatprep.subr.bf16.mxu0 0
    %1391 = vmatpush1.bf16.msra.mxu0 0
    %1392 = vmatprep.subr.bf16.mxu0 0
    %1393 = vmatpush1.bf16.msra.mxu0 0
    %1394 = vmatprep.subr.bf16.mxu0 0
    %1395 = vmatpush1.bf16.msra.mxu0 0
    %1396 = vmatprep.subr.bf16.mxu0 0
    %1397 = vmatpush1.bf16.msra.mxu0 0
    %1398 = vmatprep.mubr.bf16.mxu0 0
    %1399 = vmatmul.mubr.bf16.gmra.mrb[0].mxu0 %v1216
    %v1400 = vpop.f32.mrb[0].mxu0
    %v1401 = vadd.f32 %v1360, %v1400
    %v1402 = vpop.f32.mrb[0].mxu0
    %v1403 = vadd.f32 %v1362, %v1402
    %v1404 = vpop.f32.mrb[0].mxu0
    %v1405 = vpop.f32.mrb[0].mxu0
    %1406 = vdwg.mxu0
    %1407 = vmatprep.subr.bf16.mxu0 %v875
    %1408 = vmatpush1.bf16.msra.mxu0 %v874
    %1409 = vmatprep.subr.bf16.mxu0 %v883
    %1410 = vmatpush1.bf16.msra.mxu0 %v882
    %1411 = vmatprep.subr.bf16.mxu0 %v891
    %1412 = vmatpush1.bf16.msra.mxu0 %v890
    %1413 = vmatprep.subr.bf16.mxu0 %v899
    %1414 = vmatpush1.bf16.msra.mxu0 %v898
    %1415 = vmatprep.subr.bf16.mxu0 %v907
    %1416 = vmatpush1.bf16.msra.mxu0 %v906
    %1417 = vmatprep.subr.bf16.mxu0 %v915
    %1418 = vmatpush1.bf16.msra.mxu0 %v914
    %1419 = vmatprep.subr.bf16.mxu0 %v923
    %1420 = vmatpush1.bf16.msra.mxu0 %v922
    %1421 = vmatprep.subr.bf16.mxu0 %v931
    %1422 = vmatpush1.bf16.msra.mxu0 %v930
    %1423 = vmatprep.subr.bf16.mxu0 %v939
    %1424 = vmatpush1.bf16.msra.mxu0 %v938
    %1425 = vmatprep.subr.bf16.mxu0 %v947
    %1426 = vmatpush1.bf16.msra.mxu0 %v946
    %1427 = vmatprep.subr.bf16.mxu0 %v955
    %1428 = vmatpush1.bf16.msra.mxu0 %v954
    %1429 = vmatprep.subr.bf16.mxu0 %v963
    %1430 = vmatpush1.bf16.msra.mxu0 %v962
    %1431 = vmatprep.subr.bf16.mxu0 %v971
    %1432 = vmatpush1.bf16.msra.mxu0 %v970
    %1433 = vmatprep.subr.bf16.mxu0 %v979
    %1434 = vmatpush1.bf16.msra.mxu0 %v978
    %1435 = vmatprep.subr.bf16.mxu0 %v987
    %1436 = vmatpush1.bf16.msra.mxu0 %v986
    %1437 = vmatprep.subr.bf16.mxu0 %v995
    %1438 = vmatpush1.bf16.msra.mxu0 %v994
    %1439 = vmatprep.mubr.bf16.mxu0 %v124
    %1440 = vmatmul.mubr.bf16.gmra.mrb[0].mxu0 %v123
    %v1441 = vpop.f32.mrb[0].mxu0
    %v1442 = vadd.f32 %v350, %v1441
    %v1443 = vpop.f32.mrb[0].mxu0
    %v1444 = vadd.f32 %v351, %v1443
    %v1445 = vpop.f32.mrb[0].mxu0
    %v1446 = vpop.f32.mrb[0].mxu0
    %1447 = vdwg.mxu0
    %1448 = vmatprep.subr.bf16.mxu0 %v1003
    %1449 = vmatpush1.bf16.msra.mxu0 %v1002
    %1450 = vmatprep.subr.bf16.mxu0 %v1011
    %1451 = vmatpush1.bf16.msra.mxu0 %v1010
    %1452 = vmatprep.subr.bf16.mxu0 %v1019
    %1453 = vmatpush1.bf16.msra.mxu0 %v1018
    %1454 = vmatprep.subr.bf16.mxu0 %v1027
    %1455 = vmatpush1.bf16.msra.mxu0 %v1026
    %1456 = vmatprep.subr.bf16.mxu0 %v1035
    %1457 = vmatpush1.bf16.msra.mxu0 %v1034
    %1458 = vmatprep.subr.bf16.mxu0 %v1235
    %1459 = vmatpush1.bf16.msra.mxu0 %v1232
    %1460 = vmatprep.subr.bf16.mxu0 0
    %1461 = vmatpush1.bf16.msra.mxu0 0
    %1462 = vmatprep.subr.bf16.mxu0 0
    %1463 = vmatpush1.bf16.msra.mxu0 0
    %1464 = vmatprep.subr.bf16.mxu0 0
    %1465 = vmatpush1.bf16.msra.mxu0 0
    %1466 = vmatprep.subr.bf16.mxu0 0
    %1467 = vmatpush1.bf16.msra.mxu0 0
    %1468 = vmatprep.subr.bf16.mxu0 0
    %1469 = vmatpush1.bf16.msra.mxu0 0
    %1470 = vmatprep.subr.bf16.mxu0 0
    %1471 = vmatpush1.bf16.msra.mxu0 0
    %1472 = vmatprep.subr.bf16.mxu0 0
    %1473 = vmatpush1.bf16.msra.mxu0 0
    %1474 = vmatprep.subr.bf16.mxu0 0
    %1475 = vmatpush1.bf16.msra.mxu0 0
    %1476 = vmatprep.subr.bf16.mxu0 0
    %1477 = vmatpush1.bf16.msra.mxu0 0
    %1478 = vmatprep.subr.bf16.mxu0 0
    %1479 = vmatpush1.bf16.msra.mxu0 0
    %1480 = vmatprep.mubr.bf16.mxu0 0
    %1481 = vmatmul.mubr.bf16.gmra.mrb[0].mxu0 %v1216
    %v1482 = vpop.f32.mrb[0].mxu0
    %v1483 = vadd.f32 %v1442, %v1482
    %v1484 = vpop.f32.mrb[0].mxu0
    %v1485 = vadd.f32 %v1444, %v1484
    %v1486 = vpop.f32.mrb[0].mxu0
    %v1487 = vpop.f32.mrb[0].mxu0
    %1488 = vdwg.mxu0
    %1489 = vmatprep.subr.bf16.mxu0 %v877
    %1490 = vmatpush1.bf16.msra.mxu0 %v876
    %1491 = vmatprep.subr.bf16.mxu0 %v885
    %1492 = vmatpush1.bf16.msra.mxu0 %v884
    %1493 = vmatprep.subr.bf16.mxu0 %v893
    %1494 = vmatpush1.bf16.msra.mxu0 %v892
    %1495 = vmatprep.subr.bf16.mxu0 %v901
    %1496 = vmatpush1.bf16.msra.mxu0 %v900
    %1497 = vmatprep.subr.bf16.mxu0 %v909
    %1498 = vmatpush1.bf16.msra.mxu0 %v908
    %1499 = vmatprep.subr.bf16.mxu0 %v917
    %1500 = vmatpush1.bf16.msra.mxu0 %v916
    %1501 = vmatprep.subr.bf16.mxu0 %v925
    %1502 = vmatpush1.bf16.msra.mxu0 %v924
    %1503 = vmatprep.subr.bf16.mxu0 %v933
    %1504 = vmatpush1.bf16.msra.mxu0 %v932
    %1505 = vmatprep.subr.bf16.mxu0 %v941
    %1506 = vmatpush1.bf16.msra.mxu0 %v940
    %1507 = vmatprep.subr.bf16.mxu0 %v949
    %1508 = vmatpush1.bf16.msra.mxu0 %v948
    %1509 = vmatprep.subr.bf16.mxu0 %v957
    %1510 = vmatpush1.bf16.msra.mxu0 %v956
    %1511 = vmatprep.subr.bf16.mxu0 %v965
    %1512 = vmatpush1.bf16.msra.mxu0 %v964
    %1513 = vmatprep.subr.bf16.mxu0 %v973
    %1514 = vmatpush1.bf16.msra.mxu0 %v972
    %1515 = vmatprep.subr.bf16.mxu0 %v981
    %1516 = vmatpush1.bf16.msra.mxu0 %v980
    %1517 = vmatprep.subr.bf16.mxu0 %v989
    %1518 = vmatpush1.bf16.msra.mxu0 %v988
    %1519 = vmatprep.subr.bf16.mxu0 %v997
    %1520 = vmatpush1.bf16.msra.mxu0 %v996
    %1521 = vmatprep.mubr.bf16.mxu0 %v124
    %1522 = vmatmul.mubr.bf16.gmra.mrb[0].mxu0 %v123
    %v1523 = vpop.f32.mrb[0].mxu0
    %v1524 = vadd.f32 %v352, %v1523
    %v1525 = vpop.f32.mrb[0].mxu0
    %v1526 = vadd.f32 %v353, %v1525
    %v1527 = vpop.f32.mrb[0].mxu0
    %v1528 = vpop.f32.mrb[0].mxu0
    %1529 = vdwg.mxu0
    %1530 = vmatprep.subr.bf16.mxu0 %v1005
    %1531 = vmatpush1.bf16.msra.mxu0 %v1004
    %1532 = vmatprep.subr.bf16.mxu0 %v1013
    %1533 = vmatpush1.bf16.msra.mxu0 %v1012
    %1534 = vmatprep.subr.bf16.mxu0 %v1021
    %1535 = vmatpush1.bf16.msra.mxu0 %v1020
    %1536 = vmatprep.subr.bf16.mxu0 %v1029
    %1537 = vmatpush1.bf16.msra.mxu0 %v1028
    %1538 = vmatprep.subr.bf16.mxu0 %v1037
    %1539 = vmatpush1.bf16.msra.mxu0 %v1036
    %1540 = vmatprep.subr.bf16.mxu0 %v1241
    %1541 = vmatpush1.bf16.msra.mxu0 %v1238
    %1542 = vmatprep.subr.bf16.mxu0 0
    %1543 = vmatpush1.bf16.msra.mxu0 0
    %1544 = vmatprep.subr.bf16.mxu0 0
    %1545 = vmatpush1.bf16.msra.mxu0 0
    %1546 = vmatprep.subr.bf16.mxu0 0
    %1547 = vmatpush1.bf16.msra.mxu0 0
    %1548 = vmatprep.subr.bf16.mxu0 0
    %1549 = vmatpush1.bf16.msra.mxu0 0
    %1550 = vmatprep.subr.bf16.mxu0 0
    %1551 = vmatpush1.bf16.msra.mxu0 0
    %1552 = vmatprep.subr.bf16.mxu0 0
    %1553 = vmatpush1.bf16.msra.mxu0 0
    %1554 = vmatprep.subr.bf16.mxu0 0
    %1555 = vmatpush1.bf16.msra.mxu0 0
    %1556 = vmatprep.subr.bf16.mxu0 0
    %1557 = vmatpush1.bf16.msra.mxu0 0
    %1558 = vmatprep.subr.bf16.mxu0 0
    %1559 = vmatpush1.bf16.msra.mxu0 0
    %1560 = vmatprep.subr.bf16.mxu0 0
    %1561 = vmatpush1.bf16.msra.mxu0 0
    %1562 = vmatprep.mubr.bf16.mxu0 0
    %1563 = vmatmul.mubr.bf16.gmra.mrb[0].mxu0 %v1216
    %v1564 = vpop.f32.mrb[0].mxu0
    %v1565 = vadd.f32 %v1524, %v1564
    %v1566 = vpop.f32.mrb[0].mxu0
    %v1567 = vadd.f32 %v1526, %v1566
    %v1568 = vpop.f32.mrb[0].mxu0
    %v1569 = vpop.f32.mrb[0].mxu0
    %1570 = vdwg.mxu0
    %v1571 = vld [vmem:[#allocation6] sm:$0xff]
    %v1573 = vlaneseq
    %v1574 = vshrl.u32 %v1573, 7
    %v1575 = vsub.s32 0, %v1574
    %v1576 = vrot.slane %v1571, %v1575
    %v1577 = vlaneseq
    %v1578 = vshrl.u32 %v1577, 7
    %v1579 = vsub.s32 1, %v1578
    %v1580 = vrot.slane %v1571, %v1579
    %v1581 = vlaneseq
    %v1582 = vshrl.u32 %v1581, 7
    %v1583 = vsub.s32 2, %v1582
    %v1584 = vrot.slane %v1571, %v1583
    %v1585 = vlaneseq
    %v1586 = vshrl.u32 %v1585, 7
    %v1587 = vsub.s32 3, %v1586
    %v1588 = vrot.slane %v1571, %v1587
    %v1589 = vlaneseq
    %v1590 = vshrl.u32 %v1589, 7
    %v1591 = vsub.s32 4, %v1590
    %v1592 = vrot.slane %v1571, %v1591
    %v1593 = vlaneseq
    %v1594 = vshrl.u32 %v1593, 7
    %v1595 = vsub.s32 5, %v1594
    %v1596 = vrot.slane %v1571, %v1595
    %v1597 = vlaneseq
    %v1598 = vshrl.u32 %v1597, 7
    %v1599 = vsub.s32 6, %v1598
    %v1600 = vrot.slane %v1571, %v1599
    %v1601 = vlaneseq
    %v1602 = vshrl.u32 %v1601, 7
    %v1603 = vsub.s32 7, %v1602
    %v1604 = vrot.slane %v1571, %v1603
    %v1613 = vadd.f32 %v1319, %v1576
    %v1614 = vadd.f32 %v1321, %v1580
    %v1615 = vadd.f32 %v1401, %v1584
    %v1616 = vadd.f32 %v1403, %v1588
    %v1617 = vadd.f32 %v1483, %v1592
    %v1618 = vadd.f32 %v1485, %v1596
    %v1619 = vadd.f32 %v1565, %v1600
    %v1620 = vadd.f32 %v1567, %v1604
    %v1621 = vmax.f32 %v1613, 0.0
    %v1622 = vmax.f32 %v1614, 0.0
    %v1623 = vmax.f32 %v1615, 0.0
    %v1624 = vmax.f32 %v1616, 0.0
    %v1625 = vmax.f32 %v1617, 0.0
    %v1626 = vmax.f32 %v1618, 0.0
    %v1627 = vmax.f32 %v1619, 0.0
    %v1628 = vmax.f32 %v1620, 0.0
    %v1629 = vpack.c.bf16 %v1621, %v1621
    %v1630 = vpack.c.bf16 %v1622, %v1622
    %v1631 = vpack.c.bf16 %v1623, %v1623
    %v1632 = vpack.c.bf16 %v1624, %v1624
    %v1633 = vpack.c.bf16 %v1625, %v1625
    %v1634 = vpack.c.bf16 %v1626, %v1626
    %v1635 = vpack.c.bf16 %v1627, %v1627
    %v1636 = vpack.c.bf16 %v1628, %v1628
    %v1637 = vld [vmem:[#allocation7] sm:$0xff]
    %v1638 = vld [vmem:[#allocation7 + $0x8] sm:$0xff]
    %v1639 = vld [vmem:[#allocation7 + $0x10] sm:$0xff]
    %v1640 = vld [vmem:[#allocation7 + $0x18] sm:$0xff]
    %v1641 = vld [vmem:[#allocation7 + $0x20] sm:$0xff]
    %v1642 = vld [vmem:[#allocation7 + $0x28] sm:$0xff]
    %v1643 = vld [vmem:[#allocation7 + $0x30] sm:$0xff]
    %v1644 = vld [vmem:[#allocation7 + $0x38] sm:$0xff]
    %v1645 = vld [vmem:[#allocation7 + $0x40] sm:$0xff]
    %v1646 = vld [vmem:[#allocation7 + $0x48] sm:$0xff]
    %v1647 = vld [vmem:[#allocation7 + $0x50] sm:$0xff]
    %v1648 = vld [vmem:[#allocation7 + $0x58] sm:$0xff]
    %v1649 = vld [vmem:[#allocation7 + $0x60] sm:$0xff]
    %v1650 = vld [vmem:[#allocation7 + $0x68] sm:$0xff]
    %v1651 = vld [vmem:[#allocation7 + $0x70] sm:$0xff]
    %v1652 = vld [vmem:[#allocation7 + $0x78] sm:$0xff]
    %v1653 = vld [vmem:[#allocation7 + $0x80] sm:$0xff]
    %v1654 = vld [vmem:[#allocation7 + $0x88] sm:$0xff]
    %v1655 = vld [vmem:[#allocation7 + $0x90] sm:$0xff]
    %v1656 = vld [vmem:[#allocation7 + $0x98] sm:$0xff]
    %v1657 = vld [vmem:[#allocation7 + $0xa0] sm:$0xff]
    %v1658 = vld [vmem:[#allocation7 + $0xa8] sm:$0xff]
    %v1659 = vld [vmem:[#allocation7 + $0xb0] sm:$0xff]
    %v1660 = vld [vmem:[#allocation7 + $0xb8] sm:$0xff]
    %v1661 = vld [vmem:[#allocation7 + $0xc0] sm:$0xff]
    %v1662 = vld [vmem:[#allocation7 + $0xc8] sm:$0xff]
    %v1663 = vld [vmem:[#allocation7 + $0xd0] sm:$0xff]
    %v1664 = vld [vmem:[#allocation7 + $0xd8] sm:$0xff]
    %v1665 = vld [vmem:[#allocation7 + $0xe0] sm:$0xff]
    %v1666 = vld [vmem:[#allocation7 + $0xe8] sm:$0xff]
    %v1667 = vld [vmem:[#allocation7 + $0xf0] sm:$0xff]
    %v1668 = vld [vmem:[#allocation7 + $0xf8] sm:$0xff]
    %v1669 = vld [vmem:[#allocation7 + $0x100] sm:$0xff]
    %v1670 = vld [vmem:[#allocation7 + $0x108] sm:$0xff]
    %v1671 = vld [vmem:[#allocation7 + $0x110] sm:$0xff]
    %v1672 = vld [vmem:[#allocation7 + $0x118] sm:$0xff]
    %v1673 = vld [vmem:[#allocation7 + $0x120] sm:$0xff]
    %v1674 = vld [vmem:[#allocation7 + $0x128] sm:$0xff]
    %v1675 = vld [vmem:[#allocation7 + $0x130] sm:$0xff]
    %v1676 = vld [vmem:[#allocation7 + $0x138] sm:$0xff]
    %v1677 = vld [vmem:[#allocation7 + $0x140] sm:$0xff]
    %v1678 = vld [vmem:[#allocation7 + $0x148] sm:$0xff]
    %v1679 = vld [vmem:[#allocation7 + $0x150] sm:$0xff]
    %v1680 = vld [vmem:[#allocation7 + $0x158] sm:$0xff]
    %v1681 = vld [vmem:[#allocation7 + $0x160] sm:$0xff]
    %v1682 = vld [vmem:[#allocation7 + $0x168] sm:$0xff]
    %v1683 = vld [vmem:[#allocation7 + $0x170] sm:$0xff]
    %v1684 = vld [vmem:[#allocation7 + $0x178] sm:$0xff]
    %v1685 = vld [vmem:[#allocation7 + $0x180] sm:$0xff]
    %v1686 = vld [vmem:[#allocation7 + $0x188] sm:$0xff]
    %v1687 = vld [vmem:[#allocation7 + $0x190] sm:$0xff]
    %v1688 = vld [vmem:[#allocation7 + $0x198] sm:$0xff]
    %v1689 = vld [vmem:[#allocation7 + $0x1a0] sm:$0xff]
    %v1690 = vld [vmem:[#allocation7 + $0x1a8] sm:$0xff]
    %v1691 = vld [vmem:[#allocation7 + $0x1b0] sm:$0xff]
    %v1692 = vld [vmem:[#allocation7 + $0x1b8] sm:$0xff]
    %v1693 = vld [vmem:[#allocation7 + $0x1c0] sm:$0xff]
    %v1694 = vld [vmem:[#allocation7 + $0x1c8] sm:$0xff]
    %v1695 = vld [vmem:[#allocation7 + $0x1d0] sm:$0xff]
    %v1696 = vld [vmem:[#allocation7 + $0x1d8] sm:$0xff]
    %v1697 = vld [vmem:[#allocation7 + $0x1e0] sm:$0xff]
    %v1698 = vld [vmem:[#allocation7 + $0x1e8] sm:$0xff]
    %v1699 = vld [vmem:[#allocation7 + $0x1f0] sm:$0xff]
    %v1700 = vld [vmem:[#allocation7 + $0x1f8] sm:$0xff]
    %v1701 = vld [vmem:[#allocation7 + $0x200] sm:$0xff]
    %v1702 = vld [vmem:[#allocation7 + $0x208] sm:$0xff]
    %v1703 = vld [vmem:[#allocation7 + $0x210] sm:$0xff]
    %v1704 = vld [vmem:[#allocation7 + $0x218] sm:$0xff]
    %v1705 = vld [vmem:[#allocation7 + $0x220] sm:$0xff]
    %v1706 = vld [vmem:[#allocation7 + $0x228] sm:$0xff]
    %v1707 = vld [vmem:[#allocation7 + $0x230] sm:$0xff]
    %v1708 = vld [vmem:[#allocation7 + $0x238] sm:$0xff]
    %v1709 = vld [vmem:[#allocation7 + $0x240] sm:$0xff]
    %v1710 = vld [vmem:[#allocation7 + $0x248] sm:$0xff]
    %v1711 = vld [vmem:[#allocation7 + $0x250] sm:$0xff]
    %v1712 = vld [vmem:[#allocation7 + $0x258] sm:$0xff]
    %v1713 = vld [vmem:[#allocation7 + $0x260] sm:$0xff]
    %v1714 = vld [vmem:[#allocation7 + $0x268] sm:$0xff]
    %v1715 = vld [vmem:[#allocation7 + $0x270] sm:$0xff]
    %v1716 = vld [vmem:[#allocation7 + $0x278] sm:$0xff]
    %v1717 = vld [vmem:[#allocation7 + $0x280] sm:$0xff]
    %v1718 = vld [vmem:[#allocation7 + $0x288] sm:$0xff]
    %v1719 = vld [vmem:[#allocation7 + $0x290] sm:$0xff]
    %v1720 = vld [vmem:[#allocation7 + $0x298] sm:$0xff]
    %v1721 = vld [vmem:[#allocation7 + $0x2a0] sm:$0xff]
    %v1722 = vld [vmem:[#allocation7 + $0x2a8] sm:$0xff]
    %v1723 = vld [vmem:[#allocation7 + $0x2b0] sm:$0xff]
    %v1724 = vld [vmem:[#allocation7 + $0x2b8] sm:$0xff]
    %v1725 = vld [vmem:[#allocation7 + $0x2c0] sm:$0xff]
    %v1726 = vld [vmem:[#allocation7 + $0x2c8] sm:$0xff]
    %v1727 = vld [vmem:[#allocation7 + $0x2d0] sm:$0xff]
    %v1728 = vld [vmem:[#allocation7 + $0x2d8] sm:$0xff]
    %v1729 = vld [vmem:[#allocation7 + $0x2e0] sm:$0xff]
    %v1730 = vld [vmem:[#allocation7 + $0x2e8] sm:$0xff]
    %v1731 = vld [vmem:[#allocation7 + $0x2f0] sm:$0xff]
    %v1732 = vld [vmem:[#allocation7 + $0x2f8] sm:$0xff]
    %v1733 = vld [vmem:[#allocation7 + $0x300] sm:$0xff]
    %v1734 = vld [vmem:[#allocation7 + $0x308] sm:$0xff]
    %v1735 = vld [vmem:[#allocation7 + $0x310] sm:$0xff]
    %v1736 = vld [vmem:[#allocation7 + $0x318] sm:$0xff]
    %v1737 = vld [vmem:[#allocation7 + $0x320] sm:$0xff]
    %v1738 = vld [vmem:[#allocation7 + $0x328] sm:$0xff]
    %v1739 = vld [vmem:[#allocation7 + $0x330] sm:$0xff]
    %v1740 = vld [vmem:[#allocation7 + $0x338] sm:$0xff]
    %v1741 = vld [vmem:[#allocation7 + $0x340] sm:$0xff]
    %v1742 = vld [vmem:[#allocation7 + $0x348] sm:$0xff]
    %v1743 = vld [vmem:[#allocation7 + $0x350] sm:$0xff]
    %v1744 = vld [vmem:[#allocation7 + $0x358] sm:$0xff]
    %v1745 = vld [vmem:[#allocation7 + $0x360] sm:$0xff]
    %v1746 = vld [vmem:[#allocation7 + $0x368] sm:$0xff]
    %v1747 = vld [vmem:[#allocation7 + $0x370] sm:$0xff]
    %v1748 = vld [vmem:[#allocation7 + $0x378] sm:$0xff]
    %v1749 = vld [vmem:[#allocation7 + $0x380] sm:$0xff]
    %v1750 = vld [vmem:[#allocation7 + $0x388] sm:$0xff]
    %v1751 = vld [vmem:[#allocation7 + $0x390] sm:$0xff]
    %v1752 = vld [vmem:[#allocation7 + $0x398] sm:$0xff]
    %v1753 = vld [vmem:[#allocation7 + $0x3a0] sm:$0xff]
    %v1754 = vld [vmem:[#allocation7 + $0x3a8] sm:$0xff]
    %v1755 = vld [vmem:[#allocation7 + $0x3b0] sm:$0xff]
    %v1756 = vld [vmem:[#allocation7 + $0x3b8] sm:$0xff]
    %v1757 = vld [vmem:[#allocation7 + $0x3c0] sm:$0xff]
    %v1758 = vld [vmem:[#allocation7 + $0x3c8] sm:$0xff]
    %v1759 = vld [vmem:[#allocation7 + $0x3d0] sm:$0xff]
    %v1760 = vld [vmem:[#allocation7 + $0x3d8] sm:$0xff]
    %v1761 = vld [vmem:[#allocation7 + $0x3e0] sm:$0xff]
    %v1762 = vld [vmem:[#allocation7 + $0x3e8] sm:$0xff]
    %v1763 = vld [vmem:[#allocation7 + $0x3f0] sm:$0xff]
    %v1764 = vld [vmem:[#allocation7 + $0x3f8] sm:$0xff]
    %v1765 = vld [vmem:[#allocation7 + $0x400] sm:$0xff]
    %v1766 = vld [vmem:[#allocation7 + $0x408] sm:$0xff]
    %v1767 = vld [vmem:[#allocation7 + $0x410] sm:$0xff]
    %v1768 = vld [vmem:[#allocation7 + $0x418] sm:$0xff]
    %v1769 = vld [vmem:[#allocation7 + $0x420] sm:$0xff]
    %v1770 = vld [vmem:[#allocation7 + $0x428] sm:$0xff]
    %v1771 = vld [vmem:[#allocation7 + $0x430] sm:$0xff]
    %v1772 = vld [vmem:[#allocation7 + $0x438] sm:$0xff]
    %v1773 = vld [vmem:[#allocation7 + $0x440] sm:$0xff]
    %v1774 = vld [vmem:[#allocation7 + $0x448] sm:$0xff]
    %v1775 = vld [vmem:[#allocation7 + $0x450] sm:$0xff]
    %v1776 = vld [vmem:[#allocation7 + $0x458] sm:$0xff]
    %v1777 = vld [vmem:[#allocation7 + $0x460] sm:$0xff]
    %v1778 = vld [vmem:[#allocation7 + $0x468] sm:$0xff]
    %v1779 = vld [vmem:[#allocation7 + $0x470] sm:$0xff]
    %v1780 = vld [vmem:[#allocation7 + $0x478] sm:$0xff]
    %v1781 = vld [vmem:[#allocation7 + $0x480] sm:$0xff]
    %v1782 = vld [vmem:[#allocation7 + $0x488] sm:$0xff]
    %v1783 = vld [vmem:[#allocation7 + $0x490] sm:$0xff]
    %v1784 = vld [vmem:[#allocation7 + $0x498] sm:$0xff]
    %v1785 = vld [vmem:[#allocation7 + $0x4a0] sm:$0xff]
    %v1786 = vld [vmem:[#allocation7 + $0x4a8] sm:$0xff]
    %v1787 = vld [vmem:[#allocation7 + $0x4b0] sm:$0xff]
    %v1788 = vld [vmem:[#allocation7 + $0x4b8] sm:$0xff]
    %v1789 = vld [vmem:[#allocation7 + $0x4c0] sm:$0xff]
    %v1790 = vld [vmem:[#allocation7 + $0x4c8] sm:$0xff]
    %v1791 = vld [vmem:[#allocation7 + $0x4d0] sm:$0xff]
    %v1792 = vld [vmem:[#allocation7 + $0x4d8] sm:$0xff]
    %v1793 = vld [vmem:[#allocation7 + $0x4e0] sm:$0xff]
    %v1794 = vld [vmem:[#allocation7 + $0x4e8] sm:$0xff]
    %v1795 = vld [vmem:[#allocation7 + $0x4f0] sm:$0xff]
    %v1796 = vld [vmem:[#allocation7 + $0x4f8] sm:$0xff]
    %v1797 = vld [vmem:[#allocation7 + $0x500] sm:$0xff]
    %v1798 = vld [vmem:[#allocation7 + $0x508] sm:$0xff]
    %v1799 = vld [vmem:[#allocation7 + $0x510] sm:$0xff]
    %v1800 = vld [vmem:[#allocation7 + $0x518] sm:$0xff]
    %v1801 = vld [vmem:[#allocation7 + $0x520] sm:$0xff]
    %v1802 = vld [vmem:[#allocation7 + $0x528] sm:$0xff]
    %v1803 = vld [vmem:[#allocation7 + $0x530] sm:$0xff]
    %v1804 = vld [vmem:[#allocation7 + $0x538] sm:$0xff]
    %v1805 = vld [vmem:[#allocation7 + $0x540] sm:$0xff]
    %v1806 = vld [vmem:[#allocation7 + $0x548] sm:$0xff]
    %v1807 = vld [vmem:[#allocation7 + $0x550] sm:$0xff]
    %v1808 = vld [vmem:[#allocation7 + $0x558] sm:$0xff]
    %v1809 = vld [vmem:[#allocation7 + $0x560] sm:$0xff]
    %v1810 = vld [vmem:[#allocation7 + $0x568] sm:$0xff]
    %v1811 = vld [vmem:[#allocation7 + $0x570] sm:$0xff]
    %v1812 = vld [vmem:[#allocation7 + $0x578] sm:$0xff]
    %v1813 = vld [vmem:[#allocation7 + $0x580] sm:$0xff]
    %v1814 = vld [vmem:[#allocation7 + $0x588] sm:$0xff]
    %v1815 = vld [vmem:[#allocation7 + $0x590] sm:$0xff]
    %v1816 = vld [vmem:[#allocation7 + $0x598] sm:$0xff]
    %v1817 = vld [vmem:[#allocation7 + $0x5a0] sm:$0xff]
    %v1818 = vld [vmem:[#allocation7 + $0x5a8] sm:$0xff]
    %v1819 = vld [vmem:[#allocation7 + $0x5b0] sm:$0xff]
    %v1820 = vld [vmem:[#allocation7 + $0x5b8] sm:$0xff]
    %v1821 = vld [vmem:[#allocation7 + $0x5c0] sm:$0xff]
    %v1822 = vld [vmem:[#allocation7 + $0x5c8] sm:$0xff]
    %v1823 = vld [vmem:[#allocation7 + $0x5d0] sm:$0xff]
    %v1824 = vld [vmem:[#allocation7 + $0x5d8] sm:$0xff]
    %v1825 = vld [vmem:[#allocation7 + $0x5e0] sm:$0xff]
    %v1826 = vld [vmem:[#allocation7 + $0x5e8] sm:$0xff]
    %v1827 = vld [vmem:[#allocation7 + $0x5f0] sm:$0xff]
    %v1828 = vld [vmem:[#allocation7 + $0x5f8] sm:$0xff]
    %v1829 = vld [vmem:[#allocation7 + $0x600] sm:$0xff]
    %v1830 = vld [vmem:[#allocation7 + $0x608] sm:$0xff]
    %v1831 = vld [vmem:[#allocation7 + $0x610] sm:$0xff]
    %v1832 = vld [vmem:[#allocation7 + $0x618] sm:$0xff]
    %v1833 = vld [vmem:[#allocation7 + $0x620] sm:$0xff]
    %v1834 = vld [vmem:[#allocation7 + $0x628] sm:$0xff]
    %v1835 = vld [vmem:[#allocation7 + $0x630] sm:$0xff]
    %v1836 = vld [vmem:[#allocation7 + $0x638] sm:$0xff]
    %v1837 = vld [vmem:[#allocation7 + $0x640] sm:$0xff]
    %v1838 = vld [vmem:[#allocation7 + $0x648] sm:$0xff]
    %v1839 = vld [vmem:[#allocation7 + $0x650] sm:$0xff]
    %v1840 = vld [vmem:[#allocation7 + $0x658] sm:$0xff]
    %v1841 = vld [vmem:[#allocation7 + $0x660] sm:$0xff]
    %v1842 = vld [vmem:[#allocation7 + $0x668] sm:$0xff]
    %v1843 = vld [vmem:[#allocation7 + $0x670] sm:$0xff]
    %v1844 = vld [vmem:[#allocation7 + $0x678] sm:$0xff]
    %v1845 = vld [vmem:[#allocation7 + $0x680] sm:$0xff]
    %v1846 = vld [vmem:[#allocation7 + $0x688] sm:$0xff]
    %v1847 = vld [vmem:[#allocation7 + $0x690] sm:$0xff]
    %v1848 = vld [vmem:[#allocation7 + $0x698] sm:$0xff]
    %v1849 = vld [vmem:[#allocation7 + $0x6a0] sm:$0xff]
    %v1850 = vld [vmem:[#allocation7 + $0x6a8] sm:$0xff]
    %v1851 = vld [vmem:[#allocation7 + $0x6b0] sm:$0xff]
    %v1852 = vld [vmem:[#allocation7 + $0x6b8] sm:$0xff]
    %v1853 = vld [vmem:[#allocation7 + $0x6c0] sm:$0xff]
    %v1854 = vld [vmem:[#allocation7 + $0x6c8] sm:$0xff]
    %v1855 = vld [vmem:[#allocation7 + $0x6d0] sm:$0xff]
    %v1856 = vld [vmem:[#allocation7 + $0x6d8] sm:$0xff]
    %v1857 = vld [vmem:[#allocation7 + $0x6e0] sm:$0xff]
    %v1858 = vld [vmem:[#allocation7 + $0x6e8] sm:$0xff]
    %v1859 = vld [vmem:[#allocation7 + $0x6f0] sm:$0xff]
    %v1860 = vld [vmem:[#allocation7 + $0x6f8] sm:$0xff]
    %v1861 = vld [vmem:[#allocation7 + $0x700] sm:$0xff]
    %v1862 = vld [vmem:[#allocation7 + $0x708] sm:$0xff]
    %v1863 = vld [vmem:[#allocation7 + $0x710] sm:$0xff]
    %v1864 = vld [vmem:[#allocation7 + $0x718] sm:$0xff]
    %v1865 = vld [vmem:[#allocation7 + $0x720] sm:$0xff]
    %v1866 = vld [vmem:[#allocation7 + $0x728] sm:$0xff]
    %v1867 = vld [vmem:[#allocation7 + $0x730] sm:$0xff]
    %v1868 = vld [vmem:[#allocation7 + $0x738] sm:$0xff]
    %v1869 = vld [vmem:[#allocation7 + $0x740] sm:$0xff]
    %v1870 = vld [vmem:[#allocation7 + $0x748] sm:$0xff]
    %v1871 = vld [vmem:[#allocation7 + $0x750] sm:$0xff]
    %v1872 = vld [vmem:[#allocation7 + $0x758] sm:$0xff]
    %v1873 = vld [vmem:[#allocation7 + $0x760] sm:$0xff]
    %v1874 = vld [vmem:[#allocation7 + $0x768] sm:$0xff]
    %v1875 = vld [vmem:[#allocation7 + $0x770] sm:$0xff]
    %v1876 = vld [vmem:[#allocation7 + $0x778] sm:$0xff]
    %v1877 = vld [vmem:[#allocation7 + $0x780] sm:$0xff]
    %v1878 = vld [vmem:[#allocation7 + $0x788] sm:$0xff]
    %v1879 = vld [vmem:[#allocation7 + $0x790] sm:$0xff]
    %v1880 = vld [vmem:[#allocation7 + $0x798] sm:$0xff]
    %v1881 = vld [vmem:[#allocation7 + $0x7a0] sm:$0xff]
    %v1882 = vld [vmem:[#allocation7 + $0x7a8] sm:$0xff]
    %v1883 = vld [vmem:[#allocation7 + $0x7b0] sm:$0xff]
    %v1884 = vld [vmem:[#allocation7 + $0x7b8] sm:$0xff]
    %v1885 = vld [vmem:[#allocation7 + $0x7c0] sm:$0xff]
    %v1886 = vld [vmem:[#allocation7 + $0x7c8] sm:$0xff]
    %v1887 = vld [vmem:[#allocation7 + $0x7d0] sm:$0xff]
    %v1888 = vld [vmem:[#allocation7 + $0x7d8] sm:$0xff]
    %v1889 = vld [vmem:[#allocation7 + $0x7e0] sm:$0xff]
    %v1890 = vld [vmem:[#allocation7 + $0x7e8] sm:$0xff]
    %v1891 = vld [vmem:[#allocation7 + $0x7f0] sm:$0xff]
    %v1892 = vld [vmem:[#allocation7 + $0x7f8] sm:$0xff]
    %v1893 = vld [vmem:[#allocation7 + $0x800] sm:$0xff]
    %v1894 = vld [vmem:[#allocation7 + $0x808] sm:$0xff]
    %v1895 = vld [vmem:[#allocation7 + $0x810] sm:$0xff]
    %v1896 = vld [vmem:[#allocation7 + $0x818] sm:$0xff]
    %v1897 = vld [vmem:[#allocation7 + $0x820] sm:$0xff]
    %v1898 = vld [vmem:[#allocation7 + $0x828] sm:$0xff]
    %v1899 = vld [vmem:[#allocation7 + $0x830] sm:$0xff]
    %v1900 = vld [vmem:[#allocation7 + $0x838] sm:$0xff]
    %v1901 = vld [vmem:[#allocation7 + $0x840] sm:$0xff]
    %v1902 = vld [vmem:[#allocation7 + $0x848] sm:$0xff]
    %v1903 = vld [vmem:[#allocation7 + $0x850] sm:$0xff]
    %v1904 = vld [vmem:[#allocation7 + $0x858] sm:$0xff]
    %v1905 = vld [vmem:[#allocation7 + $0x860] sm:$0xff]
    %v1906 = vld [vmem:[#allocation7 + $0x868] sm:$0xff]
    %v1907 = vld [vmem:[#allocation7 + $0x870] sm:$0xff]
    %v1908 = vld [vmem:[#allocation7 + $0x878] sm:$0xff]
    %v1909 = vld [vmem:[#allocation7 + $0x880] sm:$0xff]
    %v1910 = vld [vmem:[#allocation7 + $0x888] sm:$0xff]
    %v1911 = vld [vmem:[#allocation7 + $0x890] sm:$0xff]
    %v1912 = vld [vmem:[#allocation7 + $0x898] sm:$0xff]
    %v1913 = vld [vmem:[#allocation7 + $0x8a0] sm:$0xff]
    %v1914 = vld [vmem:[#allocation7 + $0x8a8] sm:$0xff]
    %v1915 = vld [vmem:[#allocation7 + $0x8b0] sm:$0xff]
    %v1916 = vld [vmem:[#allocation7 + $0x8b8] sm:$0xff]
    %v1917 = vld [vmem:[#allocation7 + $0x8c0] sm:$0xff]
    %v1918 = vld [vmem:[#allocation7 + $0x8c8] sm:$0xff]
    %v1919 = vld [vmem:[#allocation7 + $0x8d0] sm:$0xff]
    %v1920 = vld [vmem:[#allocation7 + $0x8d8] sm:$0xff]
    %v1921 = vld [vmem:[#allocation7 + $0x8e0] sm:$0xff]
    %v1922 = vld [vmem:[#allocation7 + $0x8e8] sm:$0xff]
    %v1923 = vld [vmem:[#allocation7 + $0x8f0] sm:$0xff]
    %v1924 = vld [vmem:[#allocation7 + $0x8f8] sm:$0xff]
    %v1925 = vld [vmem:[#allocation7 + $0x900] sm:$0xff]
    %v1926 = vld [vmem:[#allocation7 + $0x908] sm:$0xff]
    %v1927 = vld [vmem:[#allocation7 + $0x910] sm:$0xff]
    %v1928 = vld [vmem:[#allocation7 + $0x918] sm:$0xff]
    %v1929 = vld [vmem:[#allocation7 + $0x920] sm:$0xff]
    %v1930 = vld [vmem:[#allocation7 + $0x928] sm:$0xff]
    %v1931 = vld [vmem:[#allocation7 + $0x930] sm:$0xff]
    %v1932 = vld [vmem:[#allocation7 + $0x938] sm:$0xff]
    %v1933 = vld [vmem:[#allocation7 + $0x940] sm:$0xff]
    %v1934 = vld [vmem:[#allocation7 + $0x948] sm:$0xff]
    %v1935 = vld [vmem:[#allocation7 + $0x950] sm:$0xff]
    %v1936 = vld [vmem:[#allocation7 + $0x958] sm:$0xff]
    %v1937 = vld [vmem:[#allocation7 + $0x960] sm:$0xff]
    %v1938 = vld [vmem:[#allocation7 + $0x968] sm:$0xff]
    %v1939 = vld [vmem:[#allocation7 + $0x970] sm:$0xff]
    %v1940 = vld [vmem:[#allocation7 + $0x978] sm:$0xff]
    %v1941 = vld [vmem:[#allocation7 + $0x980] sm:$0xff]
    %v1942 = vld [vmem:[#allocation7 + $0x988] sm:$0xff]
    %v1943 = vld [vmem:[#allocation7 + $0x990] sm:$0xff]
    %v1944 = vld [vmem:[#allocation7 + $0x998] sm:$0xff]
    %v1945 = vld [vmem:[#allocation7 + $0x9a0] sm:$0xff]
    %v1946 = vld [vmem:[#allocation7 + $0x9a8] sm:$0xff]
    %v1947 = vld [vmem:[#allocation7 + $0x9b0] sm:$0xff]
    %v1948 = vld [vmem:[#allocation7 + $0x9b8] sm:$0xff]
    %v1949 = vld [vmem:[#allocation7 + $0x9c0] sm:$0xff]
    %v1950 = vld [vmem:[#allocation7 + $0x9c8] sm:$0xff]
    %v1951 = vld [vmem:[#allocation7 + $0x9d0] sm:$0xff]
    %v1952 = vld [vmem:[#allocation7 + $0x9d8] sm:$0xff]
    %v1953 = vld [vmem:[#allocation7 + $0x9e0] sm:$0xff]
    %v1954 = vld [vmem:[#allocation7 + $0x9e8] sm:$0xff]
    %v1955 = vld [vmem:[#allocation7 + $0x9f0] sm:$0xff]
    %v1956 = vld [vmem:[#allocation7 + $0x9f8] sm:$0xff]
    %v1957 = vld [vmem:[#allocation7 + $0xa00] sm:$0xff]
    %v1958 = vld [vmem:[#allocation7 + $0xa08] sm:$0xff]
    %v1959 = vld [vmem:[#allocation7 + $0xa10] sm:$0xff]
    %v1960 = vld [vmem:[#allocation7 + $0xa18] sm:$0xff]
    %v1961 = vld [vmem:[#allocation7 + $0xa20] sm:$0xff]
    %v1962 = vld [vmem:[#allocation7 + $0xa28] sm:$0xff]
    %v1963 = vld [vmem:[#allocation7 + $0xa30] sm:$0xff]
    %v1964 = vld [vmem:[#allocation7 + $0xa38] sm:$0xff]
    %v1965 = vld [vmem:[#allocation7 + $0xa40] sm:$0xff]
    %v1966 = vld [vmem:[#allocation7 + $0xa48] sm:$0xff]
    %v1967 = vld [vmem:[#allocation7 + $0xa50] sm:$0xff]
    %v1968 = vld [vmem:[#allocation7 + $0xa58] sm:$0xff]
    %v1969 = vld [vmem:[#allocation7 + $0xa60] sm:$0xff]
    %v1970 = vld [vmem:[#allocation7 + $0xa68] sm:$0xff]
    %v1971 = vld [vmem:[#allocation7 + $0xa70] sm:$0xff]
    %v1972 = vld [vmem:[#allocation7 + $0xa78] sm:$0xff]
    %v1973 = vld [vmem:[#allocation7 + $0xa80] sm:$0xff]
    %v1974 = vld [vmem:[#allocation7 + $0xa88] sm:$0xff]
    %v1975 = vld [vmem:[#allocation7 + $0xa90] sm:$0xff]
    %v1976 = vld [vmem:[#allocation7 + $0xa98] sm:$0xff]
    %v1977 = vld [vmem:[#allocation7 + $0xaa0] sm:$0xff]
    %v1978 = vld [vmem:[#allocation7 + $0xaa8] sm:$0xff]
    %v1979 = vld [vmem:[#allocation7 + $0xab0] sm:$0xff]
    %v1980 = vld [vmem:[#allocation7 + $0xab8] sm:$0xff]
    %v1981 = vld [vmem:[#allocation7 + $0xac0] sm:$0xff]
    %v1982 = vld [vmem:[#allocation7 + $0xac8] sm:$0xff]
    %v1983 = vld [vmem:[#allocation7 + $0xad0] sm:$0xff]
    %v1984 = vld [vmem:[#allocation7 + $0xad8] sm:$0xff]
    %v1985 = vld [vmem:[#allocation7 + $0xae0] sm:$0xff]
    %v1986 = vld [vmem:[#allocation7 + $0xae8] sm:$0xff]
    %v1987 = vld [vmem:[#allocation7 + $0xaf0] sm:$0xff]
    %v1988 = vld [vmem:[#allocation7 + $0xaf8] sm:$0xff]
    %v1989 = vld [vmem:[#allocation7 + $0xb00] sm:$0xff]
    %v1990 = vld [vmem:[#allocation7 + $0xb08] sm:$0xff]
    %v1991 = vld [vmem:[#allocation7 + $0xb10] sm:$0xff]
    %v1992 = vld [vmem:[#allocation7 + $0xb18] sm:$0xff]
    %v1993 = vld [vmem:[#allocation7 + $0xb20] sm:$0xff]
    %v1994 = vld [vmem:[#allocation7 + $0xb28] sm:$0xff]
    %v1995 = vld [vmem:[#allocation7 + $0xb30] sm:$0xff]
    %v1996 = vld [vmem:[#allocation7 + $0xb38] sm:$0xff]
    %v1997 = vld [vmem:[#allocation7 + $0xb40] sm:$0xff]
    %v1998 = vld [vmem:[#allocation7 + $0xb48] sm:$0xff]
    %v1999 = vld [vmem:[#allocation7 + $0xb50] sm:$0xff]
    %v2000 = vld [vmem:[#allocation7 + $0xb58] sm:$0xff]
    %v2001 = vld [vmem:[#allocation7 + $0xb60] sm:$0xff]
    %v2002 = vld [vmem:[#allocation7 + $0xb68] sm:$0xff]
    %v2003 = vld [vmem:[#allocation7 + $0xb70] sm:$0xff]
    %v2004 = vld [vmem:[#allocation7 + $0xb78] sm:$0xff]
    %v2005 = vld [vmem:[#allocation7 + $0xb80] sm:$0xff]
    %v2006 = vld [vmem:[#allocation7 + $0xb88] sm:$0xff]
    %v2007 = vld [vmem:[#allocation7 + $0xb90] sm:$0xff]
    %v2008 = vld [vmem:[#allocation7 + $0xb98] sm:$0xff]
    %v2009 = vld [vmem:[#allocation7 + $0xba0] sm:$0xff]
    %v2010 = vld [vmem:[#allocation7 + $0xba8] sm:$0xff]
    %v2011 = vld [vmem:[#allocation7 + $0xbb0] sm:$0xff]
    %v2012 = vld [vmem:[#allocation7 + $0xbb8] sm:$0xff]
    %v2013 = vld [vmem:[#allocation7 + $0xbc0] sm:$0xff]
    %v2014 = vld [vmem:[#allocation7 + $0xbc8] sm:$0xff]
    %v2015 = vld [vmem:[#allocation7 + $0xbd0] sm:$0xff]
    %v2016 = vld [vmem:[#allocation7 + $0xbd8] sm:$0xff]
    %v2017 = vld [vmem:[#allocation7 + $0xbe0] sm:$0xff]
    %v2018 = vld [vmem:[#allocation7 + $0xbe8] sm:$0xff]
    %v2019 = vld [vmem:[#allocation7 + $0xbf0] sm:$0xff]
    %v2020 = vld [vmem:[#allocation7 + $0xbf8] sm:$0xff]
    %v2021 = vld [vmem:[#allocation7 + $0xc00] sm:$0xff]
    %v2022 = vld [vmem:[#allocation7 + $0xc08] sm:$0xff]
    %v2023 = vld [vmem:[#allocation7 + $0xc10] sm:$0xff]
    %v2024 = vld [vmem:[#allocation7 + $0xc18] sm:$0xff]
    %v2025 = vld [vmem:[#allocation7 + $0xc20] sm:$0xff]
    %v2026 = vld [vmem:[#allocation7 + $0xc28] sm:$0xff]
    %v2027 = vld [vmem:[#allocation7 + $0xc30] sm:$0xff]
    %v2028 = vld [vmem:[#allocation7 + $0xc38] sm:$0xff]
    %v2029 = vld [vmem:[#allocation7 + $0xc40] sm:$0xff]
    %v2030 = vld [vmem:[#allocation7 + $0xc48] sm:$0xff]
    %v2031 = vld [vmem:[#allocation7 + $0xc50] sm:$0xff]
    %v2032 = vld [vmem:[#allocation7 + $0xc58] sm:$0xff]
    %v2033 = vld [vmem:[#allocation7 + $0xc60] sm:$0xff]
    %v2034 = vld [vmem:[#allocation7 + $0xc68] sm:$0xff]
    %v2035 = vld [vmem:[#allocation7 + $0xc70] sm:$0xff]
    %v2036 = vld [vmem:[#allocation7 + $0xc78] sm:$0xff]
    %v2037 = vld [vmem:[#allocation7 + $0xc80] sm:$0xff]
    %v2038 = vld [vmem:[#allocation7 + $0xc88] sm:$0xff]
    %v2039 = vld [vmem:[#allocation7 + $0xc90] sm:$0xff]
    %v2040 = vld [vmem:[#allocation7 + $0xc98] sm:$0xff]
    %v2041 = vld [vmem:[#allocation7 + $0xca0] sm:$0xff]
    %v2042 = vld [vmem:[#allocation7 + $0xca8] sm:$0xff]
    %v2043 = vld [vmem:[#allocation7 + $0xcb0] sm:$0xff]
    %v2044 = vld [vmem:[#allocation7 + $0xcb8] sm:$0xff]
    %v2045 = vld [vmem:[#allocation7 + $0xcc0] sm:$0xff]
    %v2046 = vld [vmem:[#allocation7 + $0xcc8] sm:$0xff]
    %v2047 = vld [vmem:[#allocation7 + $0xcd0] sm:$0xff]
    %v2048 = vld [vmem:[#allocation7 + $0xcd8] sm:$0xff]
    %v2049 = vld [vmem:[#allocation7 + $0xce0] sm:$0xff]
    %v2050 = vld [vmem:[#allocation7 + $0xce8] sm:$0xff]
    %v2051 = vld [vmem:[#allocation7 + $0xcf0] sm:$0xff]
    %v2052 = vld [vmem:[#allocation7 + $0xcf8] sm:$0xff]
    %v2053 = vld [vmem:[#allocation7 + $0xd00] sm:$0xff]
    %v2054 = vld [vmem:[#allocation7 + $0xd08] sm:$0xff]
    %v2055 = vld [vmem:[#allocation7 + $0xd10] sm:$0xff]
    %v2056 = vld [vmem:[#allocation7 + $0xd18] sm:$0xff]
    %v2057 = vld [vmem:[#allocation7 + $0xd20] sm:$0xff]
    %v2058 = vld [vmem:[#allocation7 + $0xd28] sm:$0xff]
    %v2059 = vld [vmem:[#allocation7 + $0xd30] sm:$0xff]
    %v2060 = vld [vmem:[#allocation7 + $0xd38] sm:$0xff]
    %v2061 = vld [vmem:[#allocation7 + $0xd40] sm:$0xff]
    %v2062 = vld [vmem:[#allocation7 + $0xd48] sm:$0xff]
    %v2063 = vld [vmem:[#allocation7 + $0xd50] sm:$0xff]
    %v2064 = vld [vmem:[#allocation7 + $0xd58] sm:$0xff]
    %v2065 = vld [vmem:[#allocation7 + $0xd60] sm:$0xff]
    %v2066 = vld [vmem:[#allocation7 + $0xd68] sm:$0xff]
    %v2067 = vld [vmem:[#allocation7 + $0xd70] sm:$0xff]
    %v2068 = vld [vmem:[#allocation7 + $0xd78] sm:$0xff]
    %v2069 = vld [vmem:[#allocation7 + $0xd80] sm:$0xff]
    %v2070 = vld [vmem:[#allocation7 + $0xd88] sm:$0xff]
    %v2071 = vld [vmem:[#allocation7 + $0xd90] sm:$0xff]
    %v2072 = vld [vmem:[#allocation7 + $0xd98] sm:$0xff]
    %v2073 = vld [vmem:[#allocation7 + $0xda0] sm:$0xff]
    %v2074 = vld [vmem:[#allocation7 + $0xda8] sm:$0xff]
    %v2075 = vld [vmem:[#allocation7 + $0xdb0] sm:$0xff]
    %v2076 = vld [vmem:[#allocation7 + $0xdb8] sm:$0xff]
    %v2077 = vld [vmem:[#allocation7 + $0xdc0] sm:$0xff]
    %v2078 = vld [vmem:[#allocation7 + $0xdc8] sm:$0xff]
    %v2079 = vld [vmem:[#allocation7 + $0xdd0] sm:$0xff]
    %v2080 = vld [vmem:[#allocation7 + $0xdd8] sm:$0xff]
    %v2081 = vld [vmem:[#allocation7 + $0xde0] sm:$0xff]
    %v2082 = vld [vmem:[#allocation7 + $0xde8] sm:$0xff]
    %v2083 = vld [vmem:[#allocation7 + $0xdf0] sm:$0xff]
    %v2084 = vld [vmem:[#allocation7 + $0xdf8] sm:$0xff]
    %v2085 = vld [vmem:[#allocation7 + $0xe00] sm:$0xff]
    %v2086 = vld [vmem:[#allocation7 + $0xe08] sm:$0xff]
    %v2087 = vld [vmem:[#allocation7 + $0xe10] sm:$0xff]
    %v2088 = vld [vmem:[#allocation7 + $0xe18] sm:$0xff]
    %v2089 = vld [vmem:[#allocation7 + $0xe20] sm:$0xff]
    %v2090 = vld [vmem:[#allocation7 + $0xe28] sm:$0xff]
    %v2091 = vld [vmem:[#allocation7 + $0xe30] sm:$0xff]
    %v2092 = vld [vmem:[#allocation7 + $0xe38] sm:$0xff]
    %v2093 = vld [vmem:[#allocation7 + $0xe40] sm:$0xff]
    %v2094 = vld [vmem:[#allocation7 + $0xe48] sm:$0xff]
    %v2095 = vld [vmem:[#allocation7 + $0xe50] sm:$0xff]
    %v2096 = vld [vmem:[#allocation7 + $0xe58] sm:$0xff]
    %v2097 = vld [vmem:[#allocation7 + $0xe60] sm:$0xff]
    %v2098 = vld [vmem:[#allocation7 + $0xe68] sm:$0xff]
    %v2099 = vld [vmem:[#allocation7 + $0xe70] sm:$0xff]
    %v2100 = vld [vmem:[#allocation7 + $0xe78] sm:$0xff]
    %v2101 = vld [vmem:[#allocation7 + $0xe80] sm:$0xff]
    %v2102 = vld [vmem:[#allocation7 + $0xe88] sm:$0xff]
    %v2103 = vld [vmem:[#allocation7 + $0xe90] sm:$0xff]
    %v2104 = vld [vmem:[#allocation7 + $0xe98] sm:$0xff]
    %v2105 = vld [vmem:[#allocation7 + $0xea0] sm:$0xff]
    %v2106 = vld [vmem:[#allocation7 + $0xea8] sm:$0xff]
    %v2107 = vld [vmem:[#allocation7 + $0xeb0] sm:$0xff]
    %v2108 = vld [vmem:[#allocation7 + $0xeb8] sm:$0xff]
    %v2109 = vld [vmem:[#allocation7 + $0xec0] sm:$0xff]
    %v2110 = vld [vmem:[#allocation7 + $0xec8] sm:$0xff]
    %v2111 = vld [vmem:[#allocation7 + $0xed0] sm:$0xff]
    %v2112 = vld [vmem:[#allocation7 + $0xed8] sm:$0xff]
    %v2113 = vld [vmem:[#allocation7 + $0xee0] sm:$0xff]
    %v2114 = vld [vmem:[#allocation7 + $0xee8] sm:$0xff]
    %v2115 = vld [vmem:[#allocation7 + $0xef0] sm:$0xff]
    %v2116 = vld [vmem:[#allocation7 + $0xef8] sm:$0xff]
    %v2117 = vld [vmem:[#allocation7 + $0xf00] sm:$0xff]
    %v2118 = vld [vmem:[#allocation7 + $0xf08] sm:$0xff]
    %v2119 = vld [vmem:[#allocation7 + $0xf10] sm:$0xff]
    %v2120 = vld [vmem:[#allocation7 + $0xf18] sm:$0xff]
    %v2121 = vld [vmem:[#allocation7 + $0xf20] sm:$0xff]
    %v2122 = vld [vmem:[#allocation7 + $0xf28] sm:$0xff]
    %v2123 = vld [vmem:[#allocation7 + $0xf30] sm:$0xff]
    %v2124 = vld [vmem:[#allocation7 + $0xf38] sm:$0xff]
    %v2125 = vld [vmem:[#allocation7 + $0xf40] sm:$0xff]
    %v2126 = vld [vmem:[#allocation7 + $0xf48] sm:$0xff]
    %v2127 = vld [vmem:[#allocation7 + $0xf50] sm:$0xff]
    %v2128 = vld [vmem:[#allocation7 + $0xf58] sm:$0xff]
    %v2129 = vld [vmem:[#allocation7 + $0xf60] sm:$0xff]
    %v2130 = vld [vmem:[#allocation7 + $0xf68] sm:$0xff]
    %v2131 = vld [vmem:[#allocation7 + $0xf70] sm:$0xff]
    %v2132 = vld [vmem:[#allocation7 + $0xf78] sm:$0xff]
    %v2133 = vld [vmem:[#allocation7 + $0xf80] sm:$0xff]
    %v2134 = vld [vmem:[#allocation7 + $0xf88] sm:$0xff]
    %v2135 = vld [vmem:[#allocation7 + $0xf90] sm:$0xff]
    %v2136 = vld [vmem:[#allocation7 + $0xf98] sm:$0xff]
    %v2137 = vld [vmem:[#allocation7 + $0xfa0] sm:$0xff]
    %v2138 = vld [vmem:[#allocation7 + $0xfa8] sm:$0xff]
    %v2139 = vld [vmem:[#allocation7 + $0xfb0] sm:$0xff]
    %v2140 = vld [vmem:[#allocation7 + $0xfb8] sm:$0xff]
    %v2141 = vld [vmem:[#allocation7 + $0xfc0] sm:$0xff]
    %v2142 = vld [vmem:[#allocation7 + $0xfc8] sm:$0xff]
    %v2143 = vld [vmem:[#allocation7 + $0xfd0] sm:$0xff]
    %v2144 = vld [vmem:[#allocation7 + $0xfd8] sm:$0xff]
    %v2145 = vld [vmem:[#allocation7 + $0xfe0] sm:$0xff]
    %v2146 = vld [vmem:[#allocation7 + $0xfe8] sm:$0xff]
    %v2147 = vld [vmem:[#allocation7 + $0xff0] sm:$0xff]
    %v2148 = vld [vmem:[#allocation7 + $0xff8] sm:$0xff]
    %v2149 = vld [vmem:[#allocation9] sm:$0xff]
    %v2151 = vlaneseq
    %v2152 = vshrl.u32 %v2151, 7
    %v2153 = vsub.s32 0, %v2152
    %v2154 = vrot.slane %v2149, %v2153
    %v2155 = vlaneseq
    %v2156 = vshrl.u32 %v2155, 7
    %v2157 = vsub.s32 1, %v2156
    %v2158 = vrot.slane %v2149, %v2157
    %v2159 = vlaneseq
    %v2160 = vshrl.u32 %v2159, 7
    %v2161 = vsub.s32 2, %v2160
    %v2162 = vrot.slane %v2149, %v2161
    %v2163 = vlaneseq
    %v2164 = vshrl.u32 %v2163, 7
    %v2165 = vsub.s32 3, %v2164
    %v2166 = vrot.slane %v2149, %v2165
    %v2167 = vlaneseq
    %v2168 = vshrl.u32 %v2167, 7
    %v2169 = vsub.s32 4, %v2168
    %v2170 = vrot.slane %v2149, %v2169
    %v2171 = vlaneseq
    %v2172 = vshrl.u32 %v2171, 7
    %v2173 = vsub.s32 5, %v2172
    %v2174 = vrot.slane %v2149, %v2173
    %v2175 = vlaneseq
    %v2176 = vshrl.u32 %v2175, 7
    %v2177 = vsub.s32 6, %v2176
    %v2178 = vrot.slane %v2149, %v2177
    %v2179 = vlaneseq
    %v2180 = vshrl.u32 %v2179, 7
    %v2181 = vsub.s32 7, %v2180
    %v2182 = vrot.slane %v2149, %v2181
    %v2703 = vunpack.c.l.b16 %v1637
    %v2704 = vunpack.c.h.b16 %v1637
    %v2705 = vunpack.c.l.b16 %v1638
    %v2706 = vunpack.c.h.b16 %v1638
    %v2707 = vunpack.c.l.b16 %v1639
    %v2708 = vunpack.c.h.b16 %v1639
    %v2709 = vunpack.c.l.b16 %v1640
    %v2710 = vunpack.c.h.b16 %v1640
    %v2711 = vunpack.c.l.b16 %v1641
    %v2712 = vunpack.c.h.b16 %v1641
    %v2713 = vunpack.c.l.b16 %v1642
    %v2714 = vunpack.c.h.b16 %v1642
    %v2715 = vunpack.c.l.b16 %v1643
    %v2716 = vunpack.c.h.b16 %v1643
    %v2717 = vunpack.c.l.b16 %v1644
    %v2718 = vunpack.c.h.b16 %v1644
    %v2719 = vunpack.c.l.b16 %v1645
    %v2720 = vunpack.c.h.b16 %v1645
    %v2721 = vunpack.c.l.b16 %v1646
    %v2722 = vunpack.c.h.b16 %v1646
    %v2723 = vunpack.c.l.b16 %v1647
    %v2724 = vunpack.c.h.b16 %v1647
    %v2725 = vunpack.c.l.b16 %v1648
    %v2726 = vunpack.c.h.b16 %v1648
    %v2727 = vunpack.c.l.b16 %v1649
    %v2728 = vunpack.c.h.b16 %v1649
    %v2729 = vunpack.c.l.b16 %v1650
    %v2730 = vunpack.c.h.b16 %v1650
    %v2731 = vunpack.c.l.b16 %v1651
    %v2732 = vunpack.c.h.b16 %v1651
    %v2733 = vunpack.c.l.b16 %v1652
    %v2734 = vunpack.c.h.b16 %v1652
    %v2735 = vunpack.c.l.b16 %v1653
    %v2736 = vunpack.c.h.b16 %v1653
    %v2737 = vunpack.c.l.b16 %v1654
    %v2738 = vunpack.c.h.b16 %v1654
    %v2739 = vunpack.c.l.b16 %v1655
    %v2740 = vunpack.c.h.b16 %v1655
    %v2741 = vunpack.c.l.b16 %v1656
    %v2742 = vunpack.c.h.b16 %v1656
    %v2743 = vunpack.c.l.b16 %v1657
    %v2744 = vunpack.c.h.b16 %v1657
    %v2745 = vunpack.c.l.b16 %v1658
    %v2746 = vunpack.c.h.b16 %v1658
    %v2747 = vunpack.c.l.b16 %v1659
    %v2748 = vunpack.c.h.b16 %v1659
    %v2749 = vunpack.c.l.b16 %v1660
    %v2750 = vunpack.c.h.b16 %v1660
    %v2751 = vunpack.c.l.b16 %v1661
    %v2752 = vunpack.c.h.b16 %v1661
    %v2753 = vunpack.c.l.b16 %v1662
    %v2754 = vunpack.c.h.b16 %v1662
    %v2755 = vunpack.c.l.b16 %v1663
    %v2756 = vunpack.c.h.b16 %v1663
    %v2757 = vunpack.c.l.b16 %v1664
    %v2758 = vunpack.c.h.b16 %v1664
    %v2759 = vunpack.c.l.b16 %v1665
    %v2760 = vunpack.c.h.b16 %v1665
    %v2761 = vunpack.c.l.b16 %v1666
    %v2762 = vunpack.c.h.b16 %v1666
    %v2763 = vunpack.c.l.b16 %v1667
    %v2764 = vunpack.c.h.b16 %v1667
    %v2765 = vunpack.c.l.b16 %v1668
    %v2766 = vunpack.c.h.b16 %v1668
    %v2767 = vunpack.c.l.b16 %v1669
    %v2768 = vunpack.c.h.b16 %v1669
    %v2769 = vunpack.c.l.b16 %v1670
    %v2770 = vunpack.c.h.b16 %v1670
    %v2771 = vunpack.c.l.b16 %v1671
    %v2772 = vunpack.c.h.b16 %v1671
    %v2773 = vunpack.c.l.b16 %v1672
    %v2774 = vunpack.c.h.b16 %v1672
    %v2775 = vunpack.c.l.b16 %v1673
    %v2776 = vunpack.c.h.b16 %v1673
    %v2777 = vunpack.c.l.b16 %v1674
    %v2778 = vunpack.c.h.b16 %v1674
    %v2779 = vunpack.c.l.b16 %v1675
    %v2780 = vunpack.c.h.b16 %v1675
    %v2781 = vunpack.c.l.b16 %v1676
    %v2782 = vunpack.c.h.b16 %v1676
    %v2783 = vunpack.c.l.b16 %v1677
    %v2784 = vunpack.c.h.b16 %v1677
    %v2785 = vunpack.c.l.b16 %v1678
    %v2786 = vunpack.c.h.b16 %v1678
    %v2787 = vunpack.c.l.b16 %v1679
    %v2788 = vunpack.c.h.b16 %v1679
    %v2789 = vunpack.c.l.b16 %v1680
    %v2790 = vunpack.c.h.b16 %v1680
    %v2791 = vunpack.c.l.b16 %v1681
    %v2792 = vunpack.c.h.b16 %v1681
    %v2793 = vunpack.c.l.b16 %v1682
    %v2794 = vunpack.c.h.b16 %v1682
    %v2795 = vunpack.c.l.b16 %v1683
    %v2796 = vunpack.c.h.b16 %v1683
    %v2797 = vunpack.c.l.b16 %v1684
    %v2798 = vunpack.c.h.b16 %v1684
    %v2799 = vunpack.c.l.b16 %v1685
    %v2800 = vunpack.c.h.b16 %v1685
    %v2801 = vunpack.c.l.b16 %v1686
    %v2802 = vunpack.c.h.b16 %v1686
    %v2803 = vunpack.c.l.b16 %v1687
    %v2804 = vunpack.c.h.b16 %v1687
    %v2805 = vunpack.c.l.b16 %v1688
    %v2806 = vunpack.c.h.b16 %v1688
    %v2807 = vunpack.c.l.b16 %v1689
    %v2808 = vunpack.c.h.b16 %v1689
    %v2809 = vunpack.c.l.b16 %v1690
    %v2810 = vunpack.c.h.b16 %v1690
    %v2811 = vunpack.c.l.b16 %v1691
    %v2812 = vunpack.c.h.b16 %v1691
    %v2813 = vunpack.c.l.b16 %v1692
    %v2814 = vunpack.c.h.b16 %v1692
    %v2815 = vunpack.c.l.b16 %v1693
    %v2816 = vunpack.c.h.b16 %v1693
    %v2817 = vunpack.c.l.b16 %v1694
    %v2818 = vunpack.c.h.b16 %v1694
    %v2819 = vunpack.c.l.b16 %v1695
    %v2820 = vunpack.c.h.b16 %v1695
    %v2821 = vunpack.c.l.b16 %v1696
    %v2822 = vunpack.c.h.b16 %v1696
    %v2823 = vunpack.c.l.b16 %v1697
    %v2824 = vunpack.c.h.b16 %v1697
    %v2825 = vunpack.c.l.b16 %v1698
    %v2826 = vunpack.c.h.b16 %v1698
    %v2827 = vunpack.c.l.b16 %v1699
    %v2828 = vunpack.c.h.b16 %v1699
    %v2829 = vunpack.c.l.b16 %v1700
    %v2830 = vunpack.c.h.b16 %v1700
    %v2831 = vunpack.c.l.b16 %v1701
    %v2832 = vunpack.c.h.b16 %v1701
    %v2833 = vunpack.c.l.b16 %v1702
    %v2834 = vunpack.c.h.b16 %v1702
    %v2835 = vunpack.c.l.b16 %v1703
    %v2836 = vunpack.c.h.b16 %v1703
    %v2837 = vunpack.c.l.b16 %v1704
    %v2838 = vunpack.c.h.b16 %v1704
    %v2839 = vunpack.c.l.b16 %v1705
    %v2840 = vunpack.c.h.b16 %v1705
    %v2841 = vunpack.c.l.b16 %v1706
    %v2842 = vunpack.c.h.b16 %v1706
    %v2843 = vunpack.c.l.b16 %v1707
    %v2844 = vunpack.c.h.b16 %v1707
    %v2845 = vunpack.c.l.b16 %v1708
    %v2846 = vunpack.c.h.b16 %v1708
    %v2847 = vunpack.c.l.b16 %v1709
    %v2848 = vunpack.c.h.b16 %v1709
    %v2849 = vunpack.c.l.b16 %v1710
    %v2850 = vunpack.c.h.b16 %v1710
    %v2851 = vunpack.c.l.b16 %v1711
    %v2852 = vunpack.c.h.b16 %v1711
    %v2853 = vunpack.c.l.b16 %v1712
    %v2854 = vunpack.c.h.b16 %v1712
    %v2855 = vunpack.c.l.b16 %v1713
    %v2856 = vunpack.c.h.b16 %v1713
    %v2857 = vunpack.c.l.b16 %v1714
    %v2858 = vunpack.c.h.b16 %v1714
    %v2859 = vunpack.c.l.b16 %v1715
    %v2860 = vunpack.c.h.b16 %v1715
    %v2861 = vunpack.c.l.b16 %v1716
    %v2862 = vunpack.c.h.b16 %v1716
    %v2863 = vunpack.c.l.b16 %v1717
    %v2864 = vunpack.c.h.b16 %v1717
    %v2865 = vunpack.c.l.b16 %v1718
    %v2866 = vunpack.c.h.b16 %v1718
    %v2867 = vunpack.c.l.b16 %v1719
    %v2868 = vunpack.c.h.b16 %v1719
    %v2869 = vunpack.c.l.b16 %v1720
    %v2870 = vunpack.c.h.b16 %v1720
    %v2871 = vunpack.c.l.b16 %v1721
    %v2872 = vunpack.c.h.b16 %v1721
    %v2873 = vunpack.c.l.b16 %v1722
    %v2874 = vunpack.c.h.b16 %v1722
    %v2875 = vunpack.c.l.b16 %v1723
    %v2876 = vunpack.c.h.b16 %v1723
    %v2877 = vunpack.c.l.b16 %v1724
    %v2878 = vunpack.c.h.b16 %v1724
    %v2879 = vunpack.c.l.b16 %v1725
    %v2880 = vunpack.c.h.b16 %v1725
    %v2881 = vunpack.c.l.b16 %v1726
    %v2882 = vunpack.c.h.b16 %v1726
    %v2883 = vunpack.c.l.b16 %v1727
    %v2884 = vunpack.c.h.b16 %v1727
    %v2885 = vunpack.c.l.b16 %v1728
    %v2886 = vunpack.c.h.b16 %v1728
    %v2887 = vunpack.c.l.b16 %v1729
    %v2888 = vunpack.c.h.b16 %v1729
    %v2889 = vunpack.c.l.b16 %v1730
    %v2890 = vunpack.c.h.b16 %v1730
    %v2891 = vunpack.c.l.b16 %v1731
    %v2892 = vunpack.c.h.b16 %v1731
    %v2893 = vunpack.c.l.b16 %v1732
    %v2894 = vunpack.c.h.b16 %v1732
    %v2895 = vunpack.c.l.b16 %v1733
    %v2896 = vunpack.c.h.b16 %v1733
    %v2897 = vunpack.c.l.b16 %v1734
    %v2898 = vunpack.c.h.b16 %v1734
    %v2899 = vunpack.c.l.b16 %v1735
    %v2900 = vunpack.c.h.b16 %v1735
    %v2901 = vunpack.c.l.b16 %v1736
    %v2902 = vunpack.c.h.b16 %v1736
    %v2903 = vunpack.c.l.b16 %v1737
    %v2904 = vunpack.c.h.b16 %v1737
    %v2905 = vunpack.c.l.b16 %v1738
    %v2906 = vunpack.c.h.b16 %v1738
    %v2907 = vunpack.c.l.b16 %v1739
    %v2908 = vunpack.c.h.b16 %v1739
    %v2909 = vunpack.c.l.b16 %v1740
    %v2910 = vunpack.c.h.b16 %v1740
    %v2911 = vunpack.c.l.b16 %v1741
    %v2912 = vunpack.c.h.b16 %v1741
    %v2913 = vunpack.c.l.b16 %v1742
    %v2914 = vunpack.c.h.b16 %v1742
    %v2915 = vunpack.c.l.b16 %v1743
    %v2916 = vunpack.c.h.b16 %v1743
    %v2917 = vunpack.c.l.b16 %v1744
    %v2918 = vunpack.c.h.b16 %v1744
    %v2919 = vunpack.c.l.b16 %v1745
    %v2920 = vunpack.c.h.b16 %v1745
    %v2921 = vunpack.c.l.b16 %v1746
    %v2922 = vunpack.c.h.b16 %v1746
    %v2923 = vunpack.c.l.b16 %v1747
    %v2924 = vunpack.c.h.b16 %v1747
    %v2925 = vunpack.c.l.b16 %v1748
    %v2926 = vunpack.c.h.b16 %v1748
    %v2927 = vunpack.c.l.b16 %v1749
    %v2928 = vunpack.c.h.b16 %v1749
    %v2929 = vunpack.c.l.b16 %v1750
    %v2930 = vunpack.c.h.b16 %v1750
    %v2931 = vunpack.c.l.b16 %v1751
    %v2932 = vunpack.c.h.b16 %v1751
    %v2933 = vunpack.c.l.b16 %v1752
    %v2934 = vunpack.c.h.b16 %v1752
    %v2935 = vunpack.c.l.b16 %v1753
    %v2936 = vunpack.c.h.b16 %v1753
    %v2937 = vunpack.c.l.b16 %v1754
    %v2938 = vunpack.c.h.b16 %v1754
    %v2939 = vunpack.c.l.b16 %v1755
    %v2940 = vunpack.c.h.b16 %v1755
    %v2941 = vunpack.c.l.b16 %v1756
    %v2942 = vunpack.c.h.b16 %v1756
    %v2943 = vunpack.c.l.b16 %v1757
    %v2944 = vunpack.c.h.b16 %v1757
    %v2945 = vunpack.c.l.b16 %v1758
    %v2946 = vunpack.c.h.b16 %v1758
    %v2947 = vunpack.c.l.b16 %v1759
    %v2948 = vunpack.c.h.b16 %v1759
    %v2949 = vunpack.c.l.b16 %v1760
    %v2950 = vunpack.c.h.b16 %v1760
    %v2951 = vunpack.c.l.b16 %v1761
    %v2952 = vunpack.c.h.b16 %v1761
    %v2953 = vunpack.c.l.b16 %v1762
    %v2954 = vunpack.c.h.b16 %v1762
    %v2955 = vunpack.c.l.b16 %v1763
    %v2956 = vunpack.c.h.b16 %v1763
    %v2957 = vunpack.c.l.b16 %v1764
    %v2958 = vunpack.c.h.b16 %v1764
    %v2959 = vunpack.c.l.b16 %v1765
    %v2960 = vunpack.c.h.b16 %v1765
    %v2961 = vunpack.c.l.b16 %v1766
    %v2962 = vunpack.c.h.b16 %v1766
    %v2963 = vunpack.c.l.b16 %v1767
    %v2964 = vunpack.c.h.b16 %v1767
    %v2965 = vunpack.c.l.b16 %v1768
    %v2966 = vunpack.c.h.b16 %v1768
    %v2967 = vunpack.c.l.b16 %v1769
    %v2968 = vunpack.c.h.b16 %v1769
    %v2969 = vunpack.c.l.b16 %v1770
    %v2970 = vunpack.c.h.b16 %v1770
    %v2971 = vunpack.c.l.b16 %v1771
    %v2972 = vunpack.c.h.b16 %v1771
    %v2973 = vunpack.c.l.b16 %v1772
    %v2974 = vunpack.c.h.b16 %v1772
    %v2975 = vunpack.c.l.b16 %v1773
    %v2976 = vunpack.c.h.b16 %v1773
    %v2977 = vunpack.c.l.b16 %v1774
    %v2978 = vunpack.c.h.b16 %v1774
    %v2979 = vunpack.c.l.b16 %v1775
    %v2980 = vunpack.c.h.b16 %v1775
    %v2981 = vunpack.c.l.b16 %v1776
    %v2982 = vunpack.c.h.b16 %v1776
    %v2983 = vunpack.c.l.b16 %v1777
    %v2984 = vunpack.c.h.b16 %v1777
    %v2985 = vunpack.c.l.b16 %v1778
    %v2986 = vunpack.c.h.b16 %v1778
    %v2987 = vunpack.c.l.b16 %v1779
    %v2988 = vunpack.c.h.b16 %v1779
    %v2989 = vunpack.c.l.b16 %v1780
    %v2990 = vunpack.c.h.b16 %v1780
    %v2991 = vunpack.c.l.b16 %v1781
    %v2992 = vunpack.c.h.b16 %v1781
    %v2993 = vunpack.c.l.b16 %v1782
    %v2994 = vunpack.c.h.b16 %v1782
    %v2995 = vunpack.c.l.b16 %v1783
    %v2996 = vunpack.c.h.b16 %v1783
    %v2997 = vunpack.c.l.b16 %v1784
    %v2998 = vunpack.c.h.b16 %v1784
    %v2999 = vunpack.c.l.b16 %v1785
    %v3000 = vunpack.c.h.b16 %v1785
    %v3001 = vunpack.c.l.b16 %v1786
    %v3002 = vunpack.c.h.b16 %v1786
    %v3003 = vunpack.c.l.b16 %v1787
    %v3004 = vunpack.c.h.b16 %v1787
    %v3005 = vunpack.c.l.b16 %v1788
    %v3006 = vunpack.c.h.b16 %v1788
    %v3007 = vunpack.c.l.b16 %v1789
    %v3008 = vunpack.c.h.b16 %v1789
    %v3009 = vunpack.c.l.b16 %v1790
    %v3010 = vunpack.c.h.b16 %v1790
    %v3011 = vunpack.c.l.b16 %v1791
    %v3012 = vunpack.c.h.b16 %v1791
    %v3013 = vunpack.c.l.b16 %v1792
    %v3014 = vunpack.c.h.b16 %v1792
    %v3015 = vunpack.c.l.b16 %v1793
    %v3016 = vunpack.c.h.b16 %v1793
    %v3017 = vunpack.c.l.b16 %v1794
    %v3018 = vunpack.c.h.b16 %v1794
    %v3019 = vunpack.c.l.b16 %v1795
    %v3020 = vunpack.c.h.b16 %v1795
    %v3021 = vunpack.c.l.b16 %v1796
    %v3022 = vunpack.c.h.b16 %v1796
    %v3023 = vunpack.c.l.b16 %v1797
    %v3024 = vunpack.c.h.b16 %v1797
    %v3025 = vunpack.c.l.b16 %v1798
    %v3026 = vunpack.c.h.b16 %v1798
    %v3027 = vunpack.c.l.b16 %v1799
    %v3028 = vunpack.c.h.b16 %v1799
    %v3029 = vunpack.c.l.b16 %v1800
    %v3030 = vunpack.c.h.b16 %v1800
    %v3031 = vunpack.c.l.b16 %v1801
    %v3032 = vunpack.c.h.b16 %v1801
    %v3033 = vunpack.c.l.b16 %v1802
    %v3034 = vunpack.c.h.b16 %v1802
    %v3035 = vunpack.c.l.b16 %v1803
    %v3036 = vunpack.c.h.b16 %v1803
    %v3037 = vunpack.c.l.b16 %v1804
    %v3038 = vunpack.c.h.b16 %v1804
    %v3039 = vunpack.c.l.b16 %v1805
    %v3040 = vunpack.c.h.b16 %v1805
    %v3041 = vunpack.c.l.b16 %v1806
    %v3042 = vunpack.c.h.b16 %v1806
    %v3043 = vunpack.c.l.b16 %v1807
    %v3044 = vunpack.c.h.b16 %v1807
    %v3045 = vunpack.c.l.b16 %v1808
    %v3046 = vunpack.c.h.b16 %v1808
    %v3047 = vunpack.c.l.b16 %v1809
    %v3048 = vunpack.c.h.b16 %v1809
    %v3049 = vunpack.c.l.b16 %v1810
    %v3050 = vunpack.c.h.b16 %v1810
    %v3051 = vunpack.c.l.b16 %v1811
    %v3052 = vunpack.c.h.b16 %v1811
    %v3053 = vunpack.c.l.b16 %v1812
    %v3054 = vunpack.c.h.b16 %v1812
    %v3055 = vunpack.c.l.b16 %v1813
    %v3056 = vunpack.c.h.b16 %v1813
    %v3057 = vunpack.c.l.b16 %v1814
    %v3058 = vunpack.c.h.b16 %v1814
    %v3059 = vunpack.c.l.b16 %v1815
    %v3060 = vunpack.c.h.b16 %v1815
    %v3061 = vunpack.c.l.b16 %v1816
    %v3062 = vunpack.c.h.b16 %v1816
    %v3063 = vunpack.c.l.b16 %v1817
    %v3064 = vunpack.c.h.b16 %v1817
    %v3065 = vunpack.c.l.b16 %v1818
    %v3066 = vunpack.c.h.b16 %v1818
    %v3067 = vunpack.c.l.b16 %v1819
    %v3068 = vunpack.c.h.b16 %v1819
    %v3069 = vunpack.c.l.b16 %v1820
    %v3070 = vunpack.c.h.b16 %v1820
    %v3071 = vunpack.c.l.b16 %v1821
    %v3072 = vunpack.c.h.b16 %v1821
    %v3073 = vunpack.c.l.b16 %v1822
    %v3074 = vunpack.c.h.b16 %v1822
    %v3075 = vunpack.c.l.b16 %v1823
    %v3076 = vunpack.c.h.b16 %v1823
    %v3077 = vunpack.c.l.b16 %v1824
    %v3078 = vunpack.c.h.b16 %v1824
    %v3079 = vunpack.c.l.b16 %v1825
    %v3080 = vunpack.c.h.b16 %v1825
    %v3081 = vunpack.c.l.b16 %v1826
    %v3082 = vunpack.c.h.b16 %v1826
    %v3083 = vunpack.c.l.b16 %v1827
    %v3084 = vunpack.c.h.b16 %v1827
    %v3085 = vunpack.c.l.b16 %v1828
    %v3086 = vunpack.c.h.b16 %v1828
    %v3087 = vunpack.c.l.b16 %v1829
    %v3088 = vunpack.c.h.b16 %v1829
    %v3089 = vunpack.c.l.b16 %v1830
    %v3090 = vunpack.c.h.b16 %v1830
    %v3091 = vunpack.c.l.b16 %v1831
    %v3092 = vunpack.c.h.b16 %v1831
    %v3093 = vunpack.c.l.b16 %v1832
    %v3094 = vunpack.c.h.b16 %v1832
    %v3095 = vunpack.c.l.b16 %v1833
    %v3096 = vunpack.c.h.b16 %v1833
    %v3097 = vunpack.c.l.b16 %v1834
    %v3098 = vunpack.c.h.b16 %v1834
    %v3099 = vunpack.c.l.b16 %v1835
    %v3100 = vunpack.c.h.b16 %v1835
    %v3101 = vunpack.c.l.b16 %v1836
    %v3102 = vunpack.c.h.b16 %v1836
    %v3103 = vunpack.c.l.b16 %v1837
    %v3104 = vunpack.c.h.b16 %v1837
    %v3105 = vunpack.c.l.b16 %v1838
    %v3106 = vunpack.c.h.b16 %v1838
    %v3107 = vunpack.c.l.b16 %v1839
    %v3108 = vunpack.c.h.b16 %v1839
    %v3109 = vunpack.c.l.b16 %v1840
    %v3110 = vunpack.c.h.b16 %v1840
    %v3111 = vunpack.c.l.b16 %v1841
    %v3112 = vunpack.c.h.b16 %v1841
    %v3113 = vunpack.c.l.b16 %v1842
    %v3114 = vunpack.c.h.b16 %v1842
    %v3115 = vunpack.c.l.b16 %v1843
    %v3116 = vunpack.c.h.b16 %v1843
    %v3117 = vunpack.c.l.b16 %v1844
    %v3118 = vunpack.c.h.b16 %v1844
    %v3119 = vunpack.c.l.b16 %v1845
    %v3120 = vunpack.c.h.b16 %v1845
    %v3121 = vunpack.c.l.b16 %v1846
    %v3122 = vunpack.c.h.b16 %v1846
    %v3123 = vunpack.c.l.b16 %v1847
    %v3124 = vunpack.c.h.b16 %v1847
    %v3125 = vunpack.c.l.b16 %v1848
    %v3126 = vunpack.c.h.b16 %v1848
    %v3127 = vunpack.c.l.b16 %v1849
    %v3128 = vunpack.c.h.b16 %v1849
    %v3129 = vunpack.c.l.b16 %v1850
    %v3130 = vunpack.c.h.b16 %v1850
    %v3131 = vunpack.c.l.b16 %v1851
    %v3132 = vunpack.c.h.b16 %v1851
    %v3133 = vunpack.c.l.b16 %v1852
    %v3134 = vunpack.c.h.b16 %v1852
    %v3135 = vunpack.c.l.b16 %v1853
    %v3136 = vunpack.c.h.b16 %v1853
    %v3137 = vunpack.c.l.b16 %v1854
    %v3138 = vunpack.c.h.b16 %v1854
    %v3139 = vunpack.c.l.b16 %v1855
    %v3140 = vunpack.c.h.b16 %v1855
    %v3141 = vunpack.c.l.b16 %v1856
    %v3142 = vunpack.c.h.b16 %v1856
    %v3143 = vunpack.c.l.b16 %v1857
    %v3144 = vunpack.c.h.b16 %v1857
    %v3145 = vunpack.c.l.b16 %v1858
    %v3146 = vunpack.c.h.b16 %v1858
    %v3147 = vunpack.c.l.b16 %v1859
    %v3148 = vunpack.c.h.b16 %v1859
    %v3149 = vunpack.c.l.b16 %v1860
    %v3150 = vunpack.c.h.b16 %v1860
    %v3151 = vunpack.c.l.b16 %v1861
    %v3152 = vunpack.c.h.b16 %v1861
    %v3153 = vunpack.c.l.b16 %v1862
    %v3154 = vunpack.c.h.b16 %v1862
    %v3155 = vunpack.c.l.b16 %v1863
    %v3156 = vunpack.c.h.b16 %v1863
    %v3157 = vunpack.c.l.b16 %v1864
    %v3158 = vunpack.c.h.b16 %v1864
    %v3159 = vunpack.c.l.b16 %v1865
    %v3160 = vunpack.c.h.b16 %v1865
    %v3161 = vunpack.c.l.b16 %v1866
    %v3162 = vunpack.c.h.b16 %v1866
    %v3163 = vunpack.c.l.b16 %v1867
    %v3164 = vunpack.c.h.b16 %v1867
    %v3165 = vunpack.c.l.b16 %v1868
    %v3166 = vunpack.c.h.b16 %v1868
    %v3167 = vunpack.c.l.b16 %v1869
    %v3168 = vunpack.c.h.b16 %v1869
    %v3169 = vunpack.c.l.b16 %v1870
    %v3170 = vunpack.c.h.b16 %v1870
    %v3171 = vunpack.c.l.b16 %v1871
    %v3172 = vunpack.c.h.b16 %v1871
    %v3173 = vunpack.c.l.b16 %v1872
    %v3174 = vunpack.c.h.b16 %v1872
    %v3175 = vunpack.c.l.b16 %v1873
    %v3176 = vunpack.c.h.b16 %v1873
    %v3177 = vunpack.c.l.b16 %v1874
    %v3178 = vunpack.c.h.b16 %v1874
    %v3179 = vunpack.c.l.b16 %v1875
    %v3180 = vunpack.c.h.b16 %v1875
    %v3181 = vunpack.c.l.b16 %v1876
    %v3182 = vunpack.c.h.b16 %v1876
    %v3183 = vunpack.c.l.b16 %v1877
    %v3184 = vunpack.c.h.b16 %v1877
    %v3185 = vunpack.c.l.b16 %v1878
    %v3186 = vunpack.c.h.b16 %v1878
    %v3187 = vunpack.c.l.b16 %v1879
    %v3188 = vunpack.c.h.b16 %v1879
    %v3189 = vunpack.c.l.b16 %v1880
    %v3190 = vunpack.c.h.b16 %v1880
    %v3191 = vunpack.c.l.b16 %v1881
    %v3192 = vunpack.c.h.b16 %v1881
    %v3193 = vunpack.c.l.b16 %v1882
    %v3194 = vunpack.c.h.b16 %v1882
    %v3195 = vunpack.c.l.b16 %v1883
    %v3196 = vunpack.c.h.b16 %v1883
    %v3197 = vunpack.c.l.b16 %v1884
    %v3198 = vunpack.c.h.b16 %v1884
    %v3199 = vunpack.c.l.b16 %v1885
    %v3200 = vunpack.c.h.b16 %v1885
    %v3201 = vunpack.c.l.b16 %v1886
    %v3202 = vunpack.c.h.b16 %v1886
    %v3203 = vunpack.c.l.b16 %v1887
    %v3204 = vunpack.c.h.b16 %v1887
    %v3205 = vunpack.c.l.b16 %v1888
    %v3206 = vunpack.c.h.b16 %v1888
    %v3207 = vunpack.c.l.b16 %v1889
    %v3208 = vunpack.c.h.b16 %v1889
    %v3209 = vunpack.c.l.b16 %v1890
    %v3210 = vunpack.c.h.b16 %v1890
    %v3211 = vunpack.c.l.b16 %v1891
    %v3212 = vunpack.c.h.b16 %v1891
    %v3213 = vunpack.c.l.b16 %v1892
    %v3214 = vunpack.c.h.b16 %v1892
    %v3215 = vunpack.c.l.b16 %v1893
    %v3216 = vunpack.c.h.b16 %v1893
    %v3217 = vunpack.c.l.b16 %v1894
    %v3218 = vunpack.c.h.b16 %v1894
    %v3219 = vunpack.c.l.b16 %v1895
    %v3220 = vunpack.c.h.b16 %v1895
    %v3221 = vunpack.c.l.b16 %v1896
    %v3222 = vunpack.c.h.b16 %v1896
    %v3223 = vunpack.c.l.b16 %v1897
    %v3224 = vunpack.c.h.b16 %v1897
    %v3225 = vunpack.c.l.b16 %v1898
    %v3226 = vunpack.c.h.b16 %v1898
    %v3227 = vunpack.c.l.b16 %v1899
    %v3228 = vunpack.c.h.b16 %v1899
    %v3229 = vunpack.c.l.b16 %v1900
    %v3230 = vunpack.c.h.b16 %v1900
    %v3231 = vunpack.c.l.b16 %v1901
    %v3232 = vunpack.c.h.b16 %v1901
    %v3233 = vunpack.c.l.b16 %v1902
    %v3234 = vunpack.c.h.b16 %v1902
    %v3235 = vunpack.c.l.b16 %v1903
    %v3236 = vunpack.c.h.b16 %v1903
    %v3237 = vunpack.c.l.b16 %v1904
    %v3238 = vunpack.c.h.b16 %v1904
    %v3239 = vunpack.c.l.b16 %v1905
    %v3240 = vunpack.c.h.b16 %v1905
    %v3241 = vunpack.c.l.b16 %v1906
    %v3242 = vunpack.c.h.b16 %v1906
    %v3243 = vunpack.c.l.b16 %v1907
    %v3244 = vunpack.c.h.b16 %v1907
    %v3245 = vunpack.c.l.b16 %v1908
    %v3246 = vunpack.c.h.b16 %v1908
    %v3247 = vunpack.c.l.b16 %v1909
    %v3248 = vunpack.c.h.b16 %v1909
    %v3249 = vunpack.c.l.b16 %v1910
    %v3250 = vunpack.c.h.b16 %v1910
    %v3251 = vunpack.c.l.b16 %v1911
    %v3252 = vunpack.c.h.b16 %v1911
    %v3253 = vunpack.c.l.b16 %v1912
    %v3254 = vunpack.c.h.b16 %v1912
    %v3255 = vunpack.c.l.b16 %v1913
    %v3256 = vunpack.c.h.b16 %v1913
    %v3257 = vunpack.c.l.b16 %v1914
    %v3258 = vunpack.c.h.b16 %v1914
    %v3259 = vunpack.c.l.b16 %v1915
    %v3260 = vunpack.c.h.b16 %v1915
    %v3261 = vunpack.c.l.b16 %v1916
    %v3262 = vunpack.c.h.b16 %v1916
    %v3263 = vunpack.c.l.b16 %v1917
    %v3264 = vunpack.c.h.b16 %v1917
    %v3265 = vunpack.c.l.b16 %v1918
    %v3266 = vunpack.c.h.b16 %v1918
    %v3267 = vunpack.c.l.b16 %v1919
    %v3268 = vunpack.c.h.b16 %v1919
    %v3269 = vunpack.c.l.b16 %v1920
    %v3270 = vunpack.c.h.b16 %v1920
    %v3271 = vunpack.c.l.b16 %v1921
    %v3272 = vunpack.c.h.b16 %v1921
    %v3273 = vunpack.c.l.b16 %v1922
    %v3274 = vunpack.c.h.b16 %v1922
    %v3275 = vunpack.c.l.b16 %v1923
    %v3276 = vunpack.c.h.b16 %v1923
    %v3277 = vunpack.c.l.b16 %v1924
    %v3278 = vunpack.c.h.b16 %v1924
    %v3279 = vunpack.c.l.b16 %v1925
    %v3280 = vunpack.c.h.b16 %v1925
    %v3281 = vunpack.c.l.b16 %v1926
    %v3282 = vunpack.c.h.b16 %v1926
    %v3283 = vunpack.c.l.b16 %v1927
    %v3284 = vunpack.c.h.b16 %v1927
    %v3285 = vunpack.c.l.b16 %v1928
    %v3286 = vunpack.c.h.b16 %v1928
    %v3287 = vunpack.c.l.b16 %v1929
    %v3288 = vunpack.c.h.b16 %v1929
    %v3289 = vunpack.c.l.b16 %v1930
    %v3290 = vunpack.c.h.b16 %v1930
    %v3291 = vunpack.c.l.b16 %v1931
    %v3292 = vunpack.c.h.b16 %v1931
    %v3293 = vunpack.c.l.b16 %v1932
    %v3294 = vunpack.c.h.b16 %v1932
    %v3295 = vunpack.c.l.b16 %v1933
    %v3296 = vunpack.c.h.b16 %v1933
    %v3297 = vunpack.c.l.b16 %v1934
    %v3298 = vunpack.c.h.b16 %v1934
    %v3299 = vunpack.c.l.b16 %v1935
    %v3300 = vunpack.c.h.b16 %v1935
    %v3301 = vunpack.c.l.b16 %v1936
    %v3302 = vunpack.c.h.b16 %v1936
    %v3303 = vunpack.c.l.b16 %v1937
    %v3304 = vunpack.c.h.b16 %v1937
    %v3305 = vunpack.c.l.b16 %v1938
    %v3306 = vunpack.c.h.b16 %v1938
    %v3307 = vunpack.c.l.b16 %v1939
    %v3308 = vunpack.c.h.b16 %v1939
    %v3309 = vunpack.c.l.b16 %v1940
    %v3310 = vunpack.c.h.b16 %v1940
    %v3311 = vunpack.c.l.b16 %v1941
    %v3312 = vunpack.c.h.b16 %v1941
    %v3313 = vunpack.c.l.b16 %v1942
    %v3314 = vunpack.c.h.b16 %v1942
    %v3315 = vunpack.c.l.b16 %v1943
    %v3316 = vunpack.c.h.b16 %v1943
    %v3317 = vunpack.c.l.b16 %v1944
    %v3318 = vunpack.c.h.b16 %v1944
    %v3319 = vunpack.c.l.b16 %v1945
    %v3320 = vunpack.c.h.b16 %v1945
    %v3321 = vunpack.c.l.b16 %v1946
    %v3322 = vunpack.c.h.b16 %v1946
    %v3323 = vunpack.c.l.b16 %v1947
    %v3324 = vunpack.c.h.b16 %v1947
    %v3325 = vunpack.c.l.b16 %v1948
    %v3326 = vunpack.c.h.b16 %v1948
    %v3327 = vunpack.c.l.b16 %v1949
    %v3328 = vunpack.c.h.b16 %v1949
    %v3329 = vunpack.c.l.b16 %v1950
    %v3330 = vunpack.c.h.b16 %v1950
    %v3331 = vunpack.c.l.b16 %v1951
    %v3332 = vunpack.c.h.b16 %v1951
    %v3333 = vunpack.c.l.b16 %v1952
    %v3334 = vunpack.c.h.b16 %v1952
    %v3335 = vunpack.c.l.b16 %v1953
    %v3336 = vunpack.c.h.b16 %v1953
    %v3337 = vunpack.c.l.b16 %v1954
    %v3338 = vunpack.c.h.b16 %v1954
    %v3339 = vunpack.c.l.b16 %v1955
    %v3340 = vunpack.c.h.b16 %v1955
    %v3341 = vunpack.c.l.b16 %v1956
    %v3342 = vunpack.c.h.b16 %v1956
    %v3343 = vunpack.c.l.b16 %v1957
    %v3344 = vunpack.c.h.b16 %v1957
    %v3345 = vunpack.c.l.b16 %v1958
    %v3346 = vunpack.c.h.b16 %v1958
    %v3347 = vunpack.c.l.b16 %v1959
    %v3348 = vunpack.c.h.b16 %v1959
    %v3349 = vunpack.c.l.b16 %v1960
    %v3350 = vunpack.c.h.b16 %v1960
    %v3351 = vunpack.c.l.b16 %v1961
    %v3352 = vunpack.c.h.b16 %v1961
    %v3353 = vunpack.c.l.b16 %v1962
    %v3354 = vunpack.c.h.b16 %v1962
    %v3355 = vunpack.c.l.b16 %v1963
    %v3356 = vunpack.c.h.b16 %v1963
    %v3357 = vunpack.c.l.b16 %v1964
    %v3358 = vunpack.c.h.b16 %v1964
    %v3359 = vunpack.c.l.b16 %v1965
    %v3360 = vunpack.c.h.b16 %v1965
    %v3361 = vunpack.c.l.b16 %v1966
    %v3362 = vunpack.c.h.b16 %v1966
    %v3363 = vunpack.c.l.b16 %v1967
    %v3364 = vunpack.c.h.b16 %v1967
    %v3365 = vunpack.c.l.b16 %v1968
    %v3366 = vunpack.c.h.b16 %v1968
    %v3367 = vunpack.c.l.b16 %v1969
    %v3368 = vunpack.c.h.b16 %v1969
    %v3369 = vunpack.c.l.b16 %v1970
    %v3370 = vunpack.c.h.b16 %v1970
    %v3371 = vunpack.c.l.b16 %v1971
    %v3372 = vunpack.c.h.b16 %v1971
    %v3373 = vunpack.c.l.b16 %v1972
    %v3374 = vunpack.c.h.b16 %v1972
    %v3375 = vunpack.c.l.b16 %v1973
    %v3376 = vunpack.c.h.b16 %v1973
    %v3377 = vunpack.c.l.b16 %v1974
    %v3378 = vunpack.c.h.b16 %v1974
    %v3379 = vunpack.c.l.b16 %v1975
    %v3380 = vunpack.c.h.b16 %v1975
    %v3381 = vunpack.c.l.b16 %v1976
    %v3382 = vunpack.c.h.b16 %v1976
    %v3383 = vunpack.c.l.b16 %v1977
    %v3384 = vunpack.c.h.b16 %v1977
    %v3385 = vunpack.c.l.b16 %v1978
    %v3386 = vunpack.c.h.b16 %v1978
    %v3387 = vunpack.c.l.b16 %v1979
    %v3388 = vunpack.c.h.b16 %v1979
    %v3389 = vunpack.c.l.b16 %v1980
    %v3390 = vunpack.c.h.b16 %v1980
    %v3391 = vunpack.c.l.b16 %v1981
    %v3392 = vunpack.c.h.b16 %v1981
    %v3393 = vunpack.c.l.b16 %v1982
    %v3394 = vunpack.c.h.b16 %v1982
    %v3395 = vunpack.c.l.b16 %v1983
    %v3396 = vunpack.c.h.b16 %v1983
    %v3397 = vunpack.c.l.b16 %v1984
    %v3398 = vunpack.c.h.b16 %v1984
    %v3399 = vunpack.c.l.b16 %v1985
    %v3400 = vunpack.c.h.b16 %v1985
    %v3401 = vunpack.c.l.b16 %v1986
    %v3402 = vunpack.c.h.b16 %v1986
    %v3403 = vunpack.c.l.b16 %v1987
    %v3404 = vunpack.c.h.b16 %v1987
    %v3405 = vunpack.c.l.b16 %v1988
    %v3406 = vunpack.c.h.b16 %v1988
    %v3407 = vunpack.c.l.b16 %v1989
    %v3408 = vunpack.c.h.b16 %v1989
    %v3409 = vunpack.c.l.b16 %v1990
    %v3410 = vunpack.c.h.b16 %v1990
    %v3411 = vunpack.c.l.b16 %v1991
    %v3412 = vunpack.c.h.b16 %v1991
    %v3413 = vunpack.c.l.b16 %v1992
    %v3414 = vunpack.c.h.b16 %v1992
    %v3415 = vunpack.c.l.b16 %v1993
    %v3416 = vunpack.c.h.b16 %v1993
    %v3417 = vunpack.c.l.b16 %v1994
    %v3418 = vunpack.c.h.b16 %v1994
    %v3419 = vunpack.c.l.b16 %v1995
    %v3420 = vunpack.c.h.b16 %v1995
    %v3421 = vunpack.c.l.b16 %v1996
    %v3422 = vunpack.c.h.b16 %v1996
    %v3423 = vunpack.c.l.b16 %v1997
    %v3424 = vunpack.c.h.b16 %v1997
    %v3425 = vunpack.c.l.b16 %v1998
    %v3426 = vunpack.c.h.b16 %v1998
    %v3427 = vunpack.c.l.b16 %v1999
    %v3428 = vunpack.c.h.b16 %v1999
    %v3429 = vunpack.c.l.b16 %v2000
    %v3430 = vunpack.c.h.b16 %v2000
    %v3431 = vunpack.c.l.b16 %v2001
    %v3432 = vunpack.c.h.b16 %v2001
    %v3433 = vunpack.c.l.b16 %v2002
    %v3434 = vunpack.c.h.b16 %v2002
    %v3435 = vunpack.c.l.b16 %v2003
    %v3436 = vunpack.c.h.b16 %v2003
    %v3437 = vunpack.c.l.b16 %v2004
    %v3438 = vunpack.c.h.b16 %v2004
    %v3439 = vunpack.c.l.b16 %v2005
    %v3440 = vunpack.c.h.b16 %v2005
    %v3441 = vunpack.c.l.b16 %v2006
    %v3442 = vunpack.c.h.b16 %v2006
    %v3443 = vunpack.c.l.b16 %v2007
    %v3444 = vunpack.c.h.b16 %v2007
    %v3445 = vunpack.c.l.b16 %v2008
    %v3446 = vunpack.c.h.b16 %v2008
    %v3447 = vunpack.c.l.b16 %v2009
    %v3448 = vunpack.c.h.b16 %v2009
    %v3449 = vunpack.c.l.b16 %v2010
    %v3450 = vunpack.c.h.b16 %v2010
    %v3451 = vunpack.c.l.b16 %v2011
    %v3452 = vunpack.c.h.b16 %v2011
    %v3453 = vunpack.c.l.b16 %v2012
    %v3454 = vunpack.c.h.b16 %v2012
    %v3455 = vunpack.c.l.b16 %v2013
    %v3456 = vunpack.c.h.b16 %v2013
    %v3457 = vunpack.c.l.b16 %v2014
    %v3458 = vunpack.c.h.b16 %v2014
    %v3459 = vunpack.c.l.b16 %v2015
    %v3460 = vunpack.c.h.b16 %v2015
    %v3461 = vunpack.c.l.b16 %v2016
    %v3462 = vunpack.c.h.b16 %v2016
    %v3463 = vunpack.c.l.b16 %v2017
    %v3464 = vunpack.c.h.b16 %v2017
    %v3465 = vunpack.c.l.b16 %v2018
    %v3466 = vunpack.c.h.b16 %v2018
    %v3467 = vunpack.c.l.b16 %v2019
    %v3468 = vunpack.c.h.b16 %v2019
    %v3469 = vunpack.c.l.b16 %v2020
    %v3470 = vunpack.c.h.b16 %v2020
    %v3471 = vunpack.c.l.b16 %v2021
    %v3472 = vunpack.c.h.b16 %v2021
    %v3473 = vunpack.c.l.b16 %v2022
    %v3474 = vunpack.c.h.b16 %v2022
    %v3475 = vunpack.c.l.b16 %v2023
    %v3476 = vunpack.c.h.b16 %v2023
    %v3477 = vunpack.c.l.b16 %v2024
    %v3478 = vunpack.c.h.b16 %v2024
    %v3479 = vunpack.c.l.b16 %v2025
    %v3480 = vunpack.c.h.b16 %v2025
    %v3481 = vunpack.c.l.b16 %v2026
    %v3482 = vunpack.c.h.b16 %v2026
    %v3483 = vunpack.c.l.b16 %v2027
    %v3484 = vunpack.c.h.b16 %v2027
    %v3485 = vunpack.c.l.b16 %v2028
    %v3486 = vunpack.c.h.b16 %v2028
    %v3487 = vunpack.c.l.b16 %v2029
    %v3488 = vunpack.c.h.b16 %v2029
    %v3489 = vunpack.c.l.b16 %v2030
    %v3490 = vunpack.c.h.b16 %v2030
    %v3491 = vunpack.c.l.b16 %v2031
    %v3492 = vunpack.c.h.b16 %v2031
    %v3493 = vunpack.c.l.b16 %v2032
    %v3494 = vunpack.c.h.b16 %v2032
    %v3495 = vunpack.c.l.b16 %v2033
    %v3496 = vunpack.c.h.b16 %v2033
    %v3497 = vunpack.c.l.b16 %v2034
    %v3498 = vunpack.c.h.b16 %v2034
    %v3499 = vunpack.c.l.b16 %v2035
    %v3500 = vunpack.c.h.b16 %v2035
    %v3501 = vunpack.c.l.b16 %v2036
    %v3502 = vunpack.c.h.b16 %v2036
    %v3503 = vunpack.c.l.b16 %v2037
    %v3504 = vunpack.c.h.b16 %v2037
    %v3505 = vunpack.c.l.b16 %v2038
    %v3506 = vunpack.c.h.b16 %v2038
    %v3507 = vunpack.c.l.b16 %v2039
    %v3508 = vunpack.c.h.b16 %v2039
    %v3509 = vunpack.c.l.b16 %v2040
    %v3510 = vunpack.c.h.b16 %v2040
    %v3511 = vunpack.c.l.b16 %v2041
    %v3512 = vunpack.c.h.b16 %v2041
    %v3513 = vunpack.c.l.b16 %v2042
    %v3514 = vunpack.c.h.b16 %v2042
    %v3515 = vunpack.c.l.b16 %v2043
    %v3516 = vunpack.c.h.b16 %v2043
    %v3517 = vunpack.c.l.b16 %v2044
    %v3518 = vunpack.c.h.b16 %v2044
    %v3519 = vunpack.c.l.b16 %v2045
    %v3520 = vunpack.c.h.b16 %v2045
    %v3521 = vunpack.c.l.b16 %v2046
    %v3522 = vunpack.c.h.b16 %v2046
    %v3523 = vunpack.c.l.b16 %v2047
    %v3524 = vunpack.c.h.b16 %v2047
    %v3525 = vunpack.c.l.b16 %v2048
    %v3526 = vunpack.c.h.b16 %v2048
    %v3527 = vunpack.c.l.b16 %v2049
    %v3528 = vunpack.c.h.b16 %v2049
    %v3529 = vunpack.c.l.b16 %v2050
    %v3530 = vunpack.c.h.b16 %v2050
    %v3531 = vunpack.c.l.b16 %v2051
    %v3532 = vunpack.c.h.b16 %v2051
    %v3533 = vunpack.c.l.b16 %v2052
    %v3534 = vunpack.c.h.b16 %v2052
    %v3535 = vunpack.c.l.b16 %v2053
    %v3536 = vunpack.c.h.b16 %v2053
    %v3537 = vunpack.c.l.b16 %v2054
    %v3538 = vunpack.c.h.b16 %v2054
    %v3539 = vunpack.c.l.b16 %v2055
    %v3540 = vunpack.c.h.b16 %v2055
    %v3541 = vunpack.c.l.b16 %v2056
    %v3542 = vunpack.c.h.b16 %v2056
    %v3543 = vunpack.c.l.b16 %v2057
    %v3544 = vunpack.c.h.b16 %v2057
    %v3545 = vunpack.c.l.b16 %v2058
    %v3546 = vunpack.c.h.b16 %v2058
    %v3547 = vunpack.c.l.b16 %v2059
    %v3548 = vunpack.c.h.b16 %v2059
    %v3549 = vunpack.c.l.b16 %v2060
    %v3550 = vunpack.c.h.b16 %v2060
    %v3551 = vunpack.c.l.b16 %v2061
    %v3552 = vunpack.c.h.b16 %v2061
    %v3553 = vunpack.c.l.b16 %v2062
    %v3554 = vunpack.c.h.b16 %v2062
    %v3555 = vunpack.c.l.b16 %v2063
    %v3556 = vunpack.c.h.b16 %v2063
    %v3557 = vunpack.c.l.b16 %v2064
    %v3558 = vunpack.c.h.b16 %v2064
    %v3559 = vunpack.c.l.b16 %v2065
    %v3560 = vunpack.c.h.b16 %v2065
    %v3561 = vunpack.c.l.b16 %v2066
    %v3562 = vunpack.c.h.b16 %v2066
    %v3563 = vunpack.c.l.b16 %v2067
    %v3564 = vunpack.c.h.b16 %v2067
    %v3565 = vunpack.c.l.b16 %v2068
    %v3566 = vunpack.c.h.b16 %v2068
    %v3567 = vunpack.c.l.b16 %v2069
    %v3568 = vunpack.c.h.b16 %v2069
    %v3569 = vunpack.c.l.b16 %v2070
    %v3570 = vunpack.c.h.b16 %v2070
    %v3571 = vunpack.c.l.b16 %v2071
    %v3572 = vunpack.c.h.b16 %v2071
    %v3573 = vunpack.c.l.b16 %v2072
    %v3574 = vunpack.c.h.b16 %v2072
    %v3575 = vunpack.c.l.b16 %v2073
    %v3576 = vunpack.c.h.b16 %v2073
    %v3577 = vunpack.c.l.b16 %v2074
    %v3578 = vunpack.c.h.b16 %v2074
    %v3579 = vunpack.c.l.b16 %v2075
    %v3580 = vunpack.c.h.b16 %v2075
    %v3581 = vunpack.c.l.b16 %v2076
    %v3582 = vunpack.c.h.b16 %v2076
    %v3583 = vunpack.c.l.b16 %v2077
    %v3584 = vunpack.c.h.b16 %v2077
    %v3585 = vunpack.c.l.b16 %v2078
    %v3586 = vunpack.c.h.b16 %v2078
    %v3587 = vunpack.c.l.b16 %v2079
    %v3588 = vunpack.c.h.b16 %v2079
    %v3589 = vunpack.c.l.b16 %v2080
    %v3590 = vunpack.c.h.b16 %v2080
    %v3591 = vunpack.c.l.b16 %v2081
    %v3592 = vunpack.c.h.b16 %v2081
    %v3593 = vunpack.c.l.b16 %v2082
    %v3594 = vunpack.c.h.b16 %v2082
    %v3595 = vunpack.c.l.b16 %v2083
    %v3596 = vunpack.c.h.b16 %v2083
    %v3597 = vunpack.c.l.b16 %v2084
    %v3598 = vunpack.c.h.b16 %v2084
    %v3599 = vunpack.c.l.b16 %v2085
    %v3600 = vunpack.c.h.b16 %v2085
    %v3601 = vunpack.c.l.b16 %v2086
    %v3602 = vunpack.c.h.b16 %v2086
    %v3603 = vunpack.c.l.b16 %v2087
    %v3604 = vunpack.c.h.b16 %v2087
    %v3605 = vunpack.c.l.b16 %v2088
    %v3606 = vunpack.c.h.b16 %v2088
    %v3607 = vunpack.c.l.b16 %v2089
    %v3608 = vunpack.c.h.b16 %v2089
    %v3609 = vunpack.c.l.b16 %v2090
    %v3610 = vunpack.c.h.b16 %v2090
    %v3611 = vunpack.c.l.b16 %v2091
    %v3612 = vunpack.c.h.b16 %v2091
    %v3613 = vunpack.c.l.b16 %v2092
    %v3614 = vunpack.c.h.b16 %v2092
    %v3615 = vunpack.c.l.b16 %v2093
    %v3616 = vunpack.c.h.b16 %v2093
    %v3617 = vunpack.c.l.b16 %v2094
    %v3618 = vunpack.c.h.b16 %v2094
    %v3619 = vunpack.c.l.b16 %v2095
    %v3620 = vunpack.c.h.b16 %v2095
    %v3621 = vunpack.c.l.b16 %v2096
    %v3622 = vunpack.c.h.b16 %v2096
    %v3623 = vunpack.c.l.b16 %v2097
    %v3624 = vunpack.c.h.b16 %v2097
    %v3625 = vunpack.c.l.b16 %v2098
    %v3626 = vunpack.c.h.b16 %v2098
    %v3627 = vunpack.c.l.b16 %v2099
    %v3628 = vunpack.c.h.b16 %v2099
    %v3629 = vunpack.c.l.b16 %v2100
    %v3630 = vunpack.c.h.b16 %v2100
    %v3631 = vunpack.c.l.b16 %v2101
    %v3632 = vunpack.c.h.b16 %v2101
    %v3633 = vunpack.c.l.b16 %v2102
    %v3634 = vunpack.c.h.b16 %v2102
    %v3635 = vunpack.c.l.b16 %v2103
    %v3636 = vunpack.c.h.b16 %v2103
    %v3637 = vunpack.c.l.b16 %v2104
    %v3638 = vunpack.c.h.b16 %v2104
    %v3639 = vunpack.c.l.b16 %v2105
    %v3640 = vunpack.c.h.b16 %v2105
    %v3641 = vunpack.c.l.b16 %v2106
    %v3642 = vunpack.c.h.b16 %v2106
    %v3643 = vunpack.c.l.b16 %v2107
    %v3644 = vunpack.c.h.b16 %v2107
    %v3645 = vunpack.c.l.b16 %v2108
    %v3646 = vunpack.c.h.b16 %v2108
    %v3647 = vunpack.c.l.b16 %v2109
    %v3648 = vunpack.c.h.b16 %v2109
    %v3649 = vunpack.c.l.b16 %v2110
    %v3650 = vunpack.c.h.b16 %v2110
    %v3651 = vunpack.c.l.b16 %v2111
    %v3652 = vunpack.c.h.b16 %v2111
    %v3653 = vunpack.c.l.b16 %v2112
    %v3654 = vunpack.c.h.b16 %v2112
    %v3655 = vunpack.c.l.b16 %v2113
    %v3656 = vunpack.c.h.b16 %v2113
    %v3657 = vunpack.c.l.b16 %v2114
    %v3658 = vunpack.c.h.b16 %v2114
    %v3659 = vunpack.c.l.b16 %v2115
    %v3660 = vunpack.c.h.b16 %v2115
    %v3661 = vunpack.c.l.b16 %v2116
    %v3662 = vunpack.c.h.b16 %v2116
    %v3663 = vunpack.c.l.b16 %v2117
    %v3664 = vunpack.c.h.b16 %v2117
    %v3665 = vunpack.c.l.b16 %v2118
    %v3666 = vunpack.c.h.b16 %v2118
    %v3667 = vunpack.c.l.b16 %v2119
    %v3668 = vunpack.c.h.b16 %v2119
    %v3669 = vunpack.c.l.b16 %v2120
    %v3670 = vunpack.c.h.b16 %v2120
    %v3671 = vunpack.c.l.b16 %v2121
    %v3672 = vunpack.c.h.b16 %v2121
    %v3673 = vunpack.c.l.b16 %v2122
    %v3674 = vunpack.c.h.b16 %v2122
    %v3675 = vunpack.c.l.b16 %v2123
    %v3676 = vunpack.c.h.b16 %v2123
    %v3677 = vunpack.c.l.b16 %v2124
    %v3678 = vunpack.c.h.b16 %v2124
    %v3679 = vunpack.c.l.b16 %v2125
    %v3680 = vunpack.c.h.b16 %v2125
    %v3681 = vunpack.c.l.b16 %v2126
    %v3682 = vunpack.c.h.b16 %v2126
    %v3683 = vunpack.c.l.b16 %v2127
    %v3684 = vunpack.c.h.b16 %v2127
    %v3685 = vunpack.c.l.b16 %v2128
    %v3686 = vunpack.c.h.b16 %v2128
    %v3687 = vunpack.c.l.b16 %v2129
    %v3688 = vunpack.c.h.b16 %v2129
    %v3689 = vunpack.c.l.b16 %v2130
    %v3690 = vunpack.c.h.b16 %v2130
    %v3691 = vunpack.c.l.b16 %v2131
    %v3692 = vunpack.c.h.b16 %v2131
    %v3693 = vunpack.c.l.b16 %v2132
    %v3694 = vunpack.c.h.b16 %v2132
    %v3695 = vunpack.c.l.b16 %v2133
    %v3696 = vunpack.c.h.b16 %v2133
    %v3697 = vunpack.c.l.b16 %v2134
    %v3698 = vunpack.c.h.b16 %v2134
    %v3699 = vunpack.c.l.b16 %v2135
    %v3700 = vunpack.c.h.b16 %v2135
    %v3701 = vunpack.c.l.b16 %v2136
    %v3702 = vunpack.c.h.b16 %v2136
    %v3703 = vunpack.c.l.b16 %v2137
    %v3704 = vunpack.c.h.b16 %v2137
    %v3705 = vunpack.c.l.b16 %v2138
    %v3706 = vunpack.c.h.b16 %v2138
    %v3707 = vunpack.c.l.b16 %v2139
    %v3708 = vunpack.c.h.b16 %v2139
    %v3709 = vunpack.c.l.b16 %v2140
    %v3710 = vunpack.c.h.b16 %v2140
    %v3711 = vunpack.c.l.b16 %v2141
    %v3712 = vunpack.c.h.b16 %v2141
    %v3713 = vunpack.c.l.b16 %v2142
    %v3714 = vunpack.c.h.b16 %v2142
    %v3715 = vunpack.c.l.b16 %v2143
    %v3716 = vunpack.c.h.b16 %v2143
    %v3717 = vunpack.c.l.b16 %v2144
    %v3718 = vunpack.c.h.b16 %v2144
    %v3719 = vunpack.c.l.b16 %v2145
    %v3720 = vunpack.c.h.b16 %v2145
    %v3721 = vunpack.c.l.b16 %v2146
    %v3722 = vunpack.c.h.b16 %v2146
    %v3723 = vunpack.c.l.b16 %v2147
    %v3724 = vunpack.c.h.b16 %v2147
    %v3725 = vunpack.c.l.b16 %v2148
    %v3726 = vunpack.c.h.b16 %v2148
    %v3727 = vpack.c.b16 %v2711, %v2703
    %v3728 = vpack.c.b16 %v2712, %v2704
    %v3729 = vpack.c.b16 %v2713, %v2705
    %v3730 = vpack.c.b16 %v2714, %v2706
    %v3731 = vpack.c.b16 %v2715, %v2707
    %v3732 = vpack.c.b16 %v2716, %v2708
    %v3733 = vpack.c.b16 %v2717, %v2709
    %v3734 = vpack.c.b16 %v2718, %v2710
    %v3735 = vpack.c.b16 %v2727, %v2719
    %v3736 = vpack.c.b16 %v2728, %v2720
    %v3737 = vpack.c.b16 %v2729, %v2721
    %v3738 = vpack.c.b16 %v2730, %v2722
    %v3739 = vpack.c.b16 %v2731, %v2723
    %v3740 = vpack.c.b16 %v2732, %v2724
    %v3741 = vpack.c.b16 %v2733, %v2725
    %v3742 = vpack.c.b16 %v2734, %v2726
    %v3743 = vpack.c.b16 %v2743, %v2735
    %v3744 = vpack.c.b16 %v2744, %v2736
    %v3745 = vpack.c.b16 %v2745, %v2737
    %v3746 = vpack.c.b16 %v2746, %v2738
    %v3747 = vpack.c.b16 %v2747, %v2739
    %v3748 = vpack.c.b16 %v2748, %v2740
    %v3749 = vpack.c.b16 %v2749, %v2741
    %v3750 = vpack.c.b16 %v2750, %v2742
    %v3751 = vpack.c.b16 %v2759, %v2751
    %v3752 = vpack.c.b16 %v2760, %v2752
    %v3753 = vpack.c.b16 %v2761, %v2753
    %v3754 = vpack.c.b16 %v2762, %v2754
    %v3755 = vpack.c.b16 %v2763, %v2755
    %v3756 = vpack.c.b16 %v2764, %v2756
    %v3757 = vpack.c.b16 %v2765, %v2757
    %v3758 = vpack.c.b16 %v2766, %v2758
    %v3759 = vpack.c.b16 %v2775, %v2767
    %v3760 = vpack.c.b16 %v2776, %v2768
    %v3761 = vpack.c.b16 %v2777, %v2769
    %v3762 = vpack.c.b16 %v2778, %v2770
    %v3763 = vpack.c.b16 %v2779, %v2771
    %v3764 = vpack.c.b16 %v2780, %v2772
    %v3765 = vpack.c.b16 %v2781, %v2773
    %v3766 = vpack.c.b16 %v2782, %v2774
    %v3767 = vpack.c.b16 %v2791, %v2783
    %v3768 = vpack.c.b16 %v2792, %v2784
    %v3769 = vpack.c.b16 %v2793, %v2785
    %v3770 = vpack.c.b16 %v2794, %v2786
    %v3771 = vpack.c.b16 %v2795, %v2787
    %v3772 = vpack.c.b16 %v2796, %v2788
    %v3773 = vpack.c.b16 %v2797, %v2789
    %v3774 = vpack.c.b16 %v2798, %v2790
    %v3775 = vpack.c.b16 %v2807, %v2799
    %v3776 = vpack.c.b16 %v2808, %v2800
    %v3777 = vpack.c.b16 %v2809, %v2801
    %v3778 = vpack.c.b16 %v2810, %v2802
    %v3779 = vpack.c.b16 %v2811, %v2803
    %v3780 = vpack.c.b16 %v2812, %v2804
    %v3781 = vpack.c.b16 %v2813, %v2805
    %v3782 = vpack.c.b16 %v2814, %v2806
    %v3783 = vpack.c.b16 %v2823, %v2815
    %v3784 = vpack.c.b16 %v2824, %v2816
    %v3785 = vpack.c.b16 %v2825, %v2817
    %v3786 = vpack.c.b16 %v2826, %v2818
    %v3787 = vpack.c.b16 %v2827, %v2819
    %v3788 = vpack.c.b16 %v2828, %v2820
    %v3789 = vpack.c.b16 %v2829, %v2821
    %v3790 = vpack.c.b16 %v2830, %v2822
    %v3791 = vpack.c.b16 %v2839, %v2831
    %v3792 = vpack.c.b16 %v2840, %v2832
    %v3793 = vpack.c.b16 %v2841, %v2833
    %v3794 = vpack.c.b16 %v2842, %v2834
    %v3795 = vpack.c.b16 %v2843, %v2835
    %v3796 = vpack.c.b16 %v2844, %v2836
    %v3797 = vpack.c.b16 %v2845, %v2837
    %v3798 = vpack.c.b16 %v2846, %v2838
    %v3799 = vpack.c.b16 %v2855, %v2847
    %v3800 = vpack.c.b16 %v2856, %v2848
    %v3801 = vpack.c.b16 %v2857, %v2849
    %v3802 = vpack.c.b16 %v2858, %v2850
    %v3803 = vpack.c.b16 %v2859, %v2851
    %v3804 = vpack.c.b16 %v2860, %v2852
    %v3805 = vpack.c.b16 %v2861, %v2853
    %v3806 = vpack.c.b16 %v2862, %v2854
    %v3807 = vpack.c.b16 %v2871, %v2863
    %v3808 = vpack.c.b16 %v2872, %v2864
    %v3809 = vpack.c.b16 %v2873, %v2865
    %v3810 = vpack.c.b16 %v2874, %v2866
    %v3811 = vpack.c.b16 %v2875, %v2867
    %v3812 = vpack.c.b16 %v2876, %v2868
    %v3813 = vpack.c.b16 %v2877, %v2869
    %v3814 = vpack.c.b16 %v2878, %v2870
    %v3815 = vpack.c.b16 %v2887, %v2879
    %v3816 = vpack.c.b16 %v2888, %v2880
    %v3817 = vpack.c.b16 %v2889, %v2881
    %v3818 = vpack.c.b16 %v2890, %v2882
    %v3819 = vpack.c.b16 %v2891, %v2883
    %v3820 = vpack.c.b16 %v2892, %v2884
    %v3821 = vpack.c.b16 %v2893, %v2885
    %v3822 = vpack.c.b16 %v2894, %v2886
    %v3823 = vpack.c.b16 %v2903, %v2895
    %v3824 = vpack.c.b16 %v2904, %v2896
    %v3825 = vpack.c.b16 %v2905, %v2897
    %v3826 = vpack.c.b16 %v2906, %v2898
    %v3827 = vpack.c.b16 %v2907, %v2899
    %v3828 = vpack.c.b16 %v2908, %v2900
    %v3829 = vpack.c.b16 %v2909, %v2901
    %v3830 = vpack.c.b16 %v2910, %v2902
    %v3831 = vpack.c.b16 %v2919, %v2911
    %v3832 = vpack.c.b16 %v2920, %v2912
    %v3833 = vpack.c.b16 %v2921, %v2913
    %v3834 = vpack.c.b16 %v2922, %v2914
    %v3835 = vpack.c.b16 %v2923, %v2915
    %v3836 = vpack.c.b16 %v2924, %v2916
    %v3837 = vpack.c.b16 %v2925, %v2917
    %v3838 = vpack.c.b16 %v2926, %v2918
    %v3839 = vpack.c.b16 %v2935, %v2927
    %v3840 = vpack.c.b16 %v2936, %v2928
    %v3841 = vpack.c.b16 %v2937, %v2929
    %v3842 = vpack.c.b16 %v2938, %v2930
    %v3843 = vpack.c.b16 %v2939, %v2931
    %v3844 = vpack.c.b16 %v2940, %v2932
    %v3845 = vpack.c.b16 %v2941, %v2933
    %v3846 = vpack.c.b16 %v2942, %v2934
    %v3847 = vpack.c.b16 %v2951, %v2943
    %v3848 = vpack.c.b16 %v2952, %v2944
    %v3849 = vpack.c.b16 %v2953, %v2945
    %v3850 = vpack.c.b16 %v2954, %v2946
    %v3851 = vpack.c.b16 %v2955, %v2947
    %v3852 = vpack.c.b16 %v2956, %v2948
    %v3853 = vpack.c.b16 %v2957, %v2949
    %v3854 = vpack.c.b16 %v2958, %v2950
    %v3855 = vpack.c.b16 %v2967, %v2959
    %v3856 = vpack.c.b16 %v2968, %v2960
    %v3857 = vpack.c.b16 %v2969, %v2961
    %v3858 = vpack.c.b16 %v2970, %v2962
    %v3859 = vpack.c.b16 %v2971, %v2963
    %v3860 = vpack.c.b16 %v2972, %v2964
    %v3861 = vpack.c.b16 %v2973, %v2965
    %v3862 = vpack.c.b16 %v2974, %v2966
    %v3863 = vpack.c.b16 %v2983, %v2975
    %v3864 = vpack.c.b16 %v2984, %v2976
    %v3865 = vpack.c.b16 %v2985, %v2977
    %v3866 = vpack.c.b16 %v2986, %v2978
    %v3867 = vpack.c.b16 %v2987, %v2979
    %v3868 = vpack.c.b16 %v2988, %v2980
    %v3869 = vpack.c.b16 %v2989, %v2981
    %v3870 = vpack.c.b16 %v2990, %v2982
    %v3871 = vpack.c.b16 %v2999, %v2991
    %v3872 = vpack.c.b16 %v3000, %v2992
    %v3873 = vpack.c.b16 %v3001, %v2993
    %v3874 = vpack.c.b16 %v3002, %v2994
    %v3875 = vpack.c.b16 %v3003, %v2995
    %v3876 = vpack.c.b16 %v3004, %v2996
    %v3877 = vpack.c.b16 %v3005, %v2997
    %v3878 = vpack.c.b16 %v3006, %v2998
    %v3879 = vpack.c.b16 %v3015, %v3007
    %v3880 = vpack.c.b16 %v3016, %v3008
    %v3881 = vpack.c.b16 %v3017, %v3009
    %v3882 = vpack.c.b16 %v3018, %v3010
    %v3883 = vpack.c.b16 %v3019, %v3011
    %v3884 = vpack.c.b16 %v3020, %v3012
    %v3885 = vpack.c.b16 %v3021, %v3013
    %v3886 = vpack.c.b16 %v3022, %v3014
    %v3887 = vpack.c.b16 %v3031, %v3023
    %v3888 = vpack.c.b16 %v3032, %v3024
    %v3889 = vpack.c.b16 %v3033, %v3025
    %v3890 = vpack.c.b16 %v3034, %v3026
    %v3891 = vpack.c.b16 %v3035, %v3027
    %v3892 = vpack.c.b16 %v3036, %v3028
    %v3893 = vpack.c.b16 %v3037, %v3029
    %v3894 = vpack.c.b16 %v3038, %v3030
    %v3895 = vpack.c.b16 %v3047, %v3039
    %v3896 = vpack.c.b16 %v3048, %v3040
    %v3897 = vpack.c.b16 %v3049, %v3041
    %v3898 = vpack.c.b16 %v3050, %v3042
    %v3899 = vpack.c.b16 %v3051, %v3043
    %v3900 = vpack.c.b16 %v3052, %v3044
    %v3901 = vpack.c.b16 %v3053, %v3045
    %v3902 = vpack.c.b16 %v3054, %v3046
    %v3903 = vpack.c.b16 %v3063, %v3055
    %v3904 = vpack.c.b16 %v3064, %v3056
    %v3905 = vpack.c.b16 %v3065, %v3057
    %v3906 = vpack.c.b16 %v3066, %v3058
    %v3907 = vpack.c.b16 %v3067, %v3059
    %v3908 = vpack.c.b16 %v3068, %v3060
    %v3909 = vpack.c.b16 %v3069, %v3061
    %v3910 = vpack.c.b16 %v3070, %v3062
    %v3911 = vpack.c.b16 %v3079, %v3071
    %v3912 = vpack.c.b16 %v3080, %v3072
    %v3913 = vpack.c.b16 %v3081, %v3073
    %v3914 = vpack.c.b16 %v3082, %v3074
    %v3915 = vpack.c.b16 %v3083, %v3075
    %v3916 = vpack.c.b16 %v3084, %v3076
    %v3917 = vpack.c.b16 %v3085, %v3077
    %v3918 = vpack.c.b16 %v3086, %v3078
    %v3919 = vpack.c.b16 %v3095, %v3087
    %v3920 = vpack.c.b16 %v3096, %v3088
    %v3921 = vpack.c.b16 %v3097, %v3089
    %v3922 = vpack.c.b16 %v3098, %v3090
    %v3923 = vpack.c.b16 %v3099, %v3091
    %v3924 = vpack.c.b16 %v3100, %v3092
    %v3925 = vpack.c.b16 %v3101, %v3093
    %v3926 = vpack.c.b16 %v3102, %v3094
    %v3927 = vpack.c.b16 %v3111, %v3103
    %v3928 = vpack.c.b16 %v3112, %v3104
    %v3929 = vpack.c.b16 %v3113, %v3105
    %v3930 = vpack.c.b16 %v3114, %v3106
    %v3931 = vpack.c.b16 %v3115, %v3107
    %v3932 = vpack.c.b16 %v3116, %v3108
    %v3933 = vpack.c.b16 %v3117, %v3109
    %v3934 = vpack.c.b16 %v3118, %v3110
    %v3935 = vpack.c.b16 %v3127, %v3119
    %v3936 = vpack.c.b16 %v3128, %v3120
    %v3937 = vpack.c.b16 %v3129, %v3121
    %v3938 = vpack.c.b16 %v3130, %v3122
    %v3939 = vpack.c.b16 %v3131, %v3123
    %v3940 = vpack.c.b16 %v3132, %v3124
    %v3941 = vpack.c.b16 %v3133, %v3125
    %v3942 = vpack.c.b16 %v3134, %v3126
    %v3943 = vpack.c.b16 %v3143, %v3135
    %v3944 = vpack.c.b16 %v3144, %v3136
    %v3945 = vpack.c.b16 %v3145, %v3137
    %v3946 = vpack.c.b16 %v3146, %v3138
    %v3947 = vpack.c.b16 %v3147, %v3139
    %v3948 = vpack.c.b16 %v3148, %v3140
    %v3949 = vpack.c.b16 %v3149, %v3141
    %v3950 = vpack.c.b16 %v3150, %v3142
    %v3951 = vpack.c.b16 %v3159, %v3151
    %v3952 = vpack.c.b16 %v3160, %v3152
    %v3953 = vpack.c.b16 %v3161, %v3153
    %v3954 = vpack.c.b16 %v3162, %v3154
    %v3955 = vpack.c.b16 %v3163, %v3155
    %v3956 = vpack.c.b16 %v3164, %v3156
    %v3957 = vpack.c.b16 %v3165, %v3157
    %v3958 = vpack.c.b16 %v3166, %v3158
    %v3959 = vpack.c.b16 %v3175, %v3167
    %v3960 = vpack.c.b16 %v3176, %v3168
    %v3961 = vpack.c.b16 %v3177, %v3169
    %v3962 = vpack.c.b16 %v3178, %v3170
    %v3963 = vpack.c.b16 %v3179, %v3171
    %v3964 = vpack.c.b16 %v3180, %v3172
    %v3965 = vpack.c.b16 %v3181, %v3173
    %v3966 = vpack.c.b16 %v3182, %v3174
    %v3967 = vpack.c.b16 %v3191, %v3183
    %v3968 = vpack.c.b16 %v3192, %v3184
    %v3969 = vpack.c.b16 %v3193, %v3185
    %v3970 = vpack.c.b16 %v3194, %v3186
    %v3971 = vpack.c.b16 %v3195, %v3187
    %v3972 = vpack.c.b16 %v3196, %v3188
    %v3973 = vpack.c.b16 %v3197, %v3189
    %v3974 = vpack.c.b16 %v3198, %v3190
    %v3975 = vpack.c.b16 %v3207, %v3199
    %v3976 = vpack.c.b16 %v3208, %v3200
    %v3977 = vpack.c.b16 %v3209, %v3201
    %v3978 = vpack.c.b16 %v3210, %v3202
    %v3979 = vpack.c.b16 %v3211, %v3203
    %v3980 = vpack.c.b16 %v3212, %v3204
    %v3981 = vpack.c.b16 %v3213, %v3205
    %v3982 = vpack.c.b16 %v3214, %v3206
    %v3983 = vpack.c.b16 %v3223, %v3215
    %v3984 = vpack.c.b16 %v3224, %v3216
    %v3985 = vpack.c.b16 %v3225, %v3217
    %v3986 = vpack.c.b16 %v3226, %v3218
    %v3987 = vpack.c.b16 %v3227, %v3219
    %v3988 = vpack.c.b16 %v3228, %v3220
    %v3989 = vpack.c.b16 %v3229, %v3221
    %v3990 = vpack.c.b16 %v3230, %v3222
    %v3991 = vpack.c.b16 %v3239, %v3231
    %v3992 = vpack.c.b16 %v3240, %v3232
    %v3993 = vpack.c.b16 %v3241, %v3233
    %v3994 = vpack.c.b16 %v3242, %v3234
    %v3995 = vpack.c.b16 %v3243, %v3235
    %v3996 = vpack.c.b16 %v3244, %v3236
    %v3997 = vpack.c.b16 %v3245, %v3237
    %v3998 = vpack.c.b16 %v3246, %v3238
    %v3999 = vpack.c.b16 %v3255, %v3247
    %v4000 = vpack.c.b16 %v3256, %v3248
    %v4001 = vpack.c.b16 %v3257, %v3249
    %v4002 = vpack.c.b16 %v3258, %v3250
    %v4003 = vpack.c.b16 %v3259, %v3251
    %v4004 = vpack.c.b16 %v3260, %v3252
    %v4005 = vpack.c.b16 %v3261, %v3253
    %v4006 = vpack.c.b16 %v3262, %v3254
    %v4007 = vpack.c.b16 %v3271, %v3263
    %v4008 = vpack.c.b16 %v3272, %v3264
    %v4009 = vpack.c.b16 %v3273, %v3265
    %v4010 = vpack.c.b16 %v3274, %v3266
    %v4011 = vpack.c.b16 %v3275, %v3267
    %v4012 = vpack.c.b16 %v3276, %v3268
    %v4013 = vpack.c.b16 %v3277, %v3269
    %v4014 = vpack.c.b16 %v3278, %v3270
    %v4015 = vpack.c.b16 %v3287, %v3279
    %v4016 = vpack.c.b16 %v3288, %v3280
    %v4017 = vpack.c.b16 %v3289, %v3281
    %v4018 = vpack.c.b16 %v3290, %v3282
    %v4019 = vpack.c.b16 %v3291, %v3283
    %v4020 = vpack.c.b16 %v3292, %v3284
    %v4021 = vpack.c.b16 %v3293, %v3285
    %v4022 = vpack.c.b16 %v3294, %v3286
    %v4023 = vpack.c.b16 %v3303, %v3295
    %v4024 = vpack.c.b16 %v3304, %v3296
    %v4025 = vpack.c.b16 %v3305, %v3297
    %v4026 = vpack.c.b16 %v3306, %v3298
    %v4027 = vpack.c.b16 %v3307, %v3299
    %v4028 = vpack.c.b16 %v3308, %v3300
    %v4029 = vpack.c.b16 %v3309, %v3301
    %v4030 = vpack.c.b16 %v3310, %v3302
    %v4031 = vpack.c.b16 %v3319, %v3311
    %v4032 = vpack.c.b16 %v3320, %v3312
    %v4033 = vpack.c.b16 %v3321, %v3313
    %v4034 = vpack.c.b16 %v3322, %v3314
    %v4035 = vpack.c.b16 %v3323, %v3315
    %v4036 = vpack.c.b16 %v3324, %v3316
    %v4037 = vpack.c.b16 %v3325, %v3317
    %v4038 = vpack.c.b16 %v3326, %v3318
    %v4039 = vpack.c.b16 %v3335, %v3327
    %v4040 = vpack.c.b16 %v3336, %v3328
    %v4041 = vpack.c.b16 %v3337, %v3329
    %v4042 = vpack.c.b16 %v3338, %v3330
    %v4043 = vpack.c.b16 %v3339, %v3331
    %v4044 = vpack.c.b16 %v3340, %v3332
    %v4045 = vpack.c.b16 %v3341, %v3333
    %v4046 = vpack.c.b16 %v3342, %v3334
    %v4047 = vpack.c.b16 %v3351, %v3343
    %v4048 = vpack.c.b16 %v3352, %v3344
    %v4049 = vpack.c.b16 %v3353, %v3345
    %v4050 = vpack.c.b16 %v3354, %v3346
    %v4051 = vpack.c.b16 %v3355, %v3347
    %v4052 = vpack.c.b16 %v3356, %v3348
    %v4053 = vpack.c.b16 %v3357, %v3349
    %v4054 = vpack.c.b16 %v3358, %v3350
    %v4055 = vpack.c.b16 %v3367, %v3359
    %v4056 = vpack.c.b16 %v3368, %v3360
    %v4057 = vpack.c.b16 %v3369, %v3361
    %v4058 = vpack.c.b16 %v3370, %v3362
    %v4059 = vpack.c.b16 %v3371, %v3363
    %v4060 = vpack.c.b16 %v3372, %v3364
    %v4061 = vpack.c.b16 %v3373, %v3365
    %v4062 = vpack.c.b16 %v3374, %v3366
    %v4063 = vpack.c.b16 %v3383, %v3375
    %v4064 = vpack.c.b16 %v3384, %v3376
    %v4065 = vpack.c.b16 %v3385, %v3377
    %v4066 = vpack.c.b16 %v3386, %v3378
    %v4067 = vpack.c.b16 %v3387, %v3379
    %v4068 = vpack.c.b16 %v3388, %v3380
    %v4069 = vpack.c.b16 %v3389, %v3381
    %v4070 = vpack.c.b16 %v3390, %v3382
    %v4071 = vpack.c.b16 %v3399, %v3391
    %v4072 = vpack.c.b16 %v3400, %v3392
    %v4073 = vpack.c.b16 %v3401, %v3393
    %v4074 = vpack.c.b16 %v3402, %v3394
    %v4075 = vpack.c.b16 %v3403, %v3395
    %v4076 = vpack.c.b16 %v3404, %v3396
    %v4077 = vpack.c.b16 %v3405, %v3397
    %v4078 = vpack.c.b16 %v3406, %v3398
    %v4079 = vpack.c.b16 %v3415, %v3407
    %v4080 = vpack.c.b16 %v3416, %v3408
    %v4081 = vpack.c.b16 %v3417, %v3409
    %v4082 = vpack.c.b16 %v3418, %v3410
    %v4083 = vpack.c.b16 %v3419, %v3411
    %v4084 = vpack.c.b16 %v3420, %v3412
    %v4085 = vpack.c.b16 %v3421, %v3413
    %v4086 = vpack.c.b16 %v3422, %v3414
    %v4087 = vpack.c.b16 %v3431, %v3423
    %v4088 = vpack.c.b16 %v3432, %v3424
    %v4089 = vpack.c.b16 %v3433, %v3425
    %v4090 = vpack.c.b16 %v3434, %v3426
    %v4091 = vpack.c.b16 %v3435, %v3427
    %v4092 = vpack.c.b16 %v3436, %v3428
    %v4093 = vpack.c.b16 %v3437, %v3429
    %v4094 = vpack.c.b16 %v3438, %v3430
    %v4095 = vpack.c.b16 %v3447, %v3439
    %v4096 = vpack.c.b16 %v3448, %v3440
    %v4097 = vpack.c.b16 %v3449, %v3441
    %v4098 = vpack.c.b16 %v3450, %v3442
    %v4099 = vpack.c.b16 %v3451, %v3443
    %v4100 = vpack.c.b16 %v3452, %v3444
    %v4101 = vpack.c.b16 %v3453, %v3445
    %v4102 = vpack.c.b16 %v3454, %v3446
    %v4103 = vpack.c.b16 %v3463, %v3455
    %v4104 = vpack.c.b16 %v3464, %v3456
    %v4105 = vpack.c.b16 %v3465, %v3457
    %v4106 = vpack.c.b16 %v3466, %v3458
    %v4107 = vpack.c.b16 %v3467, %v3459
    %v4108 = vpack.c.b16 %v3468, %v3460
    %v4109 = vpack.c.b16 %v3469, %v3461
    %v4110 = vpack.c.b16 %v3470, %v3462
    %v4111 = vpack.c.b16 %v3479, %v3471
    %v4112 = vpack.c.b16 %v3480, %v3472
    %v4113 = vpack.c.b16 %v3481, %v3473
    %v4114 = vpack.c.b16 %v3482, %v3474
    %v4115 = vpack.c.b16 %v3483, %v3475
    %v4116 = vpack.c.b16 %v3484, %v3476
    %v4117 = vpack.c.b16 %v3485, %v3477
    %v4118 = vpack.c.b16 %v3486, %v3478
    %v4119 = vpack.c.b16 %v3495, %v3487
    %v4120 = vpack.c.b16 %v3496, %v3488
    %v4121 = vpack.c.b16 %v3497, %v3489
    %v4122 = vpack.c.b16 %v3498, %v3490
    %v4123 = vpack.c.b16 %v3499, %v3491
    %v4124 = vpack.c.b16 %v3500, %v3492
    %v4125 = vpack.c.b16 %v3501, %v3493
    %v4126 = vpack.c.b16 %v3502, %v3494
    %v4127 = vpack.c.b16 %v3511, %v3503
    %v4128 = vpack.c.b16 %v3512, %v3504
    %v4129 = vpack.c.b16 %v3513, %v3505
    %v4130 = vpack.c.b16 %v3514, %v3506
    %v4131 = vpack.c.b16 %v3515, %v3507
    %v4132 = vpack.c.b16 %v3516, %v3508
    %v4133 = vpack.c.b16 %v3517, %v3509
    %v4134 = vpack.c.b16 %v3518, %v3510
    %v4135 = vpack.c.b16 %v3527, %v3519
    %v4136 = vpack.c.b16 %v3528, %v3520
    %v4137 = vpack.c.b16 %v3529, %v3521
    %v4138 = vpack.c.b16 %v3530, %v3522
    %v4139 = vpack.c.b16 %v3531, %v3523
    %v4140 = vpack.c.b16 %v3532, %v3524
    %v4141 = vpack.c.b16 %v3533, %v3525
    %v4142 = vpack.c.b16 %v3534, %v3526
    %v4143 = vpack.c.b16 %v3543, %v3535
    %v4144 = vpack.c.b16 %v3544, %v3536
    %v4145 = vpack.c.b16 %v3545, %v3537
    %v4146 = vpack.c.b16 %v3546, %v3538
    %v4147 = vpack.c.b16 %v3547, %v3539
    %v4148 = vpack.c.b16 %v3548, %v3540
    %v4149 = vpack.c.b16 %v3549, %v3541
    %v4150 = vpack.c.b16 %v3550, %v3542
    %v4151 = vpack.c.b16 %v3559, %v3551
    %v4152 = vpack.c.b16 %v3560, %v3552
    %v4153 = vpack.c.b16 %v3561, %v3553
    %v4154 = vpack.c.b16 %v3562, %v3554
    %v4155 = vpack.c.b16 %v3563, %v3555
    %v4156 = vpack.c.b16 %v3564, %v3556
    %v4157 = vpack.c.b16 %v3565, %v3557
    %v4158 = vpack.c.b16 %v3566, %v3558
    %v4159 = vpack.c.b16 %v3575, %v3567
    %v4160 = vpack.c.b16 %v3576, %v3568
    %v4161 = vpack.c.b16 %v3577, %v3569
    %v4162 = vpack.c.b16 %v3578, %v3570
    %v4163 = vpack.c.b16 %v3579, %v3571
    %v4164 = vpack.c.b16 %v3580, %v3572
    %v4165 = vpack.c.b16 %v3581, %v3573
    %v4166 = vpack.c.b16 %v3582, %v3574
    %v4167 = vpack.c.b16 %v3591, %v3583
    %v4168 = vpack.c.b16 %v3592, %v3584
    %v4169 = vpack.c.b16 %v3593, %v3585
    %v4170 = vpack.c.b16 %v3594, %v3586
    %v4171 = vpack.c.b16 %v3595, %v3587
    %v4172 = vpack.c.b16 %v3596, %v3588
    %v4173 = vpack.c.b16 %v3597, %v3589
    %v4174 = vpack.c.b16 %v3598, %v3590
    %v4175 = vpack.c.b16 %v3607, %v3599
    %v4176 = vpack.c.b16 %v3608, %v3600
    %v4177 = vpack.c.b16 %v3609, %v3601
    %v4178 = vpack.c.b16 %v3610, %v3602
    %v4179 = vpack.c.b16 %v3611, %v3603
    %v4180 = vpack.c.b16 %v3612, %v3604
    %v4181 = vpack.c.b16 %v3613, %v3605
    %v4182 = vpack.c.b16 %v3614, %v3606
    %v4183 = vpack.c.b16 %v3623, %v3615
    %v4184 = vpack.c.b16 %v3624, %v3616
    %v4185 = vpack.c.b16 %v3625, %v3617
    %v4186 = vpack.c.b16 %v3626, %v3618
    %v4187 = vpack.c.b16 %v3627, %v3619
    %v4188 = vpack.c.b16 %v3628, %v3620
    %v4189 = vpack.c.b16 %v3629, %v3621
    %v4190 = vpack.c.b16 %v3630, %v3622
    %v4191 = vpack.c.b16 %v3639, %v3631
    %v4192 = vpack.c.b16 %v3640, %v3632
    %v4193 = vpack.c.b16 %v3641, %v3633
    %v4194 = vpack.c.b16 %v3642, %v3634
    %v4195 = vpack.c.b16 %v3643, %v3635
    %v4196 = vpack.c.b16 %v3644, %v3636
    %v4197 = vpack.c.b16 %v3645, %v3637
    %v4198 = vpack.c.b16 %v3646, %v3638
    %v4199 = vpack.c.b16 %v3655, %v3647
    %v4200 = vpack.c.b16 %v3656, %v3648
    %v4201 = vpack.c.b16 %v3657, %v3649
    %v4202 = vpack.c.b16 %v3658, %v3650
    %v4203 = vpack.c.b16 %v3659, %v3651
    %v4204 = vpack.c.b16 %v3660, %v3652
    %v4205 = vpack.c.b16 %v3661, %v3653
    %v4206 = vpack.c.b16 %v3662, %v3654
    %v4207 = vpack.c.b16 %v3671, %v3663
    %v4208 = vpack.c.b16 %v3672, %v3664
    %v4209 = vpack.c.b16 %v3673, %v3665
    %v4210 = vpack.c.b16 %v3674, %v3666
    %v4211 = vpack.c.b16 %v3675, %v3667
    %v4212 = vpack.c.b16 %v3676, %v3668
    %v4213 = vpack.c.b16 %v3677, %v3669
    %v4214 = vpack.c.b16 %v3678, %v3670
    %v4215 = vpack.c.b16 %v3687, %v3679
    %v4216 = vpack.c.b16 %v3688, %v3680
    %v4217 = vpack.c.b16 %v3689, %v3681
    %v4218 = vpack.c.b16 %v3690, %v3682
    %v4219 = vpack.c.b16 %v3691, %v3683
    %v4220 = vpack.c.b16 %v3692, %v3684
    %v4221 = vpack.c.b16 %v3693, %v3685
    %v4222 = vpack.c.b16 %v3694, %v3686
    %v4223 = vpack.c.b16 %v3703, %v3695
    %v4224 = vpack.c.b16 %v3704, %v3696
    %v4225 = vpack.c.b16 %v3705, %v3697
    %v4226 = vpack.c.b16 %v3706, %v3698
    %v4227 = vpack.c.b16 %v3707, %v3699
    %v4228 = vpack.c.b16 %v3708, %v3700
    %v4229 = vpack.c.b16 %v3709, %v3701
    %v4230 = vpack.c.b16 %v3710, %v3702
    %v4231 = vpack.c.b16 %v3719, %v3711
    %v4232 = vpack.c.b16 %v3720, %v3712
    %v4233 = vpack.c.b16 %v3721, %v3713
    %v4234 = vpack.c.b16 %v3722, %v3714
    %v4235 = vpack.c.b16 %v3723, %v3715
    %v4236 = vpack.c.b16 %v3724, %v3716
    %v4237 = vpack.c.b16 %v3725, %v3717
    %v4238 = vpack.c.b16 %v3726, %v3718
    %4751 = vmatprep.subr.bf16.mxu0 %v3728
    %4752 = vmatpush1.bf16.msra.mxu0 %v3727
    %4753 = vmatprep.subr.bf16.mxu0 %v3736
    %4754 = vmatpush1.bf16.msra.mxu0 %v3735
    %4755 = vmatprep.subr.bf16.mxu0 %v3744
    %4756 = vmatpush1.bf16.msra.mxu0 %v3743
    %4757 = vmatprep.subr.bf16.mxu0 %v3752
    %4758 = vmatpush1.bf16.msra.mxu0 %v3751
    %4759 = vmatprep.subr.bf16.mxu0 %v3760
    %4760 = vmatpush1.bf16.msra.mxu0 %v3759
    %4761 = vmatprep.subr.bf16.mxu0 %v3768
    %4762 = vmatpush1.bf16.msra.mxu0 %v3767
    %4763 = vmatprep.subr.bf16.mxu0 %v3776
    %4764 = vmatpush1.bf16.msra.mxu0 %v3775
    %4765 = vmatprep.subr.bf16.mxu0 %v3784
    %4766 = vmatpush1.bf16.msra.mxu0 %v3783
    %4767 = vmatprep.subr.bf16.mxu0 %v3792
    %4768 = vmatpush1.bf16.msra.mxu0 %v3791
    %4769 = vmatprep.subr.bf16.mxu0 %v3800
    %4770 = vmatpush1.bf16.msra.mxu0 %v3799
    %4771 = vmatprep.subr.bf16.mxu0 %v3808
    %4772 = vmatpush1.bf16.msra.mxu0 %v3807
    %4773 = vmatprep.subr.bf16.mxu0 %v3816
    %4774 = vmatpush1.bf16.msra.mxu0 %v3815
    %4775 = vmatprep.subr.bf16.mxu0 %v3824
    %4776 = vmatpush1.bf16.msra.mxu0 %v3823
    %4777 = vmatprep.subr.bf16.mxu0 %v3832
    %4778 = vmatpush1.bf16.msra.mxu0 %v3831
    %4779 = vmatprep.subr.bf16.mxu0 %v3840
    %4780 = vmatpush1.bf16.msra.mxu0 %v3839
    %4781 = vmatprep.subr.bf16.mxu0 %v3848
    %4782 = vmatpush1.bf16.msra.mxu0 %v3847
    %4783 = vmatprep.mubr.bf16.mxu0 %v1630
    %4784 = vmatmul.mubr.bf16.gmra.mrb[0].mxu0 %v1629
    %v4785 = vpop.f32.mrb[0].mxu0
    %v4786 = vadd.f32 %v2154, %v4785
    %v4787 = vpop.f32.mrb[0].mxu0
    %v4788 = vadd.f32 %v2158, %v4787
    %v4789 = vpop.f32.mrb[0].mxu0
    %v4790 = vpop.f32.mrb[0].mxu0
    %4791 = vdwg.mxu0
    %4792 = vmatprep.subr.bf16.mxu0 %v3856
    %4793 = vmatpush1.bf16.msra.mxu0 %v3855
    %4794 = vmatprep.subr.bf16.mxu0 %v3864
    %4795 = vmatpush1.bf16.msra.mxu0 %v3863
    %4796 = vmatprep.subr.bf16.mxu0 %v3872
    %4797 = vmatpush1.bf16.msra.mxu0 %v3871
    %4798 = vmatprep.subr.bf16.mxu0 %v3880
    %4799 = vmatpush1.bf16.msra.mxu0 %v3879
    %4800 = vmatprep.subr.bf16.mxu0 %v3888
    %4801 = vmatpush1.bf16.msra.mxu0 %v3887
    %4802 = vmatprep.subr.bf16.mxu0 %v3896
    %4803 = vmatpush1.bf16.msra.mxu0 %v3895
    %4804 = vmatprep.subr.bf16.mxu0 %v3904
    %4805 = vmatpush1.bf16.msra.mxu0 %v3903
    %4806 = vmatprep.subr.bf16.mxu0 %v3912
    %4807 = vmatpush1.bf16.msra.mxu0 %v3911
    %4808 = vmatprep.subr.bf16.mxu0 %v3920
    %4809 = vmatpush1.bf16.msra.mxu0 %v3919
    %4810 = vmatprep.subr.bf16.mxu0 %v3928
    %4811 = vmatpush1.bf16.msra.mxu0 %v3927
    %4812 = vmatprep.subr.bf16.mxu0 %v3936
    %4813 = vmatpush1.bf16.msra.mxu0 %v3935
    %4814 = vmatprep.subr.bf16.mxu0 %v3944
    %4815 = vmatpush1.bf16.msra.mxu0 %v3943
    %4816 = vmatprep.subr.bf16.mxu0 %v3952
    %4817 = vmatpush1.bf16.msra.mxu0 %v3951
    %4818 = vmatprep.subr.bf16.mxu0 %v3960
    %4819 = vmatpush1.bf16.msra.mxu0 %v3959
    %4820 = vmatprep.subr.bf16.mxu0 %v3968
    %4821 = vmatpush1.bf16.msra.mxu0 %v3967
    %4822 = vmatprep.subr.bf16.mxu0 %v3976
    %4823 = vmatpush1.bf16.msra.mxu0 %v3975
    %4824 = vmatprep.mubr.bf16.mxu0 %v1632
    %4825 = vmatmul.mubr.bf16.gmra.mrb[0].mxu0 %v1631
    %v4826 = vpop.f32.mrb[0].mxu0
    %v4827 = vadd.f32 %v4786, %v4826
    %v4828 = vpop.f32.mrb[0].mxu0
    %v4829 = vadd.f32 %v4788, %v4828
    %v4830 = vpop.f32.mrb[0].mxu0
    %v4831 = vpop.f32.mrb[0].mxu0
    %4832 = vdwg.mxu0
    %4833 = vmatprep.subr.bf16.mxu0 %v3984
    %4834 = vmatpush1.bf16.msra.mxu0 %v3983
    %4835 = vmatprep.subr.bf16.mxu0 %v3992
    %4836 = vmatpush1.bf16.msra.mxu0 %v3991
    %4837 = vmatprep.subr.bf16.mxu0 %v4000
    %4838 = vmatpush1.bf16.msra.mxu0 %v3999
    %4839 = vmatprep.subr.bf16.mxu0 %v4008
    %4840 = vmatpush1.bf16.msra.mxu0 %v4007
    %4841 = vmatprep.subr.bf16.mxu0 %v4016
    %4842 = vmatpush1.bf16.msra.mxu0 %v4015
    %4843 = vmatprep.subr.bf16.mxu0 %v4024
    %4844 = vmatpush1.bf16.msra.mxu0 %v4023
    %4845 = vmatprep.subr.bf16.mxu0 %v4032
    %4846 = vmatpush1.bf16.msra.mxu0 %v4031
    %4847 = vmatprep.subr.bf16.mxu0 %v4040
    %4848 = vmatpush1.bf16.msra.mxu0 %v4039
    %4849 = vmatprep.subr.bf16.mxu0 %v4048
    %4850 = vmatpush1.bf16.msra.mxu0 %v4047
    %4851 = vmatprep.subr.bf16.mxu0 %v4056
    %4852 = vmatpush1.bf16.msra.mxu0 %v4055
    %4853 = vmatprep.subr.bf16.mxu0 %v4064
    %4854 = vmatpush1.bf16.msra.mxu0 %v4063
    %4855 = vmatprep.subr.bf16.mxu0 %v4072
    %4856 = vmatpush1.bf16.msra.mxu0 %v4071
    %4857 = vmatprep.subr.bf16.mxu0 %v4080
    %4858 = vmatpush1.bf16.msra.mxu0 %v4079
    %4859 = vmatprep.subr.bf16.mxu0 %v4088
    %4860 = vmatpush1.bf16.msra.mxu0 %v4087
    %4861 = vmatprep.subr.bf16.mxu0 %v4096
    %4862 = vmatpush1.bf16.msra.mxu0 %v4095
    %4863 = vmatprep.subr.bf16.mxu0 %v4104
    %4864 = vmatpush1.bf16.msra.mxu0 %v4103
    %4865 = vmatprep.mubr.bf16.mxu0 %v1634
    %4866 = vmatmul.mubr.bf16.gmra.mrb[0].mxu0 %v1633
    %v4867 = vpop.f32.mrb[0].mxu0
    %v4868 = vadd.f32 %v4827, %v4867
    %v4869 = vpop.f32.mrb[0].mxu0
    %v4870 = vadd.f32 %v4829, %v4869
    %v4871 = vpop.f32.mrb[0].mxu0
    %v4872 = vpop.f32.mrb[0].mxu0
    %4873 = vdwg.mxu0
    %4874 = vmatprep.subr.bf16.mxu0 %v4112
    %4875 = vmatpush1.bf16.msra.mxu0 %v4111
    %4876 = vmatprep.subr.bf16.mxu0 %v4120
    %4877 = vmatpush1.bf16.msra.mxu0 %v4119
    %4878 = vmatprep.subr.bf16.mxu0 %v4128
    %4879 = vmatpush1.bf16.msra.mxu0 %v4127
    %4880 = vmatprep.subr.bf16.mxu0 %v4136
    %4881 = vmatpush1.bf16.msra.mxu0 %v4135
    %4882 = vmatprep.subr.bf16.mxu0 %v4144
    %4883 = vmatpush1.bf16.msra.mxu0 %v4143
    %4884 = vmatprep.subr.bf16.mxu0 %v4152
    %4885 = vmatpush1.bf16.msra.mxu0 %v4151
    %4886 = vmatprep.subr.bf16.mxu0 %v4160
    %4887 = vmatpush1.bf16.msra.mxu0 %v4159
    %4888 = vmatprep.subr.bf16.mxu0 %v4168
    %4889 = vmatpush1.bf16.msra.mxu0 %v4167
    %4890 = vmatprep.subr.bf16.mxu0 %v4176
    %4891 = vmatpush1.bf16.msra.mxu0 %v4175
    %4892 = vmatprep.subr.bf16.mxu0 %v4184
    %4893 = vmatpush1.bf16.msra.mxu0 %v4183
    %4894 = vmatprep.subr.bf16.mxu0 %v4192
    %4895 = vmatpush1.bf16.msra.mxu0 %v4191
    %4896 = vmatprep.subr.bf16.mxu0 %v4200
    %4897 = vmatpush1.bf16.msra.mxu0 %v4199
    %4898 = vmatprep.subr.bf16.mxu0 %v4208
    %4899 = vmatpush1.bf16.msra.mxu0 %v4207
    %4900 = vmatprep.subr.bf16.mxu0 %v4216
    %4901 = vmatpush1.bf16.msra.mxu0 %v4215
    %4902 = vmatprep.subr.bf16.mxu0 %v4224
    %4903 = vmatpush1.bf16.msra.mxu0 %v4223
    %4904 = vmatprep.subr.bf16.mxu0 %v4232
    %4905 = vmatpush1.bf16.msra.mxu0 %v4231
    %4906 = vmatprep.mubr.bf16.mxu0 %v1636
    %4907 = vmatmul.mubr.bf16.gmra.mrb[0].mxu0 %v1635
    %v4908 = vpop.f32.mrb[0].mxu0
    %v4909 = vadd.f32 %v4868, %v4908
    %v4910 = vpop.f32.mrb[0].mxu0
    %v4911 = vadd.f32 %v4870, %v4910
    %v4912 = vpop.f32.mrb[0].mxu0
    %v4913 = vpop.f32.mrb[0].mxu0
    %4914 = vdwg.mxu0
    %4915 = vmatprep.subr.bf16.mxu0 %v3730
    %4916 = vmatpush1.bf16.msra.mxu0 %v3729
    %4917 = vmatprep.subr.bf16.mxu0 %v3738
    %4918 = vmatpush1.bf16.msra.mxu0 %v3737
    %4919 = vmatprep.subr.bf16.mxu0 %v3746
    %4920 = vmatpush1.bf16.msra.mxu0 %v3745
    %4921 = vmatprep.subr.bf16.mxu0 %v3754
    %4922 = vmatpush1.bf16.msra.mxu0 %v3753
    %4923 = vmatprep.subr.bf16.mxu0 %v3762
    %4924 = vmatpush1.bf16.msra.mxu0 %v3761
    %4925 = vmatprep.subr.bf16.mxu0 %v3770
    %4926 = vmatpush1.bf16.msra.mxu0 %v3769
    %4927 = vmatprep.subr.bf16.mxu0 %v3778
    %4928 = vmatpush1.bf16.msra.mxu0 %v3777
    %4929 = vmatprep.subr.bf16.mxu0 %v3786
    %4930 = vmatpush1.bf16.msra.mxu0 %v3785
    %4931 = vmatprep.subr.bf16.mxu0 %v3794
    %4932 = vmatpush1.bf16.msra.mxu0 %v3793
    %4933 = vmatprep.subr.bf16.mxu0 %v3802
    %4934 = vmatpush1.bf16.msra.mxu0 %v3801
    %4935 = vmatprep.subr.bf16.mxu0 %v3810
    %4936 = vmatpush1.bf16.msra.mxu0 %v3809
    %4937 = vmatprep.subr.bf16.mxu0 %v3818
    %4938 = vmatpush1.bf16.msra.mxu0 %v3817
    %4939 = vmatprep.subr.bf16.mxu0 %v3826
    %4940 = vmatpush1.bf16.msra.mxu0 %v3825
    %4941 = vmatprep.subr.bf16.mxu0 %v3834
    %4942 = vmatpush1.bf16.msra.mxu0 %v3833
    %4943 = vmatprep.subr.bf16.mxu0 %v3842
    %4944 = vmatpush1.bf16.msra.mxu0 %v3841
    %4945 = vmatprep.subr.bf16.mxu0 %v3850
    %4946 = vmatpush1.bf16.msra.mxu0 %v3849
    %4947 = vmatprep.mubr.bf16.mxu0 %v1630
    %4948 = vmatmul.mubr.bf16.gmra.mrb[0].mxu0 %v1629
    %v4949 = vpop.f32.mrb[0].mxu0
    %v4950 = vadd.f32 %v2162, %v4949
    %v4951 = vpop.f32.mrb[0].mxu0
    %v4952 = vadd.f32 %v2166, %v4951
    %v4953 = vpop.f32.mrb[0].mxu0
    %v4954 = vpop.f32.mrb[0].mxu0
    %4955 = vdwg.mxu0
    %4956 = vmatprep.subr.bf16.mxu0 %v3858
    %4957 = vmatpush1.bf16.msra.mxu0 %v3857
    %4958 = vmatprep.subr.bf16.mxu0 %v3866
    %4959 = vmatpush1.bf16.msra.mxu0 %v3865
    %4960 = vmatprep.subr.bf16.mxu0 %v3874
    %4961 = vmatpush1.bf16.msra.mxu0 %v3873
    %4962 = vmatprep.subr.bf16.mxu0 %v3882
    %4963 = vmatpush1.bf16.msra.mxu0 %v3881
    %4964 = vmatprep.subr.bf16.mxu0 %v3890
    %4965 = vmatpush1.bf16.msra.mxu0 %v3889
    %4966 = vmatprep.subr.bf16.mxu0 %v3898
    %4967 = vmatpush1.bf16.msra.mxu0 %v3897
    %4968 = vmatprep.subr.bf16.mxu0 %v3906
    %4969 = vmatpush1.bf16.msra.mxu0 %v3905
    %4970 = vmatprep.subr.bf16.mxu0 %v3914
    %4971 = vmatpush1.bf16.msra.mxu0 %v3913
    %4972 = vmatprep.subr.bf16.mxu0 %v3922
    %4973 = vmatpush1.bf16.msra.mxu0 %v3921
    %4974 = vmatprep.subr.bf16.mxu0 %v3930
    %4975 = vmatpush1.bf16.msra.mxu0 %v3929
    %4976 = vmatprep.subr.bf16.mxu0 %v3938
    %4977 = vmatpush1.bf16.msra.mxu0 %v3937
    %4978 = vmatprep.subr.bf16.mxu0 %v3946
    %4979 = vmatpush1.bf16.msra.mxu0 %v3945
    %4980 = vmatprep.subr.bf16.mxu0 %v3954
    %4981 = vmatpush1.bf16.msra.mxu0 %v3953
    %4982 = vmatprep.subr.bf16.mxu0 %v3962
    %4983 = vmatpush1.bf16.msra.mxu0 %v3961
    %4984 = vmatprep.subr.bf16.mxu0 %v3970
    %4985 = vmatpush1.bf16.msra.mxu0 %v3969
    %4986 = vmatprep.subr.bf16.mxu0 %v3978
    %4987 = vmatpush1.bf16.msra.mxu0 %v3977
    %4988 = vmatprep.mubr.bf16.mxu0 %v1632
    %4989 = vmatmul.mubr.bf16.gmra.mrb[0].mxu0 %v1631
    %v4990 = vpop.f32.mrb[0].mxu0
    %v4991 = vadd.f32 %v4950, %v4990
    %v4992 = vpop.f32.mrb[0].mxu0
    %v4993 = vadd.f32 %v4952, %v4992
    %v4994 = vpop.f32.mrb[0].mxu0
    %v4995 = vpop.f32.mrb[0].mxu0
    %4996 = vdwg.mxu0
    %4997 = vmatprep.subr.bf16.mxu0 %v3986
    %4998 = vmatpush1.bf16.msra.mxu0 %v3985
    %4999 = vmatprep.subr.bf16.mxu0 %v3994
    %5000 = vmatpush1.bf16.msra.mxu0 %v3993
    %5001 = vmatprep.subr.bf16.mxu0 %v4002
    %5002 = vmatpush1.bf16.msra.mxu0 %v4001
    %5003 = vmatprep.subr.bf16.mxu0 %v4010
    %5004 = vmatpush1.bf16.msra.mxu0 %v4009
    %5005 = vmatprep.subr.bf16.mxu0 %v4018
    %5006 = vmatpush1.bf16.msra.mxu0 %v4017
    %5007 = vmatprep.subr.bf16.mxu0 %v4026
    %5008 = vmatpush1.bf16.msra.mxu0 %v4025
    %5009 = vmatprep.subr.bf16.mxu0 %v4034
    %5010 = vmatpush1.bf16.msra.mxu0 %v4033
    %5011 = vmatprep.subr.bf16.mxu0 %v4042
    %5012 = vmatpush1.bf16.msra.mxu0 %v4041
    %5013 = vmatprep.subr.bf16.mxu0 %v4050
    %5014 = vmatpush1.bf16.msra.mxu0 %v4049
    %5015 = vmatprep.subr.bf16.mxu0 %v4058
    %5016 = vmatpush1.bf16.msra.mxu0 %v4057
    %5017 = vmatprep.subr.bf16.mxu0 %v4066
    %5018 = vmatpush1.bf16.msra.mxu0 %v4065
    %5019 = vmatprep.subr.bf16.mxu0 %v4074
    %5020 = vmatpush1.bf16.msra.mxu0 %v4073
    %5021 = vmatprep.subr.bf16.mxu0 %v4082
    %5022 = vmatpush1.bf16.msra.mxu0 %v4081
    %5023 = vmatprep.subr.bf16.mxu0 %v4090
    %5024 = vmatpush1.bf16.msra.mxu0 %v4089
    %5025 = vmatprep.subr.bf16.mxu0 %v4098
    %5026 = vmatpush1.bf16.msra.mxu0 %v4097
    %5027 = vmatprep.subr.bf16.mxu0 %v4106
    %5028 = vmatpush1.bf16.msra.mxu0 %v4105
    %5029 = vmatprep.mubr.bf16.mxu0 %v1634
    %5030 = vmatmul.mubr.bf16.gmra.mrb[0].mxu0 %v1633
    %v5031 = vpop.f32.mrb[0].mxu0
    %v5032 = vadd.f32 %v4991, %v5031
    %v5033 = vpop.f32.mrb[0].mxu0
    %v5034 = vadd.f32 %v4993, %v5033
    %v5035 = vpop.f32.mrb[0].mxu0
    %v5036 = vpop.f32.mrb[0].mxu0
    %5037 = vdwg.mxu0
    %5038 = vmatprep.subr.bf16.mxu0 %v4114
    %5039 = vmatpush1.bf16.msra.mxu0 %v4113
    %5040 = vmatprep.subr.bf16.mxu0 %v4122
    %5041 = vmatpush1.bf16.msra.mxu0 %v4121
    %5042 = vmatprep.subr.bf16.mxu0 %v4130
    %5043 = vmatpush1.bf16.msra.mxu0 %v4129
    %5044 = vmatprep.subr.bf16.mxu0 %v4138
    %5045 = vmatpush1.bf16.msra.mxu0 %v4137
    %5046 = vmatprep.subr.bf16.mxu0 %v4146
    %5047 = vmatpush1.bf16.msra.mxu0 %v4145
    %5048 = vmatprep.subr.bf16.mxu0 %v4154
    %5049 = vmatpush1.bf16.msra.mxu0 %v4153
    %5050 = vmatprep.subr.bf16.mxu0 %v4162
    %5051 = vmatpush1.bf16.msra.mxu0 %v4161
    %5052 = vmatprep.subr.bf16.mxu0 %v4170
    %5053 = vmatpush1.bf16.msra.mxu0 %v4169
    %5054 = vmatprep.subr.bf16.mxu0 %v4178
    %5055 = vmatpush1.bf16.msra.mxu0 %v4177
    %5056 = vmatprep.subr.bf16.mxu0 %v4186
    %5057 = vmatpush1.bf16.msra.mxu0 %v4185
    %5058 = vmatprep.subr.bf16.mxu0 %v4194
    %5059 = vmatpush1.bf16.msra.mxu0 %v4193
    %5060 = vmatprep.subr.bf16.mxu0 %v4202
    %5061 = vmatpush1.bf16.msra.mxu0 %v4201
    %5062 = vmatprep.subr.bf16.mxu0 %v4210
    %5063 = vmatpush1.bf16.msra.mxu0 %v4209
    %5064 = vmatprep.subr.bf16.mxu0 %v4218
    %5065 = vmatpush1.bf16.msra.mxu0 %v4217
    %5066 = vmatprep.subr.bf16.mxu0 %v4226
    %5067 = vmatpush1.bf16.msra.mxu0 %v4225
    %5068 = vmatprep.subr.bf16.mxu0 %v4234
    %5069 = vmatpush1.bf16.msra.mxu0 %v4233
    %5070 = vmatprep.mubr.bf16.mxu0 %v1636
    %5071 = vmatmul.mubr.bf16.gmra.mrb[0].mxu0 %v1635
    %v5072 = vpop.f32.mrb[0].mxu0
    %v5073 = vadd.f32 %v5032, %v5072
    %v5074 = vpop.f32.mrb[0].mxu0
    %v5075 = vadd.f32 %v5034, %v5074
    %v5076 = vpop.f32.mrb[0].mxu0
    %v5077 = vpop.f32.mrb[0].mxu0
    %5078 = vdwg.mxu0
    %5079 = vmatprep.subr.bf16.mxu0 %v3732
    %5080 = vmatpush1.bf16.msra.mxu0 %v3731
    %5081 = vmatprep.subr.bf16.mxu0 %v3740
    %5082 = vmatpush1.bf16.msra.mxu0 %v3739
    %5083 = vmatprep.subr.bf16.mxu0 %v3748
    %5084 = vmatpush1.bf16.msra.mxu0 %v3747
    %5085 = vmatprep.subr.bf16.mxu0 %v3756
    %5086 = vmatpush1.bf16.msra.mxu0 %v3755
    %5087 = vmatprep.subr.bf16.mxu0 %v3764
    %5088 = vmatpush1.bf16.msra.mxu0 %v3763
    %5089 = vmatprep.subr.bf16.mxu0 %v3772
    %5090 = vmatpush1.bf16.msra.mxu0 %v3771
    %5091 = vmatprep.subr.bf16.mxu0 %v3780
    %5092 = vmatpush1.bf16.msra.mxu0 %v3779
    %5093 = vmatprep.subr.bf16.mxu0 %v3788
    %5094 = vmatpush1.bf16.msra.mxu0 %v3787
    %5095 = vmatprep.subr.bf16.mxu0 %v3796
    %5096 = vmatpush1.bf16.msra.mxu0 %v3795
    %5097 = vmatprep.subr.bf16.mxu0 %v3804
    %5098 = vmatpush1.bf16.msra.mxu0 %v3803
    %5099 = vmatprep.subr.bf16.mxu0 %v3812
    %5100 = vmatpush1.bf16.msra.mxu0 %v3811
    %5101 = vmatprep.subr.bf16.mxu0 %v3820
    %5102 = vmatpush1.bf16.msra.mxu0 %v3819
    %5103 = vmatprep.subr.bf16.mxu0 %v3828
    %5104 = vmatpush1.bf16.msra.mxu0 %v3827
    %5105 = vmatprep.subr.bf16.mxu0 %v3836
    %5106 = vmatpush1.bf16.msra.mxu0 %v3835
    %5107 = vmatprep.subr.bf16.mxu0 %v3844
    %5108 = vmatpush1.bf16.msra.mxu0 %v3843
    %5109 = vmatprep.subr.bf16.mxu0 %v3852
    %5110 = vmatpush1.bf16.msra.mxu0 %v3851
    %5111 = vmatprep.mubr.bf16.mxu0 %v1630
    %5112 = vmatmul.mubr.bf16.gmra.mrb[0].mxu0 %v1629
    %v5113 = vpop.f32.mrb[0].mxu0
    %v5114 = vadd.f32 %v2170, %v5113
    %v5115 = vpop.f32.mrb[0].mxu0
    %v5116 = vadd.f32 %v2174, %v5115
    %v5117 = vpop.f32.mrb[0].mxu0
    %v5118 = vpop.f32.mrb[0].mxu0
    %5119 = vdwg.mxu0
    %5120 = vmatprep.subr.bf16.mxu0 %v3860
    %5121 = vmatpush1.bf16.msra.mxu0 %v3859
    %5122 = vmatprep.subr.bf16.mxu0 %v3868
    %5123 = vmatpush1.bf16.msra.mxu0 %v3867
    %5124 = vmatprep.subr.bf16.mxu0 %v3876
    %5125 = vmatpush1.bf16.msra.mxu0 %v3875
    %5126 = vmatprep.subr.bf16.mxu0 %v3884
    %5127 = vmatpush1.bf16.msra.mxu0 %v3883
    %5128 = vmatprep.subr.bf16.mxu0 %v3892
    %5129 = vmatpush1.bf16.msra.mxu0 %v3891
    %5130 = vmatprep.subr.bf16.mxu0 %v3900
    %5131 = vmatpush1.bf16.msra.mxu0 %v3899
    %5132 = vmatprep.subr.bf16.mxu0 %v3908
    %5133 = vmatpush1.bf16.msra.mxu0 %v3907
    %5134 = vmatprep.subr.bf16.mxu0 %v3916
    %5135 = vmatpush1.bf16.msra.mxu0 %v3915
    %5136 = vmatprep.subr.bf16.mxu0 %v3924
    %5137 = vmatpush1.bf16.msra.mxu0 %v3923
    %5138 = vmatprep.subr.bf16.mxu0 %v3932
    %5139 = vmatpush1.bf16.msra.mxu0 %v3931
    %5140 = vmatprep.subr.bf16.mxu0 %v3940
    %5141 = vmatpush1.bf16.msra.mxu0 %v3939
    %5142 = vmatprep.subr.bf16.mxu0 %v3948
    %5143 = vmatpush1.bf16.msra.mxu0 %v3947
    %5144 = vmatprep.subr.bf16.mxu0 %v3956
    %5145 = vmatpush1.bf16.msra.mxu0 %v3955
    %5146 = vmatprep.subr.bf16.mxu0 %v3964
    %5147 = vmatpush1.bf16.msra.mxu0 %v3963
    %5148 = vmatprep.subr.bf16.mxu0 %v3972
    %5149 = vmatpush1.bf16.msra.mxu0 %v3971
    %5150 = vmatprep.subr.bf16.mxu0 %v3980
    %5151 = vmatpush1.bf16.msra.mxu0 %v3979
    %5152 = vmatprep.mubr.bf16.mxu0 %v1632
    %5153 = vmatmul.mubr.bf16.gmra.mrb[0].mxu0 %v1631
    %v5154 = vpop.f32.mrb[0].mxu0
    %v5155 = vadd.f32 %v5114, %v5154
    %v5156 = vpop.f32.mrb[0].mxu0
    %v5157 = vadd.f32 %v5116, %v5156
    %v5158 = vpop.f32.mrb[0].mxu0
    %v5159 = vpop.f32.mrb[0].mxu0
    %5160 = vdwg.mxu0
    %5161 = vmatprep.subr.bf16.mxu0 %v3988
    %5162 = vmatpush1.bf16.msra.mxu0 %v3987
    %5163 = vmatprep.subr.bf16.mxu0 %v3996
    %5164 = vmatpush1.bf16.msra.mxu0 %v3995
    %5165 = vmatprep.subr.bf16.mxu0 %v4004
    %5166 = vmatpush1.bf16.msra.mxu0 %v4003
    %5167 = vmatprep.subr.bf16.mxu0 %v4012
    %5168 = vmatpush1.bf16.msra.mxu0 %v4011
    %5169 = vmatprep.subr.bf16.mxu0 %v4020
    %5170 = vmatpush1.bf16.msra.mxu0 %v4019
    %5171 = vmatprep.subr.bf16.mxu0 %v4028
    %5172 = vmatpush1.bf16.msra.mxu0 %v4027
    %5173 = vmatprep.subr.bf16.mxu0 %v4036
    %5174 = vmatpush1.bf16.msra.mxu0 %v4035
    %5175 = vmatprep.subr.bf16.mxu0 %v4044
    %5176 = vmatpush1.bf16.msra.mxu0 %v4043
    %5177 = vmatprep.subr.bf16.mxu0 %v4052
    %5178 = vmatpush1.bf16.msra.mxu0 %v4051
    %5179 = vmatprep.subr.bf16.mxu0 %v4060
    %5180 = vmatpush1.bf16.msra.mxu0 %v4059
    %5181 = vmatprep.subr.bf16.mxu0 %v4068
    %5182 = vmatpush1.bf16.msra.mxu0 %v4067
    %5183 = vmatprep.subr.bf16.mxu0 %v4076
    %5184 = vmatpush1.bf16.msra.mxu0 %v4075
    %5185 = vmatprep.subr.bf16.mxu0 %v4084
    %5186 = vmatpush1.bf16.msra.mxu0 %v4083
    %5187 = vmatprep.subr.bf16.mxu0 %v4092
    %5188 = vmatpush1.bf16.msra.mxu0 %v4091
    %5189 = vmatprep.subr.bf16.mxu0 %v4100
    %5190 = vmatpush1.bf16.msra.mxu0 %v4099
    %5191 = vmatprep.subr.bf16.mxu0 %v4108
    %5192 = vmatpush1.bf16.msra.mxu0 %v4107
    %5193 = vmatprep.mubr.bf16.mxu0 %v1634
    %5194 = vmatmul.mubr.bf16.gmra.mrb[0].mxu0 %v1633
    %v5195 = vpop.f32.mrb[0].mxu0
    %v5196 = vadd.f32 %v5155, %v5195
    %v5197 = vpop.f32.mrb[0].mxu0
    %v5198 = vadd.f32 %v5157, %v5197
    %v5199 = vpop.f32.mrb[0].mxu0
    %v5200 = vpop.f32.mrb[0].mxu0
    %5201 = vdwg.mxu0
    %5202 = vmatprep.subr.bf16.mxu0 %v4116
    %5203 = vmatpush1.bf16.msra.mxu0 %v4115
    %5204 = vmatprep.subr.bf16.mxu0 %v4124
    %5205 = vmatpush1.bf16.msra.mxu0 %v4123
    %5206 = vmatprep.subr.bf16.mxu0 %v4132
    %5207 = vmatpush1.bf16.msra.mxu0 %v4131
    %5208 = vmatprep.subr.bf16.mxu0 %v4140
    %5209 = vmatpush1.bf16.msra.mxu0 %v4139
    %5210 = vmatprep.subr.bf16.mxu0 %v4148
    %5211 = vmatpush1.bf16.msra.mxu0 %v4147
    %5212 = vmatprep.subr.bf16.mxu0 %v4156
    %5213 = vmatpush1.bf16.msra.mxu0 %v4155
    %5214 = vmatprep.subr.bf16.mxu0 %v4164
    %5215 = vmatpush1.bf16.msra.mxu0 %v4163
    %5216 = vmatprep.subr.bf16.mxu0 %v4172
    %5217 = vmatpush1.bf16.msra.mxu0 %v4171
    %5218 = vmatprep.subr.bf16.mxu0 %v4180
    %5219 = vmatpush1.bf16.msra.mxu0 %v4179
    %5220 = vmatprep.subr.bf16.mxu0 %v4188
    %5221 = vmatpush1.bf16.msra.mxu0 %v4187
    %5222 = vmatprep.subr.bf16.mxu0 %v4196
    %5223 = vmatpush1.bf16.msra.mxu0 %v4195
    %5224 = vmatprep.subr.bf16.mxu0 %v4204
    %5225 = vmatpush1.bf16.msra.mxu0 %v4203
    %5226 = vmatprep.subr.bf16.mxu0 %v4212
    %5227 = vmatpush1.bf16.msra.mxu0 %v4211
    %5228 = vmatprep.subr.bf16.mxu0 %v4220
    %5229 = vmatpush1.bf16.msra.mxu0 %v4219
    %5230 = vmatprep.subr.bf16.mxu0 %v4228
    %5231 = vmatpush1.bf16.msra.mxu0 %v4227
    %5232 = vmatprep.subr.bf16.mxu0 %v4236
    %5233 = vmatpush1.bf16.msra.mxu0 %v4235
    %5234 = vmatprep.mubr.bf16.mxu0 %v1636
    %5235 = vmatmul.mubr.bf16.gmra.mrb[0].mxu0 %v1635
    %v5236 = vpop.f32.mrb[0].mxu0
    %v5237 = vadd.f32 %v5196, %v5236
    %v5238 = vpop.f32.mrb[0].mxu0
    %v5239 = vadd.f32 %v5198, %v5238
    %v5240 = vpop.f32.mrb[0].mxu0
    %v5241 = vpop.f32.mrb[0].mxu0
    %5242 = vdwg.mxu0
    %5243 = vmatprep.subr.bf16.mxu0 %v3734
    %5244 = vmatpush1.bf16.msra.mxu0 %v3733
    %5245 = vmatprep.subr.bf16.mxu0 %v3742
    %5246 = vmatpush1.bf16.msra.mxu0 %v3741
    %5247 = vmatprep.subr.bf16.mxu0 %v3750
    %5248 = vmatpush1.bf16.msra.mxu0 %v3749
    %5249 = vmatprep.subr.bf16.mxu0 %v3758
    %5250 = vmatpush1.bf16.msra.mxu0 %v3757
    %5251 = vmatprep.subr.bf16.mxu0 %v3766
    %5252 = vmatpush1.bf16.msra.mxu0 %v3765
    %5253 = vmatprep.subr.bf16.mxu0 %v3774
    %5254 = vmatpush1.bf16.msra.mxu0 %v3773
    %5255 = vmatprep.subr.bf16.mxu0 %v3782
    %5256 = vmatpush1.bf16.msra.mxu0 %v3781
    %5257 = vmatprep.subr.bf16.mxu0 %v3790
    %5258 = vmatpush1.bf16.msra.mxu0 %v3789
    %5259 = vmatprep.subr.bf16.mxu0 %v3798
    %5260 = vmatpush1.bf16.msra.mxu0 %v3797
    %5261 = vmatprep.subr.bf16.mxu0 %v3806
    %5262 = vmatpush1.bf16.msra.mxu0 %v3805
    %5263 = vmatprep.subr.bf16.mxu0 %v3814
    %5264 = vmatpush1.bf16.msra.mxu0 %v3813
    %5265 = vmatprep.subr.bf16.mxu0 %v3822
    %5266 = vmatpush1.bf16.msra.mxu0 %v3821
    %5267 = vmatprep.subr.bf16.mxu0 %v3830
    %5268 = vmatpush1.bf16.msra.mxu0 %v3829
    %5269 = vmatprep.subr.bf16.mxu0 %v3838
    %5270 = vmatpush1.bf16.msra.mxu0 %v3837
    %5271 = vmatprep.subr.bf16.mxu0 %v3846
    %5272 = vmatpush1.bf16.msra.mxu0 %v3845
    %5273 = vmatprep.subr.bf16.mxu0 %v3854
    %5274 = vmatpush1.bf16.msra.mxu0 %v3853
    %5275 = vmatprep.mubr.bf16.mxu0 %v1630
    %5276 = vmatmul.mubr.bf16.gmra.mrb[0].mxu0 %v1629
    %v5277 = vpop.f32.mrb[0].mxu0
    %v5278 = vadd.f32 %v2178, %v5277
    %v5279 = vpop.f32.mrb[0].mxu0
    %v5280 = vadd.f32 %v2182, %v5279
    %v5281 = vpop.f32.mrb[0].mxu0
    %v5282 = vpop.f32.mrb[0].mxu0
    %5283 = vdwg.mxu0
    %5284 = vmatprep.subr.bf16.mxu0 %v3862
    %5285 = vmatpush1.bf16.msra.mxu0 %v3861
    %5286 = vmatprep.subr.bf16.mxu0 %v3870
    %5287 = vmatpush1.bf16.msra.mxu0 %v3869
    %5288 = vmatprep.subr.bf16.mxu0 %v3878
    %5289 = vmatpush1.bf16.msra.mxu0 %v3877
    %5290 = vmatprep.subr.bf16.mxu0 %v3886
    %5291 = vmatpush1.bf16.msra.mxu0 %v3885
    %5292 = vmatprep.subr.bf16.mxu0 %v3894
    %5293 = vmatpush1.bf16.msra.mxu0 %v3893
    %5294 = vmatprep.subr.bf16.mxu0 %v3902
    %5295 = vmatpush1.bf16.msra.mxu0 %v3901
    %5296 = vmatprep.subr.bf16.mxu0 %v3910
    %5297 = vmatpush1.bf16.msra.mxu0 %v3909
    %5298 = vmatprep.subr.bf16.mxu0 %v3918
    %5299 = vmatpush1.bf16.msra.mxu0 %v3917
    %5300 = vmatprep.subr.bf16.mxu0 %v3926
    %5301 = vmatpush1.bf16.msra.mxu0 %v3925
    %5302 = vmatprep.subr.bf16.mxu0 %v3934
    %5303 = vmatpush1.bf16.msra.mxu0 %v3933
    %5304 = vmatprep.subr.bf16.mxu0 %v3942
    %5305 = vmatpush1.bf16.msra.mxu0 %v3941
    %5306 = vmatprep.subr.bf16.mxu0 %v3950
    %5307 = vmatpush1.bf16.msra.mxu0 %v3949
    %5308 = vmatprep.subr.bf16.mxu0 %v3958
    %5309 = vmatpush1.bf16.msra.mxu0 %v3957
    %5310 = vmatprep.subr.bf16.mxu0 %v3966
    %5311 = vmatpush1.bf16.msra.mxu0 %v3965
    %5312 = vmatprep.subr.bf16.mxu0 %v3974
    %5313 = vmatpush1.bf16.msra.mxu0 %v3973
    %5314 = vmatprep.subr.bf16.mxu0 %v3982
    %5315 = vmatpush1.bf16.msra.mxu0 %v3981
    %5316 = vmatprep.mubr.bf16.mxu0 %v1632
    %5317 = vmatmul.mubr.bf16.gmra.mrb[0].mxu0 %v1631
    %v5318 = vpop.f32.mrb[0].mxu0
    %v5319 = vadd.f32 %v5278, %v5318
    %v5320 = vpop.f32.mrb[0].mxu0
    %v5321 = vadd.f32 %v5280, %v5320
    %v5322 = vpop.f32.mrb[0].mxu0
    %v5323 = vpop.f32.mrb[0].mxu0
    %5324 = vdwg.mxu0
    %5325 = vmatprep.subr.bf16.mxu0 %v3990
    %5326 = vmatpush1.bf16.msra.mxu0 %v3989
    %5327 = vmatprep.subr.bf16.mxu0 %v3998
    %5328 = vmatpush1.bf16.msra.mxu0 %v3997
    %5329 = vmatprep.subr.bf16.mxu0 %v4006
    %5330 = vmatpush1.bf16.msra.mxu0 %v4005
    %5331 = vmatprep.subr.bf16.mxu0 %v4014
    %5332 = vmatpush1.bf16.msra.mxu0 %v4013
    %5333 = vmatprep.subr.bf16.mxu0 %v4022
    %5334 = vmatpush1.bf16.msra.mxu0 %v4021
    %5335 = vmatprep.subr.bf16.mxu0 %v4030
    %5336 = vmatpush1.bf16.msra.mxu0 %v4029
    %5337 = vmatprep.subr.bf16.mxu0 %v4038
    %5338 = vmatpush1.bf16.msra.mxu0 %v4037
    %5339 = vmatprep.subr.bf16.mxu0 %v4046
    %5340 = vmatpush1.bf16.msra.mxu0 %v4045
    %5341 = vmatprep.subr.bf16.mxu0 %v4054
    %5342 = vmatpush1.bf16.msra.mxu0 %v4053
    %5343 = vmatprep.subr.bf16.mxu0 %v4062
    %5344 = vmatpush1.bf16.msra.mxu0 %v4061
    %5345 = vmatprep.subr.bf16.mxu0 %v4070
    %5346 = vmatpush1.bf16.msra.mxu0 %v4069
    %5347 = vmatprep.subr.bf16.mxu0 %v4078
    %5348 = vmatpush1.bf16.msra.mxu0 %v4077
    %5349 = vmatprep.subr.bf16.mxu0 %v4086
    %5350 = vmatpush1.bf16.msra.mxu0 %v4085
    %5351 = vmatprep.subr.bf16.mxu0 %v4094
    %5352 = vmatpush1.bf16.msra.mxu0 %v4093
    %5353 = vmatprep.subr.bf16.mxu0 %v4102
    %5354 = vmatpush1.bf16.msra.mxu0 %v4101
    %5355 = vmatprep.subr.bf16.mxu0 %v4110
    %5356 = vmatpush1.bf16.msra.mxu0 %v4109
    %5357 = vmatprep.mubr.bf16.mxu0 %v1634
    %5358 = vmatmul.mubr.bf16.gmra.mrb[0].mxu0 %v1633
    %v5359 = vpop.f32.mrb[0].mxu0
    %v5360 = vadd.f32 %v5319, %v5359
    %v5361 = vpop.f32.mrb[0].mxu0
    %v5362 = vadd.f32 %v5321, %v5361
    %v5363 = vpop.f32.mrb[0].mxu0
    %v5364 = vpop.f32.mrb[0].mxu0
    %5365 = vdwg.mxu0
    %5366 = vmatprep.subr.bf16.mxu0 %v4118
    %5367 = vmatpush1.bf16.msra.mxu0 %v4117
    %5368 = vmatprep.subr.bf16.mxu0 %v4126
    %5369 = vmatpush1.bf16.msra.mxu0 %v4125
    %5370 = vmatprep.subr.bf16.mxu0 %v4134
    %5371 = vmatpush1.bf16.msra.mxu0 %v4133
    %5372 = vmatprep.subr.bf16.mxu0 %v4142
    %5373 = vmatpush1.bf16.msra.mxu0 %v4141
    %5374 = vmatprep.subr.bf16.mxu0 %v4150
    %5375 = vmatpush1.bf16.msra.mxu0 %v4149
    %5376 = vmatprep.subr.bf16.mxu0 %v4158
    %5377 = vmatpush1.bf16.msra.mxu0 %v4157
    %5378 = vmatprep.subr.bf16.mxu0 %v4166
    %5379 = vmatpush1.bf16.msra.mxu0 %v4165
    %5380 = vmatprep.subr.bf16.mxu0 %v4174
    %5381 = vmatpush1.bf16.msra.mxu0 %v4173
    %5382 = vmatprep.subr.bf16.mxu0 %v4182
    %5383 = vmatpush1.bf16.msra.mxu0 %v4181
    %5384 = vmatprep.subr.bf16.mxu0 %v4190
    %5385 = vmatpush1.bf16.msra.mxu0 %v4189
    %5386 = vmatprep.subr.bf16.mxu0 %v4198
    %5387 = vmatpush1.bf16.msra.mxu0 %v4197
    %5388 = vmatprep.subr.bf16.mxu0 %v4206
    %5389 = vmatpush1.bf16.msra.mxu0 %v4205
    %5390 = vmatprep.subr.bf16.mxu0 %v4214
    %5391 = vmatpush1.bf16.msra.mxu0 %v4213
    %5392 = vmatprep.subr.bf16.mxu0 %v4222
    %5393 = vmatpush1.bf16.msra.mxu0 %v4221
    %5394 = vmatprep.subr.bf16.mxu0 %v4230
    %5395 = vmatpush1.bf16.msra.mxu0 %v4229
    %5396 = vmatprep.subr.bf16.mxu0 %v4238
    %5397 = vmatpush1.bf16.msra.mxu0 %v4237
    %5398 = vmatprep.mubr.bf16.mxu0 %v1636
    %5399 = vmatmul.mubr.bf16.gmra.mrb[0].mxu0 %v1635
    %v5400 = vpop.f32.mrb[0].mxu0
    %v5401 = vadd.f32 %v5360, %v5400
    %v5402 = vpop.f32.mrb[0].mxu0
    %v5403 = vadd.f32 %v5362, %v5402
    %v5404 = vpop.f32.mrb[0].mxu0
    %v5405 = vpop.f32.mrb[0].mxu0
    %5406 = vdwg.mxu0
    %v5407 = vmax.f32 %v4909, 0.0
    %v5408 = vmax.f32 %v4911, 0.0
    %v5409 = vmax.f32 %v5073, 0.0
    %v5410 = vmax.f32 %v5075, 0.0
    %v5411 = vmax.f32 %v5237, 0.0
    %v5412 = vmax.f32 %v5239, 0.0
    %v5413 = vmax.f32 %v5401, 0.0
    %v5414 = vmax.f32 %v5403, 0.0
    %v5415 = vpack.c.bf16 %v5407, %v5407
    %v5416 = vpack.c.bf16 %v5408, %v5408
    %v5417 = vpack.c.bf16 %v5409, %v5409
    %v5418 = vpack.c.bf16 %v5410, %v5410
    %v5419 = vpack.c.bf16 %v5411, %v5411
    %v5420 = vpack.c.bf16 %v5412, %v5412
    %v5421 = vpack.c.bf16 %v5413, %v5413
    %v5422 = vpack.c.bf16 %v5414, %v5414
    %v5423 = vld [vmem:[#allocation10] sm:$0xff]
    %v5424 = vld [vmem:[#allocation10 + $0x8] sm:$0xf]
    %v5425 = vld [vmem:[#allocation10 + $0xc] sm:$0xff]
    %v5426 = vld [vmem:[#allocation10 + $0x14] sm:$0xf]
    %v5427 = vld [vmem:[#allocation10 + $0x18] sm:$0xff]
    %v5428 = vld [vmem:[#allocation10 + $0x20] sm:$0xf]
    %v5429 = vld [vmem:[#allocation10 + $0x24] sm:$0xff]
    %v5430 = vld [vmem:[#allocation10 + $0x2c] sm:$0xf]
    %v5431 = vld [vmem:[#allocation10 + $0x30] sm:$0xff]
    %v5432 = vld [vmem:[#allocation10 + $0x38] sm:$0xf]
    %v5433 = vld [vmem:[#allocation10 + $0x3c] sm:$0xff]
    %v5434 = vld [vmem:[#allocation10 + $0x44] sm:$0xf]
    %v5435 = vld [vmem:[#allocation10 + $0x48] sm:$0xff]
    %v5436 = vld [vmem:[#allocation10 + $0x50] sm:$0xf]
    %v5437 = vld [vmem:[#allocation10 + $0x54] sm:$0xff]
    %v5438 = vld [vmem:[#allocation10 + $0x5c] sm:$0xf]
    %v5439 = vld [vmem:[#allocation10 + $0x60] sm:$0xff]
    %v5440 = vld [vmem:[#allocation10 + $0x68] sm:$0xf]
    %v5441 = vld [vmem:[#allocation10 + $0x6c] sm:$0xff]
    %v5442 = vld [vmem:[#allocation10 + $0x74] sm:$0xf]
    %v5443 = vld [vmem:[#allocation10 + $0x78] sm:$0xff]
    %v5444 = vld [vmem:[#allocation10 + $0x80] sm:$0xf]
    %v5445 = vld [vmem:[#allocation10 + $0x84] sm:$0xff]
    %v5446 = vld [vmem:[#allocation10 + $0x8c] sm:$0xf]
    %v5447 = vld [vmem:[#allocation10 + $0x90] sm:$0xff]
    %v5448 = vld [vmem:[#allocation10 + $0x98] sm:$0xf]
    %v5449 = vld [vmem:[#allocation10 + $0x9c] sm:$0xff]
    %v5450 = vld [vmem:[#allocation10 + $0xa4] sm:$0xf]
    %v5451 = vld [vmem:[#allocation10 + $0xa8] sm:$0xff]
    %v5452 = vld [vmem:[#allocation10 + $0xb0] sm:$0xf]
    %v5453 = vld [vmem:[#allocation10 + $0xb4] sm:$0xff]
    %v5454 = vld [vmem:[#allocation10 + $0xbc] sm:$0xf]
    %v5455 = vld [vmem:[#allocation10 + $0xc0] sm:$0xff]
    %v5456 = vld [vmem:[#allocation10 + $0xc8] sm:$0xf]
    %v5457 = vld [vmem:[#allocation10 + $0xcc] sm:$0xff]
    %v5458 = vld [vmem:[#allocation10 + $0xd4] sm:$0xf]
    %v5459 = vld [vmem:[#allocation10 + $0xd8] sm:$0xff]
    %v5460 = vld [vmem:[#allocation10 + $0xe0] sm:$0xf]
    %v5461 = vld [vmem:[#allocation10 + $0xe4] sm:$0xff]
    %v5462 = vld [vmem:[#allocation10 + $0xec] sm:$0xf]
    %v5463 = vld [vmem:[#allocation10 + $0xf0] sm:$0xff]
    %v5464 = vld [vmem:[#allocation10 + $0xf8] sm:$0xf]
    %v5465 = vld [vmem:[#allocation10 + $0xfc] sm:$0xff]
    %v5466 = vld [vmem:[#allocation10 + $0x104] sm:$0xf]
    %v5467 = vld [vmem:[#allocation10 + $0x108] sm:$0xff]
    %v5468 = vld [vmem:[#allocation10 + $0x110] sm:$0xf]
    %v5469 = vld [vmem:[#allocation10 + $0x114] sm:$0xff]
    %v5470 = vld [vmem:[#allocation10 + $0x11c] sm:$0xf]
    %v5471 = vld [vmem:[#allocation10 + $0x120] sm:$0xff]
    %v5472 = vld [vmem:[#allocation10 + $0x128] sm:$0xf]
    %v5473 = vld [vmem:[#allocation10 + $0x12c] sm:$0xff]
    %v5474 = vld [vmem:[#allocation10 + $0x134] sm:$0xf]
    %v5475 = vld [vmem:[#allocation10 + $0x138] sm:$0xff]
    %v5476 = vld [vmem:[#allocation10 + $0x140] sm:$0xf]
    %v5477 = vld [vmem:[#allocation10 + $0x144] sm:$0xff]
    %v5478 = vld [vmem:[#allocation10 + $0x14c] sm:$0xf]
    %v5479 = vld [vmem:[#allocation10 + $0x150] sm:$0xff]
    %v5480 = vld [vmem:[#allocation10 + $0x158] sm:$0xf]
    %v5481 = vld [vmem:[#allocation10 + $0x15c] sm:$0xff]
    %v5482 = vld [vmem:[#allocation10 + $0x164] sm:$0xf]
    %v5483 = vld [vmem:[#allocation10 + $0x168] sm:$0xff]
    %v5484 = vld [vmem:[#allocation10 + $0x170] sm:$0xf]
    %v5485 = vld [vmem:[#allocation10 + $0x174] sm:$0xff]
    %v5486 = vld [vmem:[#allocation10 + $0x17c] sm:$0xf]
    %v5487 = vld [vmem:[#allocation10 + $0x180] sm:$0xff]
    %v5488 = vld [vmem:[#allocation10 + $0x188] sm:$0xf]
    %v5489 = vld [vmem:[#allocation10 + $0x18c] sm:$0xff]
    %v5490 = vld [vmem:[#allocation10 + $0x194] sm:$0xf]
    %v5491 = vld [vmem:[#allocation10 + $0x198] sm:$0xff]
    %v5492 = vld [vmem:[#allocation10 + $0x1a0] sm:$0xf]
    %v5493 = vld [vmem:[#allocation10 + $0x1a4] sm:$0xff]
    %v5494 = vld [vmem:[#allocation10 + $0x1ac] sm:$0xf]
    %v5495 = vld [vmem:[#allocation10 + $0x1b0] sm:$0xff]
    %v5496 = vld [vmem:[#allocation10 + $0x1b8] sm:$0xf]
    %v5497 = vld [vmem:[#allocation10 + $0x1bc] sm:$0xff]
    %v5498 = vld [vmem:[#allocation10 + $0x1c4] sm:$0xf]
    %v5499 = vld [vmem:[#allocation10 + $0x1c8] sm:$0xff]
    %v5500 = vld [vmem:[#allocation10 + $0x1d0] sm:$0xf]
    %v5501 = vld [vmem:[#allocation10 + $0x1d4] sm:$0xff]
    %v5502 = vld [vmem:[#allocation10 + $0x1dc] sm:$0xf]
    %v5503 = vld [vmem:[#allocation10 + $0x1e0] sm:$0xff]
    %v5504 = vld [vmem:[#allocation10 + $0x1e8] sm:$0xf]
    %v5505 = vld [vmem:[#allocation10 + $0x1ec] sm:$0xff]
    %v5506 = vld [vmem:[#allocation10 + $0x1f4] sm:$0xf]
    %v5507 = vld [vmem:[#allocation10 + $0x1f8] sm:$0xff]
    %v5508 = vld [vmem:[#allocation10 + $0x200] sm:$0xf]
    %v5509 = vld [vmem:[#allocation10 + $0x204] sm:$0xff]
    %v5510 = vld [vmem:[#allocation10 + $0x20c] sm:$0xf]
    %v5511 = vld [vmem:[#allocation10 + $0x210] sm:$0xff]
    %v5512 = vld [vmem:[#allocation10 + $0x218] sm:$0xf]
    %v5513 = vld [vmem:[#allocation10 + $0x21c] sm:$0xff]
    %v5514 = vld [vmem:[#allocation10 + $0x224] sm:$0xf]
    %v5515 = vld [vmem:[#allocation10 + $0x228] sm:$0xff]
    %v5516 = vld [vmem:[#allocation10 + $0x230] sm:$0xf]
    %v5517 = vld [vmem:[#allocation10 + $0x234] sm:$0xff]
    %v5518 = vld [vmem:[#allocation10 + $0x23c] sm:$0xf]
    %v5519 = vld [vmem:[#allocation10 + $0x240] sm:$0xff]
    %v5520 = vld [vmem:[#allocation10 + $0x248] sm:$0xf]
    %v5521 = vld [vmem:[#allocation10 + $0x24c] sm:$0xff]
    %v5522 = vld [vmem:[#allocation10 + $0x254] sm:$0xf]
    %v5523 = vld [vmem:[#allocation10 + $0x258] sm:$0xff]
    %v5524 = vld [vmem:[#allocation10 + $0x260] sm:$0xf]
    %v5525 = vld [vmem:[#allocation10 + $0x264] sm:$0xff]
    %v5526 = vld [vmem:[#allocation10 + $0x26c] sm:$0xf]
    %v5527 = vld [vmem:[#allocation10 + $0x270] sm:$0xff]
    %v5528 = vld [vmem:[#allocation10 + $0x278] sm:$0xf]
    %v5529 = vld [vmem:[#allocation10 + $0x27c] sm:$0xff]
    %v5530 = vld [vmem:[#allocation10 + $0x284] sm:$0xf]
    %v5531 = vld [vmem:[#allocation10 + $0x288] sm:$0xff]
    %v5532 = vld [vmem:[#allocation10 + $0x290] sm:$0xf]
    %v5533 = vld [vmem:[#allocation10 + $0x294] sm:$0xff]
    %v5534 = vld [vmem:[#allocation10 + $0x29c] sm:$0xf]
    %v5535 = vld [vmem:[#allocation10 + $0x2a0] sm:$0xff]
    %v5536 = vld [vmem:[#allocation10 + $0x2a8] sm:$0xf]
    %v5537 = vld [vmem:[#allocation10 + $0x2ac] sm:$0xff]
    %v5538 = vld [vmem:[#allocation10 + $0x2b4] sm:$0xf]
    %v5539 = vld [vmem:[#allocation10 + $0x2b8] sm:$0xff]
    %v5540 = vld [vmem:[#allocation10 + $0x2c0] sm:$0xf]
    %v5541 = vld [vmem:[#allocation10 + $0x2c4] sm:$0xff]
    %v5542 = vld [vmem:[#allocation10 + $0x2cc] sm:$0xf]
    %v5543 = vld [vmem:[#allocation10 + $0x2d0] sm:$0xff]
    %v5544 = vld [vmem:[#allocation10 + $0x2d8] sm:$0xf]
    %v5545 = vld [vmem:[#allocation10 + $0x2dc] sm:$0xff]
    %v5546 = vld [vmem:[#allocation10 + $0x2e4] sm:$0xf]
    %v5547 = vld [vmem:[#allocation10 + $0x2e8] sm:$0xff]
    %v5548 = vld [vmem:[#allocation10 + $0x2f0] sm:$0xf]
    %v5549 = vld [vmem:[#allocation10 + $0x2f4] sm:$0xff]
    %v5550 = vld [vmem:[#allocation10 + $0x2fc] sm:$0xf]
    %v5551 = vld [vmem:[#allocation10 + $0x300] sm:$0xff]
    %v5552 = vld [vmem:[#allocation10 + $0x308] sm:$0xf]
    %v5553 = vld [vmem:[#allocation10 + $0x30c] sm:$0xff]
    %v5554 = vld [vmem:[#allocation10 + $0x314] sm:$0xf]
    %v5555 = vld [vmem:[#allocation10 + $0x318] sm:$0xff]
    %v5556 = vld [vmem:[#allocation10 + $0x320] sm:$0xf]
    %v5557 = vld [vmem:[#allocation10 + $0x324] sm:$0xff]
    %v5558 = vld [vmem:[#allocation10 + $0x32c] sm:$0xf]
    %v5559 = vld [vmem:[#allocation10 + $0x330] sm:$0xff]
    %v5560 = vld [vmem:[#allocation10 + $0x338] sm:$0xf]
    %v5561 = vld [vmem:[#allocation10 + $0x33c] sm:$0xff]
    %v5562 = vld [vmem:[#allocation10 + $0x344] sm:$0xf]
    %v5563 = vld [vmem:[#allocation10 + $0x348] sm:$0xff]
    %v5564 = vld [vmem:[#allocation10 + $0x350] sm:$0xf]
    %v5565 = vld [vmem:[#allocation10 + $0x354] sm:$0xff]
    %v5566 = vld [vmem:[#allocation10 + $0x35c] sm:$0xf]
    %v5567 = vld [vmem:[#allocation10 + $0x360] sm:$0xff]
    %v5568 = vld [vmem:[#allocation10 + $0x368] sm:$0xf]
    %v5569 = vld [vmem:[#allocation10 + $0x36c] sm:$0xff]
    %v5570 = vld [vmem:[#allocation10 + $0x374] sm:$0xf]
    %v5571 = vld [vmem:[#allocation10 + $0x378] sm:$0xff]
    %v5572 = vld [vmem:[#allocation10 + $0x380] sm:$0xf]
    %v5573 = vld [vmem:[#allocation10 + $0x384] sm:$0xff]
    %v5574 = vld [vmem:[#allocation10 + $0x38c] sm:$0xf]
    %v5575 = vld [vmem:[#allocation10 + $0x390] sm:$0xff]
    %v5576 = vld [vmem:[#allocation10 + $0x398] sm:$0xf]
    %v5577 = vld [vmem:[#allocation10 + $0x39c] sm:$0xff]
    %v5578 = vld [vmem:[#allocation10 + $0x3a4] sm:$0xf]
    %v5579 = vld [vmem:[#allocation10 + $0x3a8] sm:$0xff]
    %v5580 = vld [vmem:[#allocation10 + $0x3b0] sm:$0xf]
    %v5581 = vld [vmem:[#allocation10 + $0x3b4] sm:$0xff]
    %v5582 = vld [vmem:[#allocation10 + $0x3bc] sm:$0xf]
    %v5583 = vld [vmem:[#allocation10 + $0x3c0] sm:$0xff]
    %v5584 = vld [vmem:[#allocation10 + $0x3c8] sm:$0xf]
    %v5585 = vld [vmem:[#allocation10 + $0x3cc] sm:$0xff]
    %v5586 = vld [vmem:[#allocation10 + $0x3d4] sm:$0xf]
    %v5587 = vld [vmem:[#allocation10 + $0x3d8] sm:$0xff]
    %v5588 = vld [vmem:[#allocation10 + $0x3e0] sm:$0xf]
    %v5589 = vld [vmem:[#allocation10 + $0x3e4] sm:$0xff]
    %v5590 = vld [vmem:[#allocation10 + $0x3ec] sm:$0xf]
    %v5591 = vld [vmem:[#allocation10 + $0x3f0] sm:$0xff]
    %v5592 = vld [vmem:[#allocation10 + $0x3f8] sm:$0xf]
    %v5593 = vld [vmem:[#allocation10 + $0x3fc] sm:$0xff]
    %v5594 = vld [vmem:[#allocation10 + $0x404] sm:$0xf]
    %v5595 = vld [vmem:[#allocation10 + $0x408] sm:$0xff]
    %v5596 = vld [vmem:[#allocation10 + $0x410] sm:$0xf]
    %v5597 = vld [vmem:[#allocation10 + $0x414] sm:$0xff]
    %v5598 = vld [vmem:[#allocation10 + $0x41c] sm:$0xf]
    %v5599 = vld [vmem:[#allocation10 + $0x420] sm:$0xff]
    %v5600 = vld [vmem:[#allocation10 + $0x428] sm:$0xf]
    %v5601 = vld [vmem:[#allocation10 + $0x42c] sm:$0xff]
    %v5602 = vld [vmem:[#allocation10 + $0x434] sm:$0xf]
    %v5603 = vld [vmem:[#allocation10 + $0x438] sm:$0xff]
    %v5604 = vld [vmem:[#allocation10 + $0x440] sm:$0xf]
    %v5605 = vld [vmem:[#allocation10 + $0x444] sm:$0xff]
    %v5606 = vld [vmem:[#allocation10 + $0x44c] sm:$0xf]
    %v5607 = vld [vmem:[#allocation10 + $0x450] sm:$0xff]
    %v5608 = vld [vmem:[#allocation10 + $0x458] sm:$0xf]
    %v5609 = vld [vmem:[#allocation10 + $0x45c] sm:$0xff]
    %v5610 = vld [vmem:[#allocation10 + $0x464] sm:$0xf]
    %v5611 = vld [vmem:[#allocation10 + $0x468] sm:$0xff]
    %v5612 = vld [vmem:[#allocation10 + $0x470] sm:$0xf]
    %v5613 = vld [vmem:[#allocation10 + $0x474] sm:$0xff]
    %v5614 = vld [vmem:[#allocation10 + $0x47c] sm:$0xf]
    %v5615 = vld [vmem:[#allocation10 + $0x480] sm:$0xff]
    %v5616 = vld [vmem:[#allocation10 + $0x488] sm:$0xf]
    %v5617 = vld [vmem:[#allocation10 + $0x48c] sm:$0xff]
    %v5618 = vld [vmem:[#allocation10 + $0x494] sm:$0xf]
    %v5619 = vld [vmem:[#allocation10 + $0x498] sm:$0xff]
    %v5620 = vld [vmem:[#allocation10 + $0x4a0] sm:$0xf]
    %v5621 = vld [vmem:[#allocation10 + $0x4a4] sm:$0xff]
    %v5622 = vld [vmem:[#allocation10 + $0x4ac] sm:$0xf]
    %v5623 = vld [vmem:[#allocation10 + $0x4b0] sm:$0xff]
    %v5624 = vld [vmem:[#allocation10 + $0x4b8] sm:$0xf]
    %v5625 = vld [vmem:[#allocation10 + $0x4bc] sm:$0xff]
    %v5626 = vld [vmem:[#allocation10 + $0x4c4] sm:$0xf]
    %v5627 = vld [vmem:[#allocation10 + $0x4c8] sm:$0xff]
    %v5628 = vld [vmem:[#allocation10 + $0x4d0] sm:$0xf]
    %v5629 = vld [vmem:[#allocation10 + $0x4d4] sm:$0xff]
    %v5630 = vld [vmem:[#allocation10 + $0x4dc] sm:$0xf]
    %v5631 = vld [vmem:[#allocation10 + $0x4e0] sm:$0xff]
    %v5632 = vld [vmem:[#allocation10 + $0x4e8] sm:$0xf]
    %v5633 = vld [vmem:[#allocation10 + $0x4ec] sm:$0xff]
    %v5634 = vld [vmem:[#allocation10 + $0x4f4] sm:$0xf]
    %v5635 = vld [vmem:[#allocation10 + $0x4f8] sm:$0xff]
    %v5636 = vld [vmem:[#allocation10 + $0x500] sm:$0xf]
    %v5637 = vld [vmem:[#allocation10 + $0x504] sm:$0xff]
    %v5638 = vld [vmem:[#allocation10 + $0x50c] sm:$0xf]
    %v5639 = vld [vmem:[#allocation10 + $0x510] sm:$0xff]
    %v5640 = vld [vmem:[#allocation10 + $0x518] sm:$0xf]
    %v5641 = vld [vmem:[#allocation10 + $0x51c] sm:$0xff]
    %v5642 = vld [vmem:[#allocation10 + $0x524] sm:$0xf]
    %v5643 = vld [vmem:[#allocation10 + $0x528] sm:$0xff]
    %v5644 = vld [vmem:[#allocation10 + $0x530] sm:$0xf]
    %v5645 = vld [vmem:[#allocation10 + $0x534] sm:$0xff]
    %v5646 = vld [vmem:[#allocation10 + $0x53c] sm:$0xf]
    %v5647 = vld [vmem:[#allocation10 + $0x540] sm:$0xff]
    %v5648 = vld [vmem:[#allocation10 + $0x548] sm:$0xf]
    %v5649 = vld [vmem:[#allocation10 + $0x54c] sm:$0xff]
    %v5650 = vld [vmem:[#allocation10 + $0x554] sm:$0xf]
    %v5651 = vld [vmem:[#allocation10 + $0x558] sm:$0xff]
    %v5652 = vld [vmem:[#allocation10 + $0x560] sm:$0xf]
    %v5653 = vld [vmem:[#allocation10 + $0x564] sm:$0xff]
    %v5654 = vld [vmem:[#allocation10 + $0x56c] sm:$0xf]
    %v5655 = vld [vmem:[#allocation10 + $0x570] sm:$0xff]
    %v5656 = vld [vmem:[#allocation10 + $0x578] sm:$0xf]
    %v5657 = vld [vmem:[#allocation10 + $0x57c] sm:$0xff]
    %v5658 = vld [vmem:[#allocation10 + $0x584] sm:$0xf]
    %v5659 = vld [vmem:[#allocation10 + $0x588] sm:$0xff]
    %v5660 = vld [vmem:[#allocation10 + $0x590] sm:$0xf]
    %v5661 = vld [vmem:[#allocation10 + $0x594] sm:$0xff]
    %v5662 = vld [vmem:[#allocation10 + $0x59c] sm:$0xf]
    %v5663 = vld [vmem:[#allocation10 + $0x5a0] sm:$0xff]
    %v5664 = vld [vmem:[#allocation10 + $0x5a8] sm:$0xf]
    %v5665 = vld [vmem:[#allocation10 + $0x5ac] sm:$0xff]
    %v5666 = vld [vmem:[#allocation10 + $0x5b4] sm:$0xf]
    %v5667 = vld [vmem:[#allocation10 + $0x5b8] sm:$0xff]
    %v5668 = vld [vmem:[#allocation10 + $0x5c0] sm:$0xf]
    %v5669 = vld [vmem:[#allocation10 + $0x5c4] sm:$0xff]
    %v5670 = vld [vmem:[#allocation10 + $0x5cc] sm:$0xf]
    %v5671 = vld [vmem:[#allocation10 + $0x5d0] sm:$0xff]
    %v5672 = vld [vmem:[#allocation10 + $0x5d8] sm:$0xf]
    %v5673 = vld [vmem:[#allocation10 + $0x5dc] sm:$0xff]
    %v5674 = vld [vmem:[#allocation10 + $0x5e4] sm:$0xf]
    %v5675 = vld [vmem:[#allocation10 + $0x5e8] sm:$0xff]
    %v5676 = vld [vmem:[#allocation10 + $0x5f0] sm:$0xf]
    %v5677 = vld [vmem:[#allocation10 + $0x5f4] sm:$0xff]
    %v5678 = vld [vmem:[#allocation10 + $0x5fc] sm:$0xf]
    %v5679 = vld [vmem:[#allocation12] sm:$0x7]
    %v5681 = vlaneseq
    %v5682 = vshrl.u32 %v5681, 7
    %v5683 = vsub.s32 0, %v5682
    %v5684 = vrot.slane %v5679, %v5683
    %v5685 = vlaneseq
    %v5686 = vshrl.u32 %v5685, 7
    %v5687 = vsub.s32 1, %v5686
    %v5688 = vrot.slane %v5679, %v5687
    %v5689 = vlaneseq
    %v5690 = vshrl.u32 %v5689, 7
    %v5691 = vsub.s32 2, %v5690
    %v5692 = vrot.slane %v5679, %v5691
    %v5952 = vunpack.c.l.b16 %v5423
    %v5953 = vunpack.c.h.b16 %v5423
    %v5954 = vunpack.c.l.b16 %v5424
    %v5955 = vunpack.c.l.b16 %v5425
    %v5956 = vunpack.c.h.b16 %v5425
    %v5957 = vunpack.c.l.b16 %v5426
    %v5958 = vunpack.c.l.b16 %v5427
    %v5959 = vunpack.c.h.b16 %v5427
    %v5960 = vunpack.c.l.b16 %v5428
    %v5961 = vunpack.c.l.b16 %v5429
    %v5962 = vunpack.c.h.b16 %v5429
    %v5963 = vunpack.c.l.b16 %v5430
    %v5964 = vunpack.c.l.b16 %v5431
    %v5965 = vunpack.c.h.b16 %v5431
    %v5966 = vunpack.c.l.b16 %v5432
    %v5967 = vunpack.c.l.b16 %v5433
    %v5968 = vunpack.c.h.b16 %v5433
    %v5969 = vunpack.c.l.b16 %v5434
    %v5970 = vunpack.c.l.b16 %v5435
    %v5971 = vunpack.c.h.b16 %v5435
    %v5972 = vunpack.c.l.b16 %v5436
    %v5973 = vunpack.c.l.b16 %v5437
    %v5974 = vunpack.c.h.b16 %v5437
    %v5975 = vunpack.c.l.b16 %v5438
    %v5976 = vunpack.c.l.b16 %v5439
    %v5977 = vunpack.c.h.b16 %v5439
    %v5978 = vunpack.c.l.b16 %v5440
    %v5979 = vunpack.c.l.b16 %v5441
    %v5980 = vunpack.c.h.b16 %v5441
    %v5981 = vunpack.c.l.b16 %v5442
    %v5982 = vunpack.c.l.b16 %v5443
    %v5983 = vunpack.c.h.b16 %v5443
    %v5984 = vunpack.c.l.b16 %v5444
    %v5985 = vunpack.c.l.b16 %v5445
    %v5986 = vunpack.c.h.b16 %v5445
    %v5987 = vunpack.c.l.b16 %v5446
    %v5988 = vunpack.c.l.b16 %v5447
    %v5989 = vunpack.c.h.b16 %v5447
    %v5990 = vunpack.c.l.b16 %v5448
    %v5991 = vunpack.c.l.b16 %v5449
    %v5992 = vunpack.c.h.b16 %v5449
    %v5993 = vunpack.c.l.b16 %v5450
    %v5994 = vunpack.c.l.b16 %v5451
    %v5995 = vunpack.c.h.b16 %v5451
    %v5996 = vunpack.c.l.b16 %v5452
    %v5997 = vunpack.c.l.b16 %v5453
    %v5998 = vunpack.c.h.b16 %v5453
    %v5999 = vunpack.c.l.b16 %v5454
    %v6000 = vunpack.c.l.b16 %v5455
    %v6001 = vunpack.c.h.b16 %v5455
    %v6002 = vunpack.c.l.b16 %v5456
    %v6003 = vunpack.c.l.b16 %v5457
    %v6004 = vunpack.c.h.b16 %v5457
    %v6005 = vunpack.c.l.b16 %v5458
    %v6006 = vunpack.c.l.b16 %v5459
    %v6007 = vunpack.c.h.b16 %v5459
    %v6008 = vunpack.c.l.b16 %v5460
    %v6009 = vunpack.c.l.b16 %v5461
    %v6010 = vunpack.c.h.b16 %v5461
    %v6011 = vunpack.c.l.b16 %v5462
    %v6012 = vunpack.c.l.b16 %v5463
    %v6013 = vunpack.c.h.b16 %v5463
    %v6014 = vunpack.c.l.b16 %v5464
    %v6015 = vunpack.c.l.b16 %v5465
    %v6016 = vunpack.c.h.b16 %v5465
    %v6017 = vunpack.c.l.b16 %v5466
    %v6018 = vunpack.c.l.b16 %v5467
    %v6019 = vunpack.c.h.b16 %v5467
    %v6020 = vunpack.c.l.b16 %v5468
    %v6021 = vunpack.c.l.b16 %v5469
    %v6022 = vunpack.c.h.b16 %v5469
    %v6023 = vunpack.c.l.b16 %v5470
    %v6024 = vunpack.c.l.b16 %v5471
    %v6025 = vunpack.c.h.b16 %v5471
    %v6026 = vunpack.c.l.b16 %v5472
    %v6027 = vunpack.c.l.b16 %v5473
    %v6028 = vunpack.c.h.b16 %v5473
    %v6029 = vunpack.c.l.b16 %v5474
    %v6030 = vunpack.c.l.b16 %v5475
    %v6031 = vunpack.c.h.b16 %v5475
    %v6032 = vunpack.c.l.b16 %v5476
    %v6033 = vunpack.c.l.b16 %v5477
    %v6034 = vunpack.c.h.b16 %v5477
    %v6035 = vunpack.c.l.b16 %v5478
    %v6036 = vunpack.c.l.b16 %v5479
    %v6037 = vunpack.c.h.b16 %v5479
    %v6038 = vunpack.c.l.b16 %v5480
    %v6039 = vunpack.c.l.b16 %v5481
    %v6040 = vunpack.c.h.b16 %v5481
    %v6041 = vunpack.c.l.b16 %v5482
    %v6042 = vunpack.c.l.b16 %v5483
    %v6043 = vunpack.c.h.b16 %v5483
    %v6044 = vunpack.c.l.b16 %v5484
    %v6045 = vunpack.c.l.b16 %v5485
    %v6046 = vunpack.c.h.b16 %v5485
    %v6047 = vunpack.c.l.b16 %v5486
    %v6048 = vunpack.c.l.b16 %v5487
    %v6049 = vunpack.c.h.b16 %v5487
    %v6050 = vunpack.c.l.b16 %v5488
    %v6051 = vunpack.c.l.b16 %v5489
    %v6052 = vunpack.c.h.b16 %v5489
    %v6053 = vunpack.c.l.b16 %v5490
    %v6054 = vunpack.c.l.b16 %v5491
    %v6055 = vunpack.c.h.b16 %v5491
    %v6056 = vunpack.c.l.b16 %v5492
    %v6057 = vunpack.c.l.b16 %v5493
    %v6058 = vunpack.c.h.b16 %v5493
    %v6059 = vunpack.c.l.b16 %v5494
    %v6060 = vunpack.c.l.b16 %v5495
    %v6061 = vunpack.c.h.b16 %v5495
    %v6062 = vunpack.c.l.b16 %v5496
    %v6063 = vunpack.c.l.b16 %v5497
    %v6064 = vunpack.c.h.b16 %v5497
    %v6065 = vunpack.c.l.b16 %v5498
    %v6066 = vunpack.c.l.b16 %v5499
    %v6067 = vunpack.c.h.b16 %v5499
    %v6068 = vunpack.c.l.b16 %v5500
    %v6069 = vunpack.c.l.b16 %v5501
    %v6070 = vunpack.c.h.b16 %v5501
    %v6071 = vunpack.c.l.b16 %v5502
    %v6072 = vunpack.c.l.b16 %v5503
    %v6073 = vunpack.c.h.b16 %v5503
    %v6074 = vunpack.c.l.b16 %v5504
    %v6075 = vunpack.c.l.b16 %v5505
    %v6076 = vunpack.c.h.b16 %v5505
    %v6077 = vunpack.c.l.b16 %v5506
    %v6078 = vunpack.c.l.b16 %v5507
    %v6079 = vunpack.c.h.b16 %v5507
    %v6080 = vunpack.c.l.b16 %v5508
    %v6081 = vunpack.c.l.b16 %v5509
    %v6082 = vunpack.c.h.b16 %v5509
    %v6083 = vunpack.c.l.b16 %v5510
    %v6084 = vunpack.c.l.b16 %v5511
    %v6085 = vunpack.c.h.b16 %v5511
    %v6086 = vunpack.c.l.b16 %v5512
    %v6087 = vunpack.c.l.b16 %v5513
    %v6088 = vunpack.c.h.b16 %v5513
    %v6089 = vunpack.c.l.b16 %v5514
    %v6090 = vunpack.c.l.b16 %v5515
    %v6091 = vunpack.c.h.b16 %v5515
    %v6092 = vunpack.c.l.b16 %v5516
    %v6093 = vunpack.c.l.b16 %v5517
    %v6094 = vunpack.c.h.b16 %v5517
    %v6095 = vunpack.c.l.b16 %v5518
    %v6096 = vunpack.c.l.b16 %v5519
    %v6097 = vunpack.c.h.b16 %v5519
    %v6098 = vunpack.c.l.b16 %v5520
    %v6099 = vunpack.c.l.b16 %v5521
    %v6100 = vunpack.c.h.b16 %v5521
    %v6101 = vunpack.c.l.b16 %v5522
    %v6102 = vunpack.c.l.b16 %v5523
    %v6103 = vunpack.c.h.b16 %v5523
    %v6104 = vunpack.c.l.b16 %v5524
    %v6105 = vunpack.c.l.b16 %v5525
    %v6106 = vunpack.c.h.b16 %v5525
    %v6107 = vunpack.c.l.b16 %v5526
    %v6108 = vunpack.c.l.b16 %v5527
    %v6109 = vunpack.c.h.b16 %v5527
    %v6110 = vunpack.c.l.b16 %v5528
    %v6111 = vunpack.c.l.b16 %v5529
    %v6112 = vunpack.c.h.b16 %v5529
    %v6113 = vunpack.c.l.b16 %v5530
    %v6114 = vunpack.c.l.b16 %v5531
    %v6115 = vunpack.c.h.b16 %v5531
    %v6116 = vunpack.c.l.b16 %v5532
    %v6117 = vunpack.c.l.b16 %v5533
    %v6118 = vunpack.c.h.b16 %v5533
    %v6119 = vunpack.c.l.b16 %v5534
    %v6120 = vunpack.c.l.b16 %v5535
    %v6121 = vunpack.c.h.b16 %v5535
    %v6122 = vunpack.c.l.b16 %v5536
    %v6123 = vunpack.c.l.b16 %v5537
    %v6124 = vunpack.c.h.b16 %v5537
    %v6125 = vunpack.c.l.b16 %v5538
    %v6126 = vunpack.c.l.b16 %v5539
    %v6127 = vunpack.c.h.b16 %v5539
    %v6128 = vunpack.c.l.b16 %v5540
    %v6129 = vunpack.c.l.b16 %v5541
    %v6130 = vunpack.c.h.b16 %v5541
    %v6131 = vunpack.c.l.b16 %v5542
    %v6132 = vunpack.c.l.b16 %v5543
    %v6133 = vunpack.c.h.b16 %v5543
    %v6134 = vunpack.c.l.b16 %v5544
    %v6135 = vunpack.c.l.b16 %v5545
    %v6136 = vunpack.c.h.b16 %v5545
    %v6137 = vunpack.c.l.b16 %v5546
    %v6138 = vunpack.c.l.b16 %v5547
    %v6139 = vunpack.c.h.b16 %v5547
    %v6140 = vunpack.c.l.b16 %v5548
    %v6141 = vunpack.c.l.b16 %v5549
    %v6142 = vunpack.c.h.b16 %v5549
    %v6143 = vunpack.c.l.b16 %v5550
    %v6144 = vunpack.c.l.b16 %v5551
    %v6145 = vunpack.c.h.b16 %v5551
    %v6146 = vunpack.c.l.b16 %v5552
    %v6147 = vunpack.c.l.b16 %v5553
    %v6148 = vunpack.c.h.b16 %v5553
    %v6149 = vunpack.c.l.b16 %v5554
    %v6150 = vunpack.c.l.b16 %v5555
    %v6151 = vunpack.c.h.b16 %v5555
    %v6152 = vunpack.c.l.b16 %v5556
    %v6153 = vunpack.c.l.b16 %v5557
    %v6154 = vunpack.c.h.b16 %v5557
    %v6155 = vunpack.c.l.b16 %v5558
    %v6156 = vunpack.c.l.b16 %v5559
    %v6157 = vunpack.c.h.b16 %v5559
    %v6158 = vunpack.c.l.b16 %v5560
    %v6159 = vunpack.c.l.b16 %v5561
    %v6160 = vunpack.c.h.b16 %v5561
    %v6161 = vunpack.c.l.b16 %v5562
    %v6162 = vunpack.c.l.b16 %v5563
    %v6163 = vunpack.c.h.b16 %v5563
    %v6164 = vunpack.c.l.b16 %v5564
    %v6165 = vunpack.c.l.b16 %v5565
    %v6166 = vunpack.c.h.b16 %v5565
    %v6167 = vunpack.c.l.b16 %v5566
    %v6168 = vunpack.c.l.b16 %v5567
    %v6169 = vunpack.c.h.b16 %v5567
    %v6170 = vunpack.c.l.b16 %v5568
    %v6171 = vunpack.c.l.b16 %v5569
    %v6172 = vunpack.c.h.b16 %v5569
    %v6173 = vunpack.c.l.b16 %v5570
    %v6174 = vunpack.c.l.b16 %v5571
    %v6175 = vunpack.c.h.b16 %v5571
    %v6176 = vunpack.c.l.b16 %v5572
    %v6177 = vunpack.c.l.b16 %v5573
    %v6178 = vunpack.c.h.b16 %v5573
    %v6179 = vunpack.c.l.b16 %v5574
    %v6180 = vunpack.c.l.b16 %v5575
    %v6181 = vunpack.c.h.b16 %v5575
    %v6182 = vunpack.c.l.b16 %v5576
    %v6183 = vunpack.c.l.b16 %v5577
    %v6184 = vunpack.c.h.b16 %v5577
    %v6185 = vunpack.c.l.b16 %v5578
    %v6186 = vunpack.c.l.b16 %v5579
    %v6187 = vunpack.c.h.b16 %v5579
    %v6188 = vunpack.c.l.b16 %v5580
    %v6189 = vunpack.c.l.b16 %v5581
    %v6190 = vunpack.c.h.b16 %v5581
    %v6191 = vunpack.c.l.b16 %v5582
    %v6192 = vunpack.c.l.b16 %v5583
    %v6193 = vunpack.c.h.b16 %v5583
    %v6194 = vunpack.c.l.b16 %v5584
    %v6195 = vunpack.c.l.b16 %v5585
    %v6196 = vunpack.c.h.b16 %v5585
    %v6197 = vunpack.c.l.b16 %v5586
    %v6198 = vunpack.c.l.b16 %v5587
    %v6199 = vunpack.c.h.b16 %v5587
    %v6200 = vunpack.c.l.b16 %v5588
    %v6201 = vunpack.c.l.b16 %v5589
    %v6202 = vunpack.c.h.b16 %v5589
    %v6203 = vunpack.c.l.b16 %v5590
    %v6204 = vunpack.c.l.b16 %v5591
    %v6205 = vunpack.c.h.b16 %v5591
    %v6206 = vunpack.c.l.b16 %v5592
    %v6207 = vunpack.c.l.b16 %v5593
    %v6208 = vunpack.c.h.b16 %v5593
    %v6209 = vunpack.c.l.b16 %v5594
    %v6210 = vunpack.c.l.b16 %v5595
    %v6211 = vunpack.c.h.b16 %v5595
    %v6212 = vunpack.c.l.b16 %v5596
    %v6213 = vunpack.c.l.b16 %v5597
    %v6214 = vunpack.c.h.b16 %v5597
    %v6215 = vunpack.c.l.b16 %v5598
    %v6216 = vunpack.c.l.b16 %v5599
    %v6217 = vunpack.c.h.b16 %v5599
    %v6218 = vunpack.c.l.b16 %v5600
    %v6219 = vunpack.c.l.b16 %v5601
    %v6220 = vunpack.c.h.b16 %v5601
    %v6221 = vunpack.c.l.b16 %v5602
    %v6222 = vunpack.c.l.b16 %v5603
    %v6223 = vunpack.c.h.b16 %v5603
    %v6224 = vunpack.c.l.b16 %v5604
    %v6225 = vunpack.c.l.b16 %v5605
    %v6226 = vunpack.c.h.b16 %v5605
    %v6227 = vunpack.c.l.b16 %v5606
    %v6228 = vunpack.c.l.b16 %v5607
    %v6229 = vunpack.c.h.b16 %v5607
    %v6230 = vunpack.c.l.b16 %v5608
    %v6231 = vunpack.c.l.b16 %v5609
    %v6232 = vunpack.c.h.b16 %v5609
    %v6233 = vunpack.c.l.b16 %v5610
    %v6234 = vunpack.c.l.b16 %v5611
    %v6235 = vunpack.c.h.b16 %v5611
    %v6236 = vunpack.c.l.b16 %v5612
    %v6237 = vunpack.c.l.b16 %v5613
    %v6238 = vunpack.c.h.b16 %v5613
    %v6239 = vunpack.c.l.b16 %v5614
    %v6240 = vunpack.c.l.b16 %v5615
    %v6241 = vunpack.c.h.b16 %v5615
    %v6242 = vunpack.c.l.b16 %v5616
    %v6243 = vunpack.c.l.b16 %v5617
    %v6244 = vunpack.c.h.b16 %v5617
    %v6245 = vunpack.c.l.b16 %v5618
    %v6246 = vunpack.c.l.b16 %v5619
    %v6247 = vunpack.c.h.b16 %v5619
    %v6248 = vunpack.c.l.b16 %v5620
    %v6249 = vunpack.c.l.b16 %v5621
    %v6250 = vunpack.c.h.b16 %v5621
    %v6251 = vunpack.c.l.b16 %v5622
    %v6252 = vunpack.c.l.b16 %v5623
    %v6253 = vunpack.c.h.b16 %v5623
    %v6254 = vunpack.c.l.b16 %v5624
    %v6255 = vunpack.c.l.b16 %v5625
    %v6256 = vunpack.c.h.b16 %v5625
    %v6257 = vunpack.c.l.b16 %v5626
    %v6258 = vunpack.c.l.b16 %v5627
    %v6259 = vunpack.c.h.b16 %v5627
    %v6260 = vunpack.c.l.b16 %v5628
    %v6261 = vunpack.c.l.b16 %v5629
    %v6262 = vunpack.c.h.b16 %v5629
    %v6263 = vunpack.c.l.b16 %v5630
    %v6264 = vunpack.c.l.b16 %v5631
    %v6265 = vunpack.c.h.b16 %v5631
    %v6266 = vunpack.c.l.b16 %v5632
    %v6267 = vunpack.c.l.b16 %v5633
    %v6268 = vunpack.c.h.b16 %v5633
    %v6269 = vunpack.c.l.b16 %v5634
    %v6270 = vunpack.c.l.b16 %v5635
    %v6271 = vunpack.c.h.b16 %v5635
    %v6272 = vunpack.c.l.b16 %v5636
    %v6273 = vunpack.c.l.b16 %v5637
    %v6274 = vunpack.c.h.b16 %v5637
    %v6275 = vunpack.c.l.b16 %v5638
    %v6276 = vunpack.c.l.b16 %v5639
    %v6277 = vunpack.c.h.b16 %v5639
    %v6278 = vunpack.c.l.b16 %v5640
    %v6279 = vunpack.c.l.b16 %v5641
    %v6280 = vunpack.c.h.b16 %v5641
    %v6281 = vunpack.c.l.b16 %v5642
    %v6282 = vunpack.c.l.b16 %v5643
    %v6283 = vunpack.c.h.b16 %v5643
    %v6284 = vunpack.c.l.b16 %v5644
    %v6285 = vunpack.c.l.b16 %v5645
    %v6286 = vunpack.c.h.b16 %v5645
    %v6287 = vunpack.c.l.b16 %v5646
    %v6288 = vunpack.c.l.b16 %v5647
    %v6289 = vunpack.c.h.b16 %v5647
    %v6290 = vunpack.c.l.b16 %v5648
    %v6291 = vunpack.c.l.b16 %v5649
    %v6292 = vunpack.c.h.b16 %v5649
    %v6293 = vunpack.c.l.b16 %v5650
    %v6294 = vunpack.c.l.b16 %v5651
    %v6295 = vunpack.c.h.b16 %v5651
    %v6296 = vunpack.c.l.b16 %v5652
    %v6297 = vunpack.c.l.b16 %v5653
    %v6298 = vunpack.c.h.b16 %v5653
    %v6299 = vunpack.c.l.b16 %v5654
    %v6300 = vunpack.c.l.b16 %v5655
    %v6301 = vunpack.c.h.b16 %v5655
    %v6302 = vunpack.c.l.b16 %v5656
    %v6303 = vunpack.c.l.b16 %v5657
    %v6304 = vunpack.c.h.b16 %v5657
    %v6305 = vunpack.c.l.b16 %v5658
    %v6306 = vunpack.c.l.b16 %v5659
    %v6307 = vunpack.c.h.b16 %v5659
    %v6308 = vunpack.c.l.b16 %v5660
    %v6309 = vunpack.c.l.b16 %v5661
    %v6310 = vunpack.c.h.b16 %v5661
    %v6311 = vunpack.c.l.b16 %v5662
    %v6312 = vunpack.c.l.b16 %v5663
    %v6313 = vunpack.c.h.b16 %v5663
    %v6314 = vunpack.c.l.b16 %v5664
    %v6315 = vunpack.c.l.b16 %v5665
    %v6316 = vunpack.c.h.b16 %v5665
    %v6317 = vunpack.c.l.b16 %v5666
    %v6318 = vunpack.c.l.b16 %v5667
    %v6319 = vunpack.c.h.b16 %v5667
    %v6320 = vunpack.c.l.b16 %v5668
    %v6321 = vunpack.c.l.b16 %v5669
    %v6322 = vunpack.c.h.b16 %v5669
    %v6323 = vunpack.c.l.b16 %v5670
    %v6324 = vunpack.c.l.b16 %v5671
    %v6325 = vunpack.c.h.b16 %v5671
    %v6326 = vunpack.c.l.b16 %v5672
    %v6327 = vunpack.c.l.b16 %v5673
    %v6328 = vunpack.c.h.b16 %v5673
    %v6329 = vunpack.c.l.b16 %v5674
    %v6330 = vunpack.c.l.b16 %v5675
    %v6331 = vunpack.c.h.b16 %v5675
    %v6332 = vunpack.c.l.b16 %v5676
    %v6333 = vunpack.c.l.b16 %v5677
    %v6334 = vunpack.c.h.b16 %v5677
    %v6335 = vunpack.c.l.b16 %v5678
    %v6336 = vpack.c.b16 %v5955, %v5952
    %v6337 = vpack.c.b16 %v5956, %v5953
    %v6338 = vpack.c.b16 %v5957, %v5954
    %v6339 = vpack.c.b16 %v5961, %v5958
    %v6340 = vpack.c.b16 %v5962, %v5959
    %v6341 = vpack.c.b16 %v5963, %v5960
    %v6342 = vpack.c.b16 %v5967, %v5964
    %v6343 = vpack.c.b16 %v5968, %v5965
    %v6344 = vpack.c.b16 %v5969, %v5966
    %v6345 = vpack.c.b16 %v5973, %v5970
    %v6346 = vpack.c.b16 %v5974, %v5971
    %v6347 = vpack.c.b16 %v5975, %v5972
    %v6348 = vpack.c.b16 %v5979, %v5976
    %v6349 = vpack.c.b16 %v5980, %v5977
    %v6350 = vpack.c.b16 %v5981, %v5978
    %v6351 = vpack.c.b16 %v5985, %v5982
    %v6352 = vpack.c.b16 %v5986, %v5983
    %v6353 = vpack.c.b16 %v5987, %v5984
    %v6354 = vpack.c.b16 %v5991, %v5988
    %v6355 = vpack.c.b16 %v5992, %v5989
    %v6356 = vpack.c.b16 %v5993, %v5990
    %v6357 = vpack.c.b16 %v5997, %v5994
    %v6358 = vpack.c.b16 %v5998, %v5995
    %v6359 = vpack.c.b16 %v5999, %v5996
    %v6360 = vpack.c.b16 %v6003, %v6000
    %v6361 = vpack.c.b16 %v6004, %v6001
    %v6362 = vpack.c.b16 %v6005, %v6002
    %v6363 = vpack.c.b16 %v6009, %v6006
    %v6364 = vpack.c.b16 %v6010, %v6007
    %v6365 = vpack.c.b16 %v6011, %v6008
    %v6366 = vpack.c.b16 %v6015, %v6012
    %v6367 = vpack.c.b16 %v6016, %v6013
    %v6368 = vpack.c.b16 %v6017, %v6014
    %v6369 = vpack.c.b16 %v6021, %v6018
    %v6370 = vpack.c.b16 %v6022, %v6019
    %v6371 = vpack.c.b16 %v6023, %v6020
    %v6372 = vpack.c.b16 %v6027, %v6024
    %v6373 = vpack.c.b16 %v6028, %v6025
    %v6374 = vpack.c.b16 %v6029, %v6026
    %v6375 = vpack.c.b16 %v6033, %v6030
    %v6376 = vpack.c.b16 %v6034, %v6031
    %v6377 = vpack.c.b16 %v6035, %v6032
    %v6378 = vpack.c.b16 %v6039, %v6036
    %v6379 = vpack.c.b16 %v6040, %v6037
    %v6380 = vpack.c.b16 %v6041, %v6038
    %v6381 = vpack.c.b16 %v6045, %v6042
    %v6382 = vpack.c.b16 %v6046, %v6043
    %v6383 = vpack.c.b16 %v6047, %v6044
    %v6384 = vpack.c.b16 %v6051, %v6048
    %v6385 = vpack.c.b16 %v6052, %v6049
    %v6386 = vpack.c.b16 %v6053, %v6050
    %v6387 = vpack.c.b16 %v6057, %v6054
    %v6388 = vpack.c.b16 %v6058, %v6055
    %v6389 = vpack.c.b16 %v6059, %v6056
    %v6390 = vpack.c.b16 %v6063, %v6060
    %v6391 = vpack.c.b16 %v6064, %v6061
    %v6392 = vpack.c.b16 %v6065, %v6062
    %v6393 = vpack.c.b16 %v6069, %v6066
    %v6394 = vpack.c.b16 %v6070, %v6067
    %v6395 = vpack.c.b16 %v6071, %v6068
    %v6396 = vpack.c.b16 %v6075, %v6072
    %v6397 = vpack.c.b16 %v6076, %v6073
    %v6398 = vpack.c.b16 %v6077, %v6074
    %v6399 = vpack.c.b16 %v6081, %v6078
    %v6400 = vpack.c.b16 %v6082, %v6079
    %v6401 = vpack.c.b16 %v6083, %v6080
    %v6402 = vpack.c.b16 %v6087, %v6084
    %v6403 = vpack.c.b16 %v6088, %v6085
    %v6404 = vpack.c.b16 %v6089, %v6086
    %v6405 = vpack.c.b16 %v6093, %v6090
    %v6406 = vpack.c.b16 %v6094, %v6091
    %v6407 = vpack.c.b16 %v6095, %v6092
    %v6408 = vpack.c.b16 %v6099, %v6096
    %v6409 = vpack.c.b16 %v6100, %v6097
    %v6410 = vpack.c.b16 %v6101, %v6098
    %v6411 = vpack.c.b16 %v6105, %v6102
    %v6412 = vpack.c.b16 %v6106, %v6103
    %v6413 = vpack.c.b16 %v6107, %v6104
    %v6414 = vpack.c.b16 %v6111, %v6108
    %v6415 = vpack.c.b16 %v6112, %v6109
    %v6416 = vpack.c.b16 %v6113, %v6110
    %v6417 = vpack.c.b16 %v6117, %v6114
    %v6418 = vpack.c.b16 %v6118, %v6115
    %v6419 = vpack.c.b16 %v6119, %v6116
    %v6420 = vpack.c.b16 %v6123, %v6120
    %v6421 = vpack.c.b16 %v6124, %v6121
    %v6422 = vpack.c.b16 %v6125, %v6122
    %v6423 = vpack.c.b16 %v6129, %v6126
    %v6424 = vpack.c.b16 %v6130, %v6127
    %v6425 = vpack.c.b16 %v6131, %v6128
    %v6426 = vpack.c.b16 %v6135, %v6132
    %v6427 = vpack.c.b16 %v6136, %v6133
    %v6428 = vpack.c.b16 %v6137, %v6134
    %v6429 = vpack.c.b16 %v6141, %v6138
    %v6430 = vpack.c.b16 %v6142, %v6139
    %v6431 = vpack.c.b16 %v6143, %v6140
    %v6432 = vpack.c.b16 %v6147, %v6144
    %v6433 = vpack.c.b16 %v6148, %v6145
    %v6434 = vpack.c.b16 %v6149, %v6146
    %v6435 = vpack.c.b16 %v6153, %v6150
    %v6436 = vpack.c.b16 %v6154, %v6151
    %v6437 = vpack.c.b16 %v6155, %v6152
    %v6438 = vpack.c.b16 %v6159, %v6156
    %v6439 = vpack.c.b16 %v6160, %v6157
    %v6440 = vpack.c.b16 %v6161, %v6158
    %v6441 = vpack.c.b16 %v6165, %v6162
    %v6442 = vpack.c.b16 %v6166, %v6163
    %v6443 = vpack.c.b16 %v6167, %v6164
    %v6444 = vpack.c.b16 %v6171, %v6168
    %v6445 = vpack.c.b16 %v6172, %v6169
    %v6446 = vpack.c.b16 %v6173, %v6170
    %v6447 = vpack.c.b16 %v6177, %v6174
    %v6448 = vpack.c.b16 %v6178, %v6175
    %v6449 = vpack.c.b16 %v6179, %v6176
    %v6450 = vpack.c.b16 %v6183, %v6180
    %v6451 = vpack.c.b16 %v6184, %v6181
    %v6452 = vpack.c.b16 %v6185, %v6182
    %v6453 = vpack.c.b16 %v6189, %v6186
    %v6454 = vpack.c.b16 %v6190, %v6187
    %v6455 = vpack.c.b16 %v6191, %v6188
    %v6456 = vpack.c.b16 %v6195, %v6192
    %v6457 = vpack.c.b16 %v6196, %v6193
    %v6458 = vpack.c.b16 %v6197, %v6194
    %v6459 = vpack.c.b16 %v6201, %v6198
    %v6460 = vpack.c.b16 %v6202, %v6199
    %v6461 = vpack.c.b16 %v6203, %v6200
    %v6462 = vpack.c.b16 %v6207, %v6204
    %v6463 = vpack.c.b16 %v6208, %v6205
    %v6464 = vpack.c.b16 %v6209, %v6206
    %v6465 = vpack.c.b16 %v6213, %v6210
    %v6466 = vpack.c.b16 %v6214, %v6211
    %v6467 = vpack.c.b16 %v6215, %v6212
    %v6468 = vpack.c.b16 %v6219, %v6216
    %v6469 = vpack.c.b16 %v6220, %v6217
    %v6470 = vpack.c.b16 %v6221, %v6218
    %v6471 = vpack.c.b16 %v6225, %v6222
    %v6472 = vpack.c.b16 %v6226, %v6223
    %v6473 = vpack.c.b16 %v6227, %v6224
    %v6474 = vpack.c.b16 %v6231, %v6228
    %v6475 = vpack.c.b16 %v6232, %v6229
    %v6476 = vpack.c.b16 %v6233, %v6230
    %v6477 = vpack.c.b16 %v6237, %v6234
    %v6478 = vpack.c.b16 %v6238, %v6235
    %v6479 = vpack.c.b16 %v6239, %v6236
    %v6480 = vpack.c.b16 %v6243, %v6240
    %v6481 = vpack.c.b16 %v6244, %v6241
    %v6482 = vpack.c.b16 %v6245, %v6242
    %v6483 = vpack.c.b16 %v6249, %v6246
    %v6484 = vpack.c.b16 %v6250, %v6247
    %v6485 = vpack.c.b16 %v6251, %v6248
    %v6486 = vpack.c.b16 %v6255, %v6252
    %v6487 = vpack.c.b16 %v6256, %v6253
    %v6488 = vpack.c.b16 %v6257, %v6254
    %v6489 = vpack.c.b16 %v6261, %v6258
    %v6490 = vpack.c.b16 %v6262, %v6259
    %v6491 = vpack.c.b16 %v6263, %v6260
    %v6492 = vpack.c.b16 %v6267, %v6264
    %v6493 = vpack.c.b16 %v6268, %v6265
    %v6494 = vpack.c.b16 %v6269, %v6266
    %v6495 = vpack.c.b16 %v6273, %v6270
    %v6496 = vpack.c.b16 %v6274, %v6271
    %v6497 = vpack.c.b16 %v6275, %v6272
    %v6498 = vpack.c.b16 %v6279, %v6276
    %v6499 = vpack.c.b16 %v6280, %v6277
    %v6500 = vpack.c.b16 %v6281, %v6278
    %v6501 = vpack.c.b16 %v6285, %v6282
    %v6502 = vpack.c.b16 %v6286, %v6283
    %v6503 = vpack.c.b16 %v6287, %v6284
    %v6504 = vpack.c.b16 %v6291, %v6288
    %v6505 = vpack.c.b16 %v6292, %v6289
    %v6506 = vpack.c.b16 %v6293, %v6290
    %v6507 = vpack.c.b16 %v6297, %v6294
    %v6508 = vpack.c.b16 %v6298, %v6295
    %v6509 = vpack.c.b16 %v6299, %v6296
    %v6510 = vpack.c.b16 %v6303, %v6300
    %v6511 = vpack.c.b16 %v6304, %v6301
    %v6512 = vpack.c.b16 %v6305, %v6302
    %v6513 = vpack.c.b16 %v6309, %v6306
    %v6514 = vpack.c.b16 %v6310, %v6307
    %v6515 = vpack.c.b16 %v6311, %v6308
    %v6516 = vpack.c.b16 %v6315, %v6312
    %v6517 = vpack.c.b16 %v6316, %v6313
    %v6518 = vpack.c.b16 %v6317, %v6314
    %v6519 = vpack.c.b16 %v6321, %v6318
    %v6520 = vpack.c.b16 %v6322, %v6319
    %v6521 = vpack.c.b16 %v6323, %v6320
    %v6522 = vpack.c.b16 %v6327, %v6324
    %v6523 = vpack.c.b16 %v6328, %v6325
    %v6524 = vpack.c.b16 %v6329, %v6326
    %v6525 = vpack.c.b16 %v6333, %v6330
    %v6526 = vpack.c.b16 %v6334, %v6331
    %v6527 = vpack.c.b16 %v6335, %v6332
    %6720 = vmatprep.subr.bf16.mxu0 %v6337
    %6721 = vmatpush1.bf16.msra.mxu0 %v6336
    %6722 = vmatprep.subr.bf16.mxu0 %v6340
    %6723 = vmatpush1.bf16.msra.mxu0 %v6339
    %6724 = vmatprep.subr.bf16.mxu0 %v6343
    %6725 = vmatpush1.bf16.msra.mxu0 %v6342
    %6726 = vmatprep.subr.bf16.mxu0 %v6346
    %6727 = vmatpush1.bf16.msra.mxu0 %v6345
    %6728 = vmatprep.subr.bf16.mxu0 %v6349
    %6729 = vmatpush1.bf16.msra.mxu0 %v6348
    %6730 = vmatprep.subr.bf16.mxu0 %v6352
    %6731 = vmatpush1.bf16.msra.mxu0 %v6351
    %6732 = vmatprep.subr.bf16.mxu0 %v6355
    %6733 = vmatpush1.bf16.msra.mxu0 %v6354
    %6734 = vmatprep.subr.bf16.mxu0 %v6358
    %6735 = vmatpush1.bf16.msra.mxu0 %v6357
    %6736 = vmatprep.subr.bf16.mxu0 %v6361
    %6737 = vmatpush1.bf16.msra.mxu0 %v6360
    %6738 = vmatprep.subr.bf16.mxu0 %v6364
    %6739 = vmatpush1.bf16.msra.mxu0 %v6363
    %6740 = vmatprep.subr.bf16.mxu0 %v6367
    %6741 = vmatpush1.bf16.msra.mxu0 %v6366
    %6742 = vmatprep.subr.bf16.mxu0 %v6370
    %6743 = vmatpush1.bf16.msra.mxu0 %v6369
    %6744 = vmatprep.subr.bf16.mxu0 %v6373
    %6745 = vmatpush1.bf16.msra.mxu0 %v6372
    %6746 = vmatprep.subr.bf16.mxu0 %v6376
    %6747 = vmatpush1.bf16.msra.mxu0 %v6375
    %6748 = vmatprep.subr.bf16.mxu0 %v6379
    %6749 = vmatpush1.bf16.msra.mxu0 %v6378
    %6750 = vmatprep.subr.bf16.mxu0 %v6382
    %6751 = vmatpush1.bf16.msra.mxu0 %v6381
    %6752 = vmatprep.mubr.bf16.mxu0 %v5416
    %6753 = vmatmul.mubr.bf16.gmra.mrb[0].mxu0 %v5415
    %v6754 = vpop.f32.mrb[0].mxu0
    %v6755 = vadd.f32 %v5684, %v6754
    %v6756 = vpop.f32.mrb[0].mxu0
    %v6757 = vadd.f32 %v5688, %v6756
    %v6758 = vpop.f32.mrb[0].mxu0
    %v6759 = vpop.f32.mrb[0].mxu0
    %6760 = vdwg.mxu0
    %6761 = vmatprep.subr.bf16.mxu0 %v6385
    %6762 = vmatpush1.bf16.msra.mxu0 %v6384
    %6763 = vmatprep.subr.bf16.mxu0 %v6388
    %6764 = vmatpush1.bf16.msra.mxu0 %v6387
    %6765 = vmatprep.subr.bf16.mxu0 %v6391
    %6766 = vmatpush1.bf16.msra.mxu0 %v6390
    %6767 = vmatprep.subr.bf16.mxu0 %v6394
    %6768 = vmatpush1.bf16.msra.mxu0 %v6393
    %6769 = vmatprep.subr.bf16.mxu0 %v6397
    %6770 = vmatpush1.bf16.msra.mxu0 %v6396
    %6771 = vmatprep.subr.bf16.mxu0 %v6400
    %6772 = vmatpush1.bf16.msra.mxu0 %v6399
    %6773 = vmatprep.subr.bf16.mxu0 %v6403
    %6774 = vmatpush1.bf16.msra.mxu0 %v6402
    %6775 = vmatprep.subr.bf16.mxu0 %v6406
    %6776 = vmatpush1.bf16.msra.mxu0 %v6405
    %6777 = vmatprep.subr.bf16.mxu0 %v6409
    %6778 = vmatpush1.bf16.msra.mxu0 %v6408
    %6779 = vmatprep.subr.bf16.mxu0 %v6412
    %6780 = vmatpush1.bf16.msra.mxu0 %v6411
    %6781 = vmatprep.subr.bf16.mxu0 %v6415
    %6782 = vmatpush1.bf16.msra.mxu0 %v6414
    %6783 = vmatprep.subr.bf16.mxu0 %v6418
    %6784 = vmatpush1.bf16.msra.mxu0 %v6417
    %6785 = vmatprep.subr.bf16.mxu0 %v6421
    %6786 = vmatpush1.bf16.msra.mxu0 %v6420
    %6787 = vmatprep.subr.bf16.mxu0 %v6424
    %6788 = vmatpush1.bf16.msra.mxu0 %v6423
    %6789 = vmatprep.subr.bf16.mxu0 %v6427
    %6790 = vmatpush1.bf16.msra.mxu0 %v6426
    %6791 = vmatprep.subr.bf16.mxu0 %v6430
    %6792 = vmatpush1.bf16.msra.mxu0 %v6429
    %6793 = vmatprep.mubr.bf16.mxu0 %v5418
    %6794 = vmatmul.mubr.bf16.gmra.mrb[0].mxu0 %v5417
    %v6795 = vpop.f32.mrb[0].mxu0
    %v6796 = vadd.f32 %v6755, %v6795
    %v6797 = vpop.f32.mrb[0].mxu0
    %v6798 = vadd.f32 %v6757, %v6797
    %v6799 = vpop.f32.mrb[0].mxu0
    %v6800 = vpop.f32.mrb[0].mxu0
    %6801 = vdwg.mxu0
    %6802 = vmatprep.subr.bf16.mxu0 %v6433
    %6803 = vmatpush1.bf16.msra.mxu0 %v6432
    %6804 = vmatprep.subr.bf16.mxu0 %v6436
    %6805 = vmatpush1.bf16.msra.mxu0 %v6435
    %6806 = vmatprep.subr.bf16.mxu0 %v6439
    %6807 = vmatpush1.bf16.msra.mxu0 %v6438
    %6808 = vmatprep.subr.bf16.mxu0 %v6442
    %6809 = vmatpush1.bf16.msra.mxu0 %v6441
    %6810 = vmatprep.subr.bf16.mxu0 %v6445
    %6811 = vmatpush1.bf16.msra.mxu0 %v6444
    %6812 = vmatprep.subr.bf16.mxu0 %v6448
    %6813 = vmatpush1.bf16.msra.mxu0 %v6447
    %6814 = vmatprep.subr.bf16.mxu0 %v6451
    %6815 = vmatpush1.bf16.msra.mxu0 %v6450
    %6816 = vmatprep.subr.bf16.mxu0 %v6454
    %6817 = vmatpush1.bf16.msra.mxu0 %v6453
    %6818 = vmatprep.subr.bf16.mxu0 %v6457
    %6819 = vmatpush1.bf16.msra.mxu0 %v6456
    %6820 = vmatprep.subr.bf16.mxu0 %v6460
    %6821 = vmatpush1.bf16.msra.mxu0 %v6459
    %6822 = vmatprep.subr.bf16.mxu0 %v6463
    %6823 = vmatpush1.bf16.msra.mxu0 %v6462
    %6824 = vmatprep.subr.bf16.mxu0 %v6466
    %6825 = vmatpush1.bf16.msra.mxu0 %v6465
    %6826 = vmatprep.subr.bf16.mxu0 %v6469
    %6827 = vmatpush1.bf16.msra.mxu0 %v6468
    %6828 = vmatprep.subr.bf16.mxu0 %v6472
    %6829 = vmatpush1.bf16.msra.mxu0 %v6471
    %6830 = vmatprep.subr.bf16.mxu0 %v6475
    %6831 = vmatpush1.bf16.msra.mxu0 %v6474
    %6832 = vmatprep.subr.bf16.mxu0 %v6478
    %6833 = vmatpush1.bf16.msra.mxu0 %v6477
    %6834 = vmatprep.mubr.bf16.mxu0 %v5420
    %6835 = vmatmul.mubr.bf16.gmra.mrb[0].mxu0 %v5419
    %v6836 = vpop.f32.mrb[0].mxu0
    %v6837 = vadd.f32 %v6796, %v6836
    %v6838 = vpop.f32.mrb[0].mxu0
    %v6839 = vadd.f32 %v6798, %v6838
    %v6840 = vpop.f32.mrb[0].mxu0
    %v6841 = vpop.f32.mrb[0].mxu0
    %6842 = vdwg.mxu0
    %6843 = vmatprep.subr.bf16.mxu0 %v6481
    %6844 = vmatpush1.bf16.msra.mxu0 %v6480
    %6845 = vmatprep.subr.bf16.mxu0 %v6484
    %6846 = vmatpush1.bf16.msra.mxu0 %v6483
    %6847 = vmatprep.subr.bf16.mxu0 %v6487
    %6848 = vmatpush1.bf16.msra.mxu0 %v6486
    %6849 = vmatprep.subr.bf16.mxu0 %v6490
    %6850 = vmatpush1.bf16.msra.mxu0 %v6489
    %6851 = vmatprep.subr.bf16.mxu0 %v6493
    %6852 = vmatpush1.bf16.msra.mxu0 %v6492
    %6853 = vmatprep.subr.bf16.mxu0 %v6496
    %6854 = vmatpush1.bf16.msra.mxu0 %v6495
    %6855 = vmatprep.subr.bf16.mxu0 %v6499
    %6856 = vmatpush1.bf16.msra.mxu0 %v6498
    %6857 = vmatprep.subr.bf16.mxu0 %v6502
    %6858 = vmatpush1.bf16.msra.mxu0 %v6501
    %6859 = vmatprep.subr.bf16.mxu0 %v6505
    %6860 = vmatpush1.bf16.msra.mxu0 %v6504
    %6861 = vmatprep.subr.bf16.mxu0 %v6508
    %6862 = vmatpush1.bf16.msra.mxu0 %v6507
    %6863 = vmatprep.subr.bf16.mxu0 %v6511
    %6864 = vmatpush1.bf16.msra.mxu0 %v6510
    %6865 = vmatprep.subr.bf16.mxu0 %v6514
    %6866 = vmatpush1.bf16.msra.mxu0 %v6513
    %6867 = vmatprep.subr.bf16.mxu0 %v6517
    %6868 = vmatpush1.bf16.msra.mxu0 %v6516
    %6869 = vmatprep.subr.bf16.mxu0 %v6520
    %6870 = vmatpush1.bf16.msra.mxu0 %v6519
    %6871 = vmatprep.subr.bf16.mxu0 %v6523
    %6872 = vmatpush1.bf16.msra.mxu0 %v6522
    %6873 = vmatprep.subr.bf16.mxu0 %v6526
    %6874 = vmatpush1.bf16.msra.mxu0 %v6525
    %6875 = vmatprep.mubr.bf16.mxu0 %v5422
    %6876 = vmatmul.mubr.bf16.gmra.mrb[0].mxu0 %v5421
    %v6877 = vpop.f32.mrb[0].mxu0
    %v6878 = vadd.f32 %v6837, %v6877
    %v6879 = vpop.f32.mrb[0].mxu0
    %v6880 = vadd.f32 %v6839, %v6879
    %v6881 = vpop.f32.mrb[0].mxu0
    %v6882 = vpop.f32.mrb[0].mxu0
    %6883 = vdwg.mxu0
    %6884 = vmatprep.subr.bf16.mxu0 0
    %6885 = vmatpush1.bf16.msra.mxu0 %v6338
    %6886 = vmatprep.subr.bf16.mxu0 0
    %6887 = vmatpush1.bf16.msra.mxu0 %v6341
    %6888 = vmatprep.subr.bf16.mxu0 0
    %6889 = vmatpush1.bf16.msra.mxu0 %v6344
    %6890 = vmatprep.subr.bf16.mxu0 0
    %6891 = vmatpush1.bf16.msra.mxu0 %v6347
    %6892 = vmatprep.subr.bf16.mxu0 0
    %6893 = vmatpush1.bf16.msra.mxu0 %v6350
    %6894 = vmatprep.subr.bf16.mxu0 0
    %6895 = vmatpush1.bf16.msra.mxu0 %v6353
    %6896 = vmatprep.subr.bf16.mxu0 0
    %6897 = vmatpush1.bf16.msra.mxu0 %v6356
    %6898 = vmatprep.subr.bf16.mxu0 0
    %6899 = vmatpush1.bf16.msra.mxu0 %v6359
    %6900 = vmatprep.subr.bf16.mxu0 0
    %6901 = vmatpush1.bf16.msra.mxu0 %v6362
    %6902 = vmatprep.subr.bf16.mxu0 0
    %6903 = vmatpush1.bf16.msra.mxu0 %v6365
    %6904 = vmatprep.subr.bf16.mxu0 0
    %6905 = vmatpush1.bf16.msra.mxu0 %v6368
    %6906 = vmatprep.subr.bf16.mxu0 0
    %6907 = vmatpush1.bf16.msra.mxu0 %v6371
    %6908 = vmatprep.subr.bf16.mxu0 0
    %6909 = vmatpush1.bf16.msra.mxu0 %v6374
    %6910 = vmatprep.subr.bf16.mxu0 0
    %6911 = vmatpush1.bf16.msra.mxu0 %v6377
    %6912 = vmatprep.subr.bf16.mxu0 0
    %6913 = vmatpush1.bf16.msra.mxu0 %v6380
    %6914 = vmatprep.subr.bf16.mxu0 0
    %6915 = vmatpush1.bf16.msra.mxu0 %v6383
    %6916 = vmatprep.mubr.bf16.mxu0 %v5416
    %6917 = vmatmul.mubr.bf16.gmra.mrb[0].mxu0 %v5415
    %v6918 = vpop.f32.mrb[0].mxu0
    %v6919 = vadd.f32 %v5692, %v6918
    %v6920 = vpop.f32.mrb[0].mxu0
    %v6921 = vpop.f32.mrb[0].mxu0
    %v6922 = vpop.f32.mrb[0].mxu0
    %6923 = vdwg.mxu0
    %6924 = vmatprep.subr.bf16.mxu0 0
    %6925 = vmatpush1.bf16.msra.mxu0 %v6386
    %6926 = vmatprep.subr.bf16.mxu0 0
    %6927 = vmatpush1.bf16.msra.mxu0 %v6389
    %6928 = vmatprep.subr.bf16.mxu0 0
    %6929 = vmatpush1.bf16.msra.mxu0 %v6392
    %6930 = vmatprep.subr.bf16.mxu0 0
    %6931 = vmatpush1.bf16.msra.mxu0 %v6395
    %6932 = vmatprep.subr.bf16.mxu0 0
    %6933 = vmatpush1.bf16.msra.mxu0 %v6398
    %6934 = vmatprep.subr.bf16.mxu0 0
    %6935 = vmatpush1.bf16.msra.mxu0 %v6401
    %6936 = vmatprep.subr.bf16.mxu0 0
    %6937 = vmatpush1.bf16.msra.mxu0 %v6404
    %6938 = vmatprep.subr.bf16.mxu0 0
    %6939 = vmatpush1.bf16.msra.mxu0 %v6407
    %6940 = vmatprep.subr.bf16.mxu0 0
    %6941 = vmatpush1.bf16.msra.mxu0 %v6410
    %6942 = vmatprep.subr.bf16.mxu0 0
    %6943 = vmatpush1.bf16.msra.mxu0 %v6413
    %6944 = vmatprep.subr.bf16.mxu0 0
    %6945 = vmatpush1.bf16.msra.mxu0 %v6416
    %6946 = vmatprep.subr.bf16.mxu0 0
    %6947 = vmatpush1.bf16.msra.mxu0 %v6419
    %6948 = vmatprep.subr.bf16.mxu0 0
    %6949 = vmatpush1.bf16.msra.mxu0 %v6422
    %6950 = vmatprep.subr.bf16.mxu0 0
    %6951 = vmatpush1.bf16.msra.mxu0 %v6425
    %6952 = vmatprep.subr.bf16.mxu0 0
    %6953 = vmatpush1.bf16.msra.mxu0 %v6428
    %6954 = vmatprep.subr.bf16.mxu0 0
    %6955 = vmatpush1.bf16.msra.mxu0 %v6431
    %6956 = vmatprep.mubr.bf16.mxu0 %v5418
    %6957 = vmatmul.mubr.bf16.gmra.mrb[0].mxu0 %v5417
    %v6958 = vpop.f32.mrb[0].mxu0
    %v6959 = vadd.f32 %v6919, %v6958
    %v6960 = vpop.f32.mrb[0].mxu0
    %v6961 = vpop.f32.mrb[0].mxu0
    %v6962 = vpop.f32.mrb[0].mxu0
    %6963 = vdwg.mxu0
    %6964 = vmatprep.subr.bf16.mxu0 0
    %6965 = vmatpush1.bf16.msra.mxu0 %v6434
    %6966 = vmatprep.subr.bf16.mxu0 0
    %6967 = vmatpush1.bf16.msra.mxu0 %v6437
    %6968 = vmatprep.subr.bf16.mxu0 0
    %6969 = vmatpush1.bf16.msra.mxu0 %v6440
    %6970 = vmatprep.subr.bf16.mxu0 0
    %6971 = vmatpush1.bf16.msra.mxu0 %v6443
    %6972 = vmatprep.subr.bf16.mxu0 0
    %6973 = vmatpush1.bf16.msra.mxu0 %v6446
    %6974 = vmatprep.subr.bf16.mxu0 0
    %6975 = vmatpush1.bf16.msra.mxu0 %v6449
    %6976 = vmatprep.subr.bf16.mxu0 0
    %6977 = vmatpush1.bf16.msra.mxu0 %v6452
    %6978 = vmatprep.subr.bf16.mxu0 0
    %6979 = vmatpush1.bf16.msra.mxu0 %v6455
    %6980 = vmatprep.subr.bf16.mxu0 0
    %6981 = vmatpush1.bf16.msra.mxu0 %v6458
    %6982 = vmatprep.subr.bf16.mxu0 0
    %6983 = vmatpush1.bf16.msra.mxu0 %v6461
    %6984 = vmatprep.subr.bf16.mxu0 0
    %6985 = vmatpush1.bf16.msra.mxu0 %v6464
    %6986 = vmatprep.subr.bf16.mxu0 0
    %6987 = vmatpush1.bf16.msra.mxu0 %v6467
    %6988 = vmatprep.subr.bf16.mxu0 0
    %6989 = vmatpush1.bf16.msra.mxu0 %v6470
    %6990 = vmatprep.subr.bf16.mxu0 0
    %6991 = vmatpush1.bf16.msra.mxu0 %v6473
    %6992 = vmatprep.subr.bf16.mxu0 0
    %6993 = vmatpush1.bf16.msra.mxu0 %v6476
    %6994 = vmatprep.subr.bf16.mxu0 0
    %6995 = vmatpush1.bf16.msra.mxu0 %v6479
    %6996 = vmatprep.mubr.bf16.mxu0 %v5420
    %6997 = vmatmul.mubr.bf16.gmra.mrb[0].mxu0 %v5419
    %v6998 = vpop.f32.mrb[0].mxu0
    %v6999 = vadd.f32 %v6959, %v6998
    %v7000 = vpop.f32.mrb[0].mxu0
    %v7001 = vpop.f32.mrb[0].mxu0
    %v7002 = vpop.f32.mrb[0].mxu0
    %7003 = vdwg.mxu0
    %7004 = vmatprep.subr.bf16.mxu0 0
    %7005 = vmatpush1.bf16.msra.mxu0 %v6482
    %7006 = vmatprep.subr.bf16.mxu0 0
    %7007 = vmatpush1.bf16.msra.mxu0 %v6485
    %7008 = vmatprep.subr.bf16.mxu0 0
    %7009 = vmatpush1.bf16.msra.mxu0 %v6488
    %7010 = vmatprep.subr.bf16.mxu0 0
    %7011 = vmatpush1.bf16.msra.mxu0 %v6491
    %7012 = vmatprep.subr.bf16.mxu0 0
    %7013 = vmatpush1.bf16.msra.mxu0 %v6494
    %7014 = vmatprep.subr.bf16.mxu0 0
    %7015 = vmatpush1.bf16.msra.mxu0 %v6497
    %7016 = vmatprep.subr.bf16.mxu0 0
    %7017 = vmatpush1.bf16.msra.mxu0 %v6500
    %7018 = vmatprep.subr.bf16.mxu0 0
    %7019 = vmatpush1.bf16.msra.mxu0 %v6503
    %7020 = vmatprep.subr.bf16.mxu0 0
    %7021 = vmatpush1.bf16.msra.mxu0 %v6506
    %7022 = vmatprep.subr.bf16.mxu0 0
    %7023 = vmatpush1.bf16.msra.mxu0 %v6509
    %7024 = vmatprep.subr.bf16.mxu0 0
    %7025 = vmatpush1.bf16.msra.mxu0 %v6512
    %7026 = vmatprep.subr.bf16.mxu0 0
    %7027 = vmatpush1.bf16.msra.mxu0 %v6515
    %7028 = vmatprep.subr.bf16.mxu0 0
    %7029 = vmatpush1.bf16.msra.mxu0 %v6518
    %7030 = vmatprep.subr.bf16.mxu0 0
    %7031 = vmatpush1.bf16.msra.mxu0 %v6521
    %7032 = vmatprep.subr.bf16.mxu0 0
    %7033 = vmatpush1.bf16.msra.mxu0 %v6524
    %7034 = vmatprep.subr.bf16.mxu0 0
    %7035 = vmatpush1.bf16.msra.mxu0 %v6527
    %7036 = vmatprep.mubr.bf16.mxu0 %v5422
    %7037 = vmatmul.mubr.bf16.gmra.mrb[0].mxu0 %v5421
    %v7038 = vpop.f32.mrb[0].mxu0
    %v7039 = vadd.f32 %v6999, %v7038
    %v7040 = vpop.f32.mrb[0].mxu0
    %v7041 = vpop.f32.mrb[0].mxu0
    %v7042 = vpop.f32.mrb[0].mxu0
    %7043 = vdwg.mxu0
    %7044 = vst [vmem:[%s9] sm:$0xff] %v6878
    %7045 = vst [vmem:[%s9 + $0x8] sm:$0xff] %v6880
    %7046 = vst [vmem:[%s9 + $0x10] sm:$0xff] %v7039
    // Predicated region
    $region66: #{basic_relu_forward.1} parent=1 // pred_check
      _
    $region67: #{basic_relu_forward.1} parent=1 // pred_check_branch
      %7048 = sbr.rel (0) target = $region69
    $region68: #{basic_relu_forward.1} parent=1 // pred_region
      _
    $region69: #{basic_relu_forward.1} parent=1 // pred_fallthru
      _
    // Predicated region
    $region70: #{basic_relu_forward.1} parent=1 // pred_check
      _
    $region71: #{basic_relu_forward.1} parent=1 // pred_check_branch
      %7050 = sbr.rel (0) target = $region73
    $region72: #{basic_relu_forward.1} parent=1 // pred_region
      _
    $region73: #{basic_relu_forward.1} parent=1 // pred_fallthru
      _
    %7051 = vsyncpa [#allocation3], 1
    %7052 = vsyncpa [#allocation5], 1
    %7053 = vsyncpa [#allocation8], 1
    %7054 = vsyncpa [#allocation11], 1

</llo_original>
